<compile_context>
chip_gen: v6e
topology: v6e:2x2x1
jax: 0.10.0
libtpu: 0.0.40
codegen_flags: <defaults>
</compile_context>

<pallas_src>
import functools

import jax
import jax.numpy as jnp
from jax.experimental import pallas as pl
from jax.experimental.pallas import tpu as pltpu

EPS = 1e-08
LANES = 128


# ------------------------------ helpers -------------------------------------
def _round_up(x, m):
    return (x + m - 1) // m * m


def _same_padding(size, kernel, dilation, stride):
    return ((size - 1) * (stride - 1) + dilation * (kernel - 1)) // 2


def _vmem_capacity_bytes():
    try:
        return int(pltpu.get_tpu_info().vmem_capacity_bytes)
    except Exception:
        return 64 * 1024 * 1024  # conservative (v7x per-core)


def _pick_block_h(h, w, vmem_cap):
    # ~2k output rows per tile on 64 MiB parts (v7x), ~8k on 128 MiB parts
    # (v5e/v6e): fewer grid steps amortize the ~0.35us/step overhead.
    target = 2048 if vmem_cap <= (64 << 20) else 8192
    cap = min(h, max(1, target // max(w, 1)))
    for th in range(cap, 0, -1):
        if h % th == 0 and ((th * w) % 8 == 0 or th == h):
            return th
    return h


def _vmem_limit_bytes(cap, hp, wp, cin_pad, cout_pad, k, block_rows):
    # Explicit budget per the review: double-buffered x image, weight buffers
    # (bf16, per-batch), double-buffered out tile, f32 acc scratch, live
    # bf16 patch temporaries + slack.
    x_block = hp * wp * cin_pad * 2              # bf16 padded image block
    w_block = k * k * cin_pad * cout_pad * 2     # bf16 modulated weights
    out_block = block_rows * cout_pad * 2        # bf16 out tile
    acc = block_rows * cout_pad * 4              # f32 accumulator scratch
    tmp = 2 * block_rows * cin_pad * 2 + (2 << 20)
    need = 2 * x_block + 2 * w_block + 2 * out_block + acc + tmp
    return int(min(cap, max(need * 5 // 4 + (4 << 20), 32 << 20)))


# ----------------------------- Pallas kernel --------------------------------
def _conv2dmod_kernel(wm_ref, x_ref, out_ref, acc_ref, *, k, block_h, out_w):
    # wm_ref:  (1, K*K, Cin_pad, Cout_pad) bf16  per-batch modulated weights
    # x_ref:   (1, Hp, Wp, Cin_pad)        bf16  padded NHWC image (whole image)
    # out_ref: (1, block_h*W, Cout_pad)    bf16  output row-tile
    # acc_ref: (block_h*W, Cout_pad)       f32   VMEM accumulator scratch
    t = pl.program_id(1)
    cin = x_ref.shape[3]
    row0 = t * block_h

    # im2col-free conv: K*K bf16 MXU matmuls, accumulated in an f32 VMEM
    # scratch (bounded live temporaries), one final bf16 store.
    for kk in range(k * k):
        kh, kw = divmod(kk, k)
        patch = x_ref[0, pl.ds(row0 + kh, block_h), pl.ds(kw, out_w), :]
        patch = patch.reshape(block_h * out_w, cin)          # (TH*W, Cin_pad) bf16
        contrib = jnp.dot(patch, wm_ref[0, kk],
                          preferred_element_type=jnp.float32)
        if kk == 0:
            acc_ref[...] = contrib
        else:
            acc_ref[...] = acc_ref[...] + contrib
    out_ref[0] = acc_ref[...].astype(out_ref.dtype)


# ------------------------------ JAX wrapper ----------------------------------
def conv2d_mod(x, y, weight, *, demod=True, stride=1, dilation=1,
               block_h=None, channels_last=False):
    """Pallas implementation of Conv2DMod.forward.

    Mirrors the PyTorch module: stride/dilation only enter the padding
    formula; the conv itself is stride-1, non-dilated.  Requires exact 'same'
    padding (the only configuration in which the module's final reshape to
    (h, w) is well-defined).

    channels_last=True returns (B, H, W, Cout) bf16 and skips the NCHW
    repack (per review: consumers that can take NHWC save a full output pass).
    """
    b, c, h, w = x.shape
    out_chan, in_chan, k, k2 = weight.shape
    assert k == k2 and c == in_chan and y.shape == (b, c)

    pad = _same_padding(h, k, dilation, stride)
    assert 2 * pad == k - 1, (
        "conv2d_mod only supports configurations where the module's padding "
        "is exact same-padding for a stride-1 conv (odd kernel, default "
        "stride/dilation)")

    cin_pad = _round_up(in_chan, LANES)
    cout_pad = _round_up(out_chan, LANES)
    hp, wp = h + 2 * pad, w + 2 * pad

    vmem_cap = _vmem_capacity_bytes()
    if block_h is None:
        block_h = _pick_block_h(h, w, vmem_cap)
    assert h % block_h == 0
    assert (block_h * w) % 8 == 0 or block_h == h
    n_t = h // block_h

    # --- per-batch modulated + demodulated weights (f32 math, bf16 storage) --
    # Tiny (K*K*Cin*Cout per batch element) elementwise op, hoisted here per
    # review so the kernel has no cross-tile carry and both grid axes can be
    # megacore-parallel.  Lane padding happens AFTER demod -> padded columns
    # are exact zeros (no EPS/NaN hazard).
    wmod = weight.astype(jnp.float32)[None] * \
        (y.astype(jnp.float32) + 1.0)[:, None, :, None, None]      # (B,Co,Ci,K,K)
    if demod:
        d = jax.lax.rsqrt(jnp.sum(wmod * wmod, axis=(2, 3, 4), keepdims=True) + EPS)
        wmod = wmod * d
    wmod = jnp.transpose(wmod, (0, 3, 4, 2, 1)).reshape(b, k * k, in_chan, out_chan)
    wmod = jnp.pad(wmod, ((0, 0), (0, 0),
                          (0, cin_pad - in_chan),
                          (0, cout_pad - out_chan))).astype(jnp.bfloat16)
    # NOTE: the weight block index changes only with the batch axis, so the
    # default double buffer only pays off for B > 1 (prefetch across batch
    # boundaries); for B == 1 it could be pl.Buffered(1) to drop one copy.

    # --- activations: NHWC bf16, spatial + channel pad fused in one op ------
    xp = jnp.pad(jnp.transpose(x, (0, 2, 3, 1)).astype(jnp.bfloat16),
                 ((0, 0), (pad, pad), (pad, pad), (0, cin_pad - in_chan)))

    vmem_limit = _vmem_limit_bytes(vmem_cap, hp, wp, cin_pad, cout_pad,
                                   k, block_h * w)

    flops = 2 * b * h * w * k * k * in_chan * out_chan
    bytes_accessed = xp.size * 2 + wmod.size * 2 + b * h * w * cout_pad * 2
    cost = pl.CostEstimate(flops=flops, transcendentals=0,
                           bytes_accessed=bytes_accessed)

    kernel = functools.partial(_conv2dmod_kernel, k=k, block_h=block_h, out_w=w)

    out = pl.pallas_call(
        kernel,
        out_shape=jax.ShapeDtypeStruct((b, h * w, cout_pad), jnp.bfloat16),
        grid_spec=pltpu.PrefetchScalarGridSpec(
            num_scalar_prefetch=0,
            grid=(b, n_t),
            in_specs=[
                pl.BlockSpec((1, k * k, cin_pad, cout_pad),
                             lambda i, t: (i, 0, 0, 0)),
                pl.BlockSpec((1, hp, wp, cin_pad),
                             lambda i, t: (i, 0, 0, 0)),
            ],
            out_specs=pl.BlockSpec((1, block_h * w, cout_pad),
                                   lambda i, t: (i, t, 0)),
            scratch_shapes=[pltpu.VMEM((block_h * w, cout_pad), jnp.float32)],
        ),
        compiler_params=pltpu.CompilerParams(
            dimension_semantics=("parallel", "parallel"),
            vmem_limit_bytes=vmem_limit,
        ),
        cost_estimate=cost,
    )(wmod, xp)

    if channels_last:
        return out.reshape(b, h, w, cout_pad)[..., :out_chan]

    # Drop lane padding, back to the module's NCHW f32 contract.
    out = out[:, :, :out_chan].astype(jnp.float32)
    return jnp.transpose(out, (0, 2, 1)).reshape(b, out_chan, h, w)


# ---------------------------- pure-JAX reference -----------------------------
def conv2d_mod_ref(x, y, weight, *, demod=True, stride=1, dilation=1):
    b, c, h, w = x.shape
    out_chan, in_chan, k, _ = weight.shape
    w1 = y[:, None, :, None, None]
    w2 = weight[None, :, :, :, :]
    weights = w2 * (w1 + 1.0)
    if demod:
        d = jax.lax.rsqrt(jnp.sum(weights ** 2, axis=(2, 3, 4), keepdims=True) + EPS)
        weights = weights * d
    x_ = x.reshape(1, -1, h, w)
    weights_ = weights.reshape(b * out_chan, in_chan, k, k)
    pad = _same_padding(h, k, dilation, stride)
    out = jax.lax.conv_general_dilated(
        x_, weights_, window_strides=(1, 1), padding=[(pad, pad), (pad, pad)],
        feature_group_count=b,
        dimension_numbers=("NCHW", "OIHW", "NCHW"))
    return out.reshape(-1, out_chan, h, w)


# --------------------------------- main ---------------------------------------
if __name__ == "__main__":
    key = jax.random.PRNGKey(0)
    k_w, k_x, k_y, k_w2, k_x2, k_y2 = jax.random.split(key, 6)

    # --- Config 1: B=2, demod=True, explicit block_h -> multi-tile grid -----
    B, Cin, Cout, K, H, W = 2, 4, 8, 3, 16, 16
    # kaiming_normal_(fan_in, leaky_relu a=0): std = sqrt(2 / fan_in)
    std = (2.0 / (Cin * K * K)) ** 0.5
    weight = jax.random.normal(k_w, (Cout, Cin, K, K), dtype=jnp.float32) * std
    x = jax.random.normal(k_x, (B, Cin, H, W), dtype=jnp.float32)
    y = jax.random.normal(k_y, (B, Cin), dtype=jnp.float32)

    out = jax.block_until_ready(conv2d_mod(x, y, weight, demod=True, block_h=8))
    ref = jax.block_until_ready(conv2d_mod_ref(x, y, weight, demod=True))
    assert out.shape == (B, Cout, H, W)
    err = jnp.max(jnp.abs(out - ref))
    # bf16 MXU inputs + bf16 output with f32 accumulation/demod.
    assert jnp.allclose(out, ref, atol=5e-2, rtol=5e-2), f"config1 max abs err {err}"

    # --- Config 2: B=1, demod=False, channels-last bf16 output path ---------
    B2, Cin2, Cout2, K2, H2, W2 = 1, 8, 16, 3, 8, 8
    std2 = (2.0 / (Cin2 * K2 * K2)) ** 0.5
    weight2 = jax.random.normal(k_w2, (Cout2, Cin2, K2, K2), dtype=jnp.float32) * std2
    x2 = jax.random.normal(k_x2, (B2, Cin2, H2, W2), dtype=jnp.float32)
    y2 = jax.random.normal(k_y2, (B2, Cin2), dtype=jnp.float32)

    out2 = jax.block_until_ready(
        conv2d_mod(x2, y2, weight2, demod=False, channels_last=True))
    ref2 = jax.block_until_ready(conv2d_mod_ref(x2, y2, weight2, demod=False))
    assert out2.shape == (B2, H2, W2, Cout2)
    out2_nchw = jnp.transpose(out2.astype(jnp.float32), (0, 3, 1, 2))
    err2 = jnp.max(jnp.abs(out2_nchw - ref2))
    assert jnp.allclose(out2_nchw, ref2, atol=5e-2, rtol=5e-2), f"config2 max abs err {err2}"

    print("KERNEL_OK")
</pallas_src>

<mosaic_0001>
module attributes {stable_mosaic.version = 11 : i64} {
  func.func @_conv2dmod_kernel(%arg0: i32, %arg1: i32, %arg2: memref<1x9x128x128xbf16, #tpu.memory_space<vmem>>, %arg3: memref<1x18x18x128xbf16, #tpu.memory_space<vmem>>, %arg4: memref<1x128x128xbf16, #tpu.memory_space<vmem>>, %arg5: memref<128x128xf32, #tpu.memory_space<vmem>>) attributes {dimension_semantics = [#tpu.dimension_semantics<parallel>, #tpu.dimension_semantics<parallel>], iteration_bounds = array<i64: 2, 2>, scalar_prefetch = 0 : i64, scratch_operands = 1 : i64, tpu.core_type = #tpu.core_type<tc>, window_params = [{transform_indices = @transform_0, window_bounds = array<i64: 1, 9, 128, 128>}, {transform_indices = @transform_1, window_bounds = array<i64: 1, 18, 18, 128>}, {transform_indices = @transform_2, window_bounds = array<i64: 1, 128, 128>}]} {
    %c8_i32 = arith.constant 8 : i32
    %0 = arith.muli %arg1, %c8_i32 : i32
    %c0_i32 = arith.constant 0 : i32
    %1 = arith.addi %0, %c0_i32 : i32
    %c0 = arith.constant 0 : index
    %2 = arith.index_cast %1 : i32 to index
    %c0_0 = arith.constant 0 : index
    %c0_1 = arith.constant 0 : index
    %3 = vector.load %arg3[%c0, %2, %c0_0, %c0_1] : memref<1x18x18x128xbf16, #tpu.memory_space<vmem>>, vector<1x8x16x128xbf16>
    %4 = vector.shape_cast %3 : vector<1x8x16x128xbf16> to vector<8x16x128xbf16>
    %5 = vector.shape_cast %4 : vector<8x16x128xbf16> to vector<128x128xbf16>
    %c0_2 = arith.constant 0 : index
    %c0_3 = arith.constant 0 : index
    %c0_4 = arith.constant 0 : index
    %c0_5 = arith.constant 0 : index
    %6 = vector.load %arg2[%c0_2, %c0_3, %c0_4, %c0_5] : memref<1x9x128x128xbf16, #tpu.memory_space<vmem>>, vector<1x1x128x128xbf16>
    %7 = vector.shape_cast %6 : vector<1x1x128x128xbf16> to vector<128x128xbf16>
    %cst = arith.constant dense<0.000000e+00> : vector<128x128xf32>
    %8 = tpu.matmul %5, %7, %cst {dimension_numbers = #tpu.dot_dimension_numbers<[1], [0], [0], [1], [0, 0, 1, 1], [], []>} : vector<128x128xbf16>, vector<128x128xbf16>, vector<128x128xf32> -> vector<128x128xf32>
    %c0_6 = arith.constant 0 : index
    %c0_7 = arith.constant 0 : index
    %9 = vector.load %arg5[%c0_6, %c0_7] : memref<128x128xf32, #tpu.memory_space<vmem>>, vector<128x128xf32>
    tpu.vector_store %arg5[%c0_6, %c0_7], %8 {strides = array<i32>} : memref<128x128xf32, #tpu.memory_space<vmem>>, vector<128x128xf32>,
    %c0_i32_8 = arith.constant 0 : i32
    %10 = arith.addi %0, %c0_i32_8 : i32
    %c0_9 = arith.constant 0 : index
    %11 = arith.index_cast %10 : i32 to index
    %c1 = arith.constant 1 : index
    %c0_10 = arith.constant 0 : index
    %12 = vector.load %arg3[%c0_9, %11, %c1, %c0_10] : memref<1x18x18x128xbf16, #tpu.memory_space<vmem>>, vector<1x8x16x128xbf16>
    %13 = vector.shape_cast %12 : vector<1x8x16x128xbf16> to vector<8x16x128xbf16>
    %14 = vector.shape_cast %13 : vector<8x16x128xbf16> to vector<128x128xbf16>
    %c0_11 = arith.constant 0 : index
    %c1_12 = arith.constant 1 : index
    %c0_13 = arith.constant 0 : index
    %c0_14 = arith.constant 0 : index
    %15 = vector.load %arg2[%c0_11, %c1_12, %c0_13, %c0_14] : memref<1x9x128x128xbf16, #tpu.memory_space<vmem>>, vector<1x1x128x128xbf16>
    %16 = vector.shape_cast %15 : vector<1x1x128x128xbf16> to vector<128x128xbf16>
    %cst_15 = arith.constant dense<0.000000e+00> : vector<128x128xf32>
    %17 = tpu.matmul %14, %16, %cst_15 {dimension_numbers = #tpu.dot_dimension_numbers<[1], [0], [0], [1], [0, 0, 1, 1], [], []>} : vector<128x128xbf16>, vector<128x128xbf16>, vector<128x128xf32> -> vector<128x128xf32>
    %c0_16 = arith.constant 0 : index
    %c0_17 = arith.constant 0 : index
    %18 = vector.load %arg5[%c0_16, %c0_17] : memref<128x128xf32, #tpu.memory_space<vmem>>, vector<128x128xf32>
    %19 = arith.addf %18, %17 : vector<128x128xf32>
    %c0_18 = arith.constant 0 : index
    %c0_19 = arith.constant 0 : index
    %20 = vector.load %arg5[%c0_18, %c0_19] : memref<128x128xf32, #tpu.memory_space<vmem>>, vector<128x128xf32>
    tpu.vector_store %arg5[%c0_18, %c0_19], %19 {strides = array<i32>} : memref<128x128xf32, #tpu.memory_space<vmem>>, vector<128x128xf32>,
    %c0_i32_20 = arith.constant 0 : i32
    %21 = arith.addi %0, %c0_i32_20 : i32
    %c0_21 = arith.constant 0 : index
    %22 = arith.index_cast %21 : i32 to index
    %c2 = arith.constant 2 : index
    %c0_22 = arith.constant 0 : index
    %23 = vector.load %arg3[%c0_21, %22, %c2, %c0_22] : memref<1x18x18x128xbf16, #tpu.memory_space<vmem>>, vector<1x8x16x128xbf16>
    %24 = vector.shape_cast %23 : vector<1x8x16x128xbf16> to vector<8x16x128xbf16>
    %25 = vector.shape_cast %24 : vector<8x16x128xbf16> to vector<128x128xbf16>
    %c0_23 = arith.constant 0 : index
    %c2_24 = arith.constant 2 : index
    %c0_25 = arith.constant 0 : index
    %c0_26 = arith.constant 0 : index
    %26 = vector.load %arg2[%c0_23, %c2_24, %c0_25, %c0_26] : memref<1x9x128x128xbf16, #tpu.memory_space<vmem>>, vector<1x1x128x128xbf16>
    %27 = vector.shape_cast %26 : vector<1x1x128x128xbf16> to vector<128x128xbf16>
    %cst_27 = arith.constant dense<0.000000e+00> : vector<128x128xf32>
    %28 = tpu.matmul %25, %27, %cst_27 {dimension_numbers = #tpu.dot_dimension_numbers<[1], [0], [0], [1], [0, 0, 1, 1], [], []>} : vector<128x128xbf16>, vector<128x128xbf16>, vector<128x128xf32> -> vector<128x128xf32>
    %c0_28 = arith.constant 0 : index
    %c0_29 = arith.constant 0 : index
    %29 = vector.load %arg5[%c0_28, %c0_29] : memref<128x128xf32, #tpu.memory_space<vmem>>, vector<128x128xf32>
    %30 = arith.addf %29, %28 : vector<128x128xf32>
    %c0_30 = arith.constant 0 : index
    %c0_31 = arith.constant 0 : index
    %31 = vector.load %arg5[%c0_30, %c0_31] : memref<128x128xf32, #tpu.memory_space<vmem>>, vector<128x128xf32>
    tpu.vector_store %arg5[%c0_30, %c0_31], %30 {strides = array<i32>} : memref<128x128xf32, #tpu.memory_space<vmem>>, vector<128x128xf32>,
    %c1_i32 = arith.constant 1 : i32
    %32 = arith.addi %0, %c1_i32 : i32
    %c0_32 = arith.constant 0 : index
    %33 = arith.index_cast %32 : i32 to index
    %c0_33 = arith.constant 0 : index
    %c0_34 = arith.constant 0 : index
    %34 = vector.load %arg3[%c0_32, %33, %c0_33, %c0_34] : memref<1x18x18x128xbf16, #tpu.memory_space<vmem>>, vector<1x8x16x128xbf16>
    %35 = vector.shape_cast %34 : vector<1x8x16x128xbf16> to vector<8x16x128xbf16>
    %36 = vector.shape_cast %35 : vector<8x16x128xbf16> to vector<128x128xbf16>
    %c0_35 = arith.constant 0 : index
    %c3 = arith.constant 3 : index
    %c0_36 = arith.constant 0 : index
    %c0_37 = arith.constant 0 : index
    %37 = vector.load %arg2[%c0_35, %c3, %c0_36, %c0_37] : memref<1x9x128x128xbf16, #tpu.memory_space<vmem>>, vector<1x1x128x128xbf16>
    %38 = vector.shape_cast %37 : vector<1x1x128x128xbf16> to vector<128x128xbf16>
    %cst_38 = arith.constant dense<0.000000e+00> : vector<128x128xf32>
    %39 = tpu.matmul %36, %38, %cst_38 {dimension_numbers = #tpu.dot_dimension_numbers<[1], [0], [0], [1], [0, 0, 1, 1], [], []>} : vector<128x128xbf16>, vector<128x128xbf16>, vector<128x128xf32> -> vector<128x128xf32>
    %c0_39 = arith.constant 0 : index
    %c0_40 = arith.constant 0 : index
    %40 = vector.load %arg5[%c0_39, %c0_40] : memref<128x128xf32, #tpu.memory_space<vmem>>, vector<128x128xf32>
    %41 = arith.addf %40, %39 : vector<128x128xf32>
    %c0_41 = arith.constant 0 : index
    %c0_42 = arith.constant 0 : index
    %42 = vector.load %arg5[%c0_41, %c0_42] : memref<128x128xf32, #tpu.memory_space<vmem>>, vector<128x128xf32>
    tpu.vector_store %arg5[%c0_41, %c0_42], %41 {strides = array<i32>} : memref<128x128xf32, #tpu.memory_space<vmem>>, vector<128x128xf32>,
    %c1_i32_43 = arith.constant 1 : i32
    %43 = arith.addi %0, %c1_i32_43 : i32
    %c0_44 = arith.constant 0 : index
    %44 = arith.index_cast %43 : i32 to index
    %c1_45 = arith.constant 1 : index
    %c0_46 = arith.constant 0 : index
    %45 = vector.load %arg3[%c0_44, %44, %c1_45, %c0_46] : memref<1x18x18x128xbf16, #tpu.memory_space<vmem>>, vector<1x8x16x128xbf16>
    %46 = vector.shape_cast %45 : vector<1x8x16x128xbf16> to vector<8x16x128xbf16>
    %47 = vector.shape_cast %46 : vector<8x16x128xbf16> to vector<128x128xbf16>
    %c0_47 = arith.constant 0 : index
    %c4 = arith.constant 4 : index
    %c0_48 = arith.constant 0 : index
    %c0_49 = arith.constant 0 : index
    %48 = vector.load %arg2[%c0_47, %c4, %c0_48, %c0_49] : memref<1x9x128x128xbf16, #tpu.memory_space<vmem>>, vector<1x1x128x128xbf16>
    %49 = vector.shape_cast %48 : vector<1x1x128x128xbf16> to vector<128x128xbf16>
    %cst_50 = arith.constant dense<0.000000e+00> : vector<128x128xf32>
    %50 = tpu.matmul %47, %49, %cst_50 {dimension_numbers = #tpu.dot_dimension_numbers<[1], [0], [0], [1], [0, 0, 1, 1], [], []>} : vector<128x128xbf16>, vector<128x128xbf16>, vector<128x128xf32> -> vector<128x128xf32>
    %c0_51 = arith.constant 0 : index
    %c0_52 = arith.constant 0 : index
    %51 = vector.load %arg5[%c0_51, %c0_52] : memref<128x128xf32, #tpu.memory_space<vmem>>, vector<128x128xf32>
    %52 = arith.addf %51, %50 : vector<128x128xf32>
    %c0_53 = arith.constant 0 : index
    %c0_54 = arith.constant 0 : index
    %53 = vector.load %arg5[%c0_53, %c0_54] : memref<128x128xf32, #tpu.memory_space<vmem>>, vector<128x128xf32>
    tpu.vector_store %arg5[%c0_53, %c0_54], %52 {strides = array<i32>} : memref<128x128xf32, #tpu.memory_space<vmem>>, vector<128x128xf32>,
    %c1_i32_55 = arith.constant 1 : i32
    %54 = arith.addi %0, %c1_i32_55 : i32
    %c0_56 = arith.constant 0 : index
    %55 = arith.index_cast %54 : i32 to index
    %c2_57 = arith.constant 2 : index
    %c0_58 = arith.constant 0 : index
    %56 = vector.load %arg3[%c0_56, %55, %c2_57, %c0_58] : memref<1x18x18x128xbf16, #tpu.memory_space<vmem>>, vector<1x8x16x128xbf16>
    %57 = vector.shape_cast %56 : vector<1x8x16x128xbf16> to vector<8x16x128xbf16>
    %58 = vector.shape_cast %57 : vector<8x16x128xbf16> to vector<128x128xbf16>
    %c0_59 = arith.constant 0 : index
    %c5 = arith.constant 5 : index
    %c0_60 = arith.constant 0 : index
    %c0_61 = arith.constant 0 : index
    %59 = vector.load %arg2[%c0_59, %c5, %c0_60, %c0_61] : memref<1x9x128x128xbf16, #tpu.memory_space<vmem>>, vector<1x1x128x128xbf16>
    %60 = vector.shape_cast %59 : vector<1x1x128x128xbf16> to vector<128x128xbf16>
    %cst_62 = arith.constant dense<0.000000e+00> : vector<128x128xf32>
    %61 = tpu.matmul %58, %60, %cst_62 {dimension_numbers = #tpu.dot_dimension_numbers<[1], [0], [0], [1], [0, 0, 1, 1], [], []>} : vector<128x128xbf16>, vector<128x128xbf16>, vector<128x128xf32> -> vector<128x128xf32>
    %c0_63 = arith.constant 0 : index
    %c0_64 = arith.constant 0 : index
    %62 = vector.load %arg5[%c0_63, %c0_64] : memref<128x128xf32, #tpu.memory_space<vmem>>, vector<128x128xf32>
    %63 = arith.addf %62, %61 : vector<128x128xf32>
    %c0_65 = arith.constant 0 : index
    %c0_66 = arith.constant 0 : index
    %64 = vector.load %arg5[%c0_65, %c0_66] : memref<128x128xf32, #tpu.memory_space<vmem>>, vector<128x128xf32>
    tpu.vector_store %arg5[%c0_65, %c0_66], %63 {strides = array<i32>} : memref<128x128xf32, #tpu.memory_space<vmem>>, vector<128x128xf32>,
    %c2_i32 = arith.constant 2 : i32
    %65 = arith.addi %0, %c2_i32 : i32
    %c0_67 = arith.constant 0 : index
    %66 = arith.index_cast %65 : i32 to index
    %c0_68 = arith.constant 0 : index
    %c0_69 = arith.constant 0 : index
    %67 = vector.load %arg3[%c0_67, %66, %c0_68, %c0_69] : memref<1x18x18x128xbf16, #tpu.memory_space<vmem>>, vector<1x8x16x128xbf16>
    %68 = vector.shape_cast %67 : vector<1x8x16x128xbf16> to vector<8x16x128xbf16>
    %69 = vector.shape_cast %68 : vector<8x16x128xbf16> to vector<128x128xbf16>
    %c0_70 = arith.constant 0 : index
    %c6 = arith.constant 6 : index
    %c0_71 = arith.constant 0 : index
    %c0_72 = arith.constant 0 : index
    %70 = vector.load %arg2[%c0_70, %c6, %c0_71, %c0_72] : memref<1x9x128x128xbf16, #tpu.memory_space<vmem>>, vector<1x1x128x128xbf16>
    %71 = vector.shape_cast %70 : vector<1x1x128x128xbf16> to vector<128x128xbf16>
    %cst_73 = arith.constant dense<0.000000e+00> : vector<128x128xf32>
    %72 = tpu.matmul %69, %71, %cst_73 {dimension_numbers = #tpu.dot_dimension_numbers<[1], [0], [0], [1], [0, 0, 1, 1], [], []>} : vector<128x128xbf16>, vector<128x128xbf16>, vector<128x128xf32> -> vector<128x128xf32>
    %c0_74 = arith.constant 0 : index
    %c0_75 = arith.constant 0 : index
    %73 = vector.load %arg5[%c0_74, %c0_75] : memref<128x128xf32, #tpu.memory_space<vmem>>, vector<128x128xf32>
    %74 = arith.addf %73, %72 : vector<128x128xf32>
    %c0_76 = arith.constant 0 : index
    %c0_77 = arith.constant 0 : index
    %75 = vector.load %arg5[%c0_76, %c0_77] : memref<128x128xf32, #tpu.memory_space<vmem>>, vector<128x128xf32>
    tpu.vector_store %arg5[%c0_76, %c0_77], %74 {strides = array<i32>} : memref<128x128xf32, #tpu.memory_space<vmem>>, vector<128x128xf32>,
    %c2_i32_78 = arith.constant 2 : i32
    %76 = arith.addi %0, %c2_i32_78 : i32
    %c0_79 = arith.constant 0 : index
    %77 = arith.index_cast %76 : i32 to index
    %c1_80 = arith.constant 1 : index
    %c0_81 = arith.constant 0 : index
    %78 = vector.load %arg3[%c0_79, %77, %c1_80, %c0_81] : memref<1x18x18x128xbf16, #tpu.memory_space<vmem>>, vector<1x8x16x128xbf16>
    %79 = vector.shape_cast %78 : vector<1x8x16x128xbf16> to vector<8x16x128xbf16>
    %80 = vector.shape_cast %79 : vector<8x16x128xbf16> to vector<128x128xbf16>
    %c0_82 = arith.constant 0 : index
    %c7 = arith.constant 7 : index
    %c0_83 = arith.constant 0 : index
    %c0_84 = arith.constant 0 : index
    %81 = vector.load %arg2[%c0_82, %c7, %c0_83, %c0_84] : memref<1x9x128x128xbf16, #tpu.memory_space<vmem>>, vector<1x1x128x128xbf16>
    %82 = vector.shape_cast %81 : vector<1x1x128x128xbf16> to vector<128x128xbf16>
    %cst_85 = arith.constant dense<0.000000e+00> : vector<128x128xf32>
    %83 = tpu.matmul %80, %82, %cst_85 {dimension_numbers = #tpu.dot_dimension_numbers<[1], [0], [0], [1], [0, 0, 1, 1], [], []>} : vector<128x128xbf16>, vector<128x128xbf16>, vector<128x128xf32> -> vector<128x128xf32>
    %c0_86 = arith.constant 0 : index
    %c0_87 = arith.constant 0 : index
    %84 = vector.load %arg5[%c0_86, %c0_87] : memref<128x128xf32, #tpu.memory_space<vmem>>, vector<128x128xf32>
    %85 = arith.addf %84, %83 : vector<128x128xf32>
    %c0_88 = arith.constant 0 : index
    %c0_89 = arith.constant 0 : index
    %86 = vector.load %arg5[%c0_88, %c0_89] : memref<128x128xf32, #tpu.memory_space<vmem>>, vector<128x128xf32>
    tpu.vector_store %arg5[%c0_88, %c0_89], %85 {strides = array<i32>} : memref<128x128xf32, #tpu.memory_space<vmem>>, vector<128x128xf32>,
    %c2_i32_90 = arith.constant 2 : i32
    %87 = arith.addi %0, %c2_i32_90 : i32
    %c0_91 = arith.constant 0 : index
    %88 = arith.index_cast %87 : i32 to index
    %c2_92 = arith.constant 2 : index
    %c0_93 = arith.constant 0 : index
    %89 = vector.load %arg3[%c0_91, %88, %c2_92, %c0_93] : memref<1x18x18x128xbf16, #tpu.memory_space<vmem>>, vector<1x8x16x128xbf16>
    %90 = vector.shape_cast %89 : vector<1x8x16x128xbf16> to vector<8x16x128xbf16>
    %91 = vector.shape_cast %90 : vector<8x16x128xbf16> to vector<128x128xbf16>
    %c0_94 = arith.constant 0 : index
    %c8 = arith.constant 8 : index
    %c0_95 = arith.constant 0 : index
    %c0_96 = arith.constant 0 : index
    %92 = vector.load %arg2[%c0_94, %c8, %c0_95, %c0_96] : memref<1x9x128x128xbf16, #tpu.memory_space<vmem>>, vector<1x1x128x128xbf16>
    %93 = vector.shape_cast %92 : vector<1x1x128x128xbf16> to vector<128x128xbf16>
    %cst_97 = arith.constant dense<0.000000e+00> : vector<128x128xf32>
    %94 = tpu.matmul %91, %93, %cst_97 {dimension_numbers = #tpu.dot_dimension_numbers<[1], [0], [0], [1], [0, 0, 1, 1], [], []>} : vector<128x128xbf16>, vector<128x128xbf16>, vector<128x128xf32> -> vector<128x128xf32>
    %c0_98 = arith.constant 0 : index
    %c0_99 = arith.constant 0 : index
    %95 = vector.load %arg5[%c0_98, %c0_99] : memref<128x128xf32, #tpu.memory_space<vmem>>, vector<128x128xf32>
    %96 = arith.addf %95, %94 : vector<128x128xf32>
    %c0_100 = arith.constant 0 : index
    %c0_101 = arith.constant 0 : index
    %97 = vector.load %arg5[%c0_100, %c0_101] : memref<128x128xf32, #tpu.memory_space<vmem>>, vector<128x128xf32>
    tpu.vector_store %arg5[%c0_100, %c0_101], %96 {strides = array<i32>} : memref<128x128xf32, #tpu.memory_space<vmem>>, vector<128x128xf32>,
    %c0_102 = arith.constant 0 : index
    %c0_103 = arith.constant 0 : index
    %98 = vector.load %arg5[%c0_102, %c0_103] : memref<128x128xf32, #tpu.memory_space<vmem>>, vector<128x128xf32>
    %99 = arith.truncf %98 : vector<128x128xf32> to vector<128x128xbf16>
    %c0_104 = arith.constant 0 : index
    %c0_105 = arith.constant 0 : index
    %c0_106 = arith.constant 0 : index
    %100 = vector.load %arg4[%c0_104, %c0_105, %c0_106] : memref<1x128x128xbf16, #tpu.memory_space<vmem>>, vector<1x128x128xbf16>
    %101 = vector.shape_cast %100 : vector<1x128x128xbf16> to vector<128x128xbf16>
    %102 = vector.shape_cast %99 : vector<128x128xbf16> to vector<1x128x128xbf16>
    tpu.vector_store %arg4[%c0_104, %c0_105, %c0_106], %102 {strides = array<i32>} : memref<1x128x128xbf16, #tpu.memory_space<vmem>>, vector<1x128x128xbf16>,
    return
  }
  func.func @transform_0(%arg0: i32, %arg1: i32) -> (i32, i32, i32, i32) {
    %c0_i32 = arith.constant 0 : i32
    %c0_i32_0 = arith.constant 0 : i32
    %c0_i32_1 = arith.constant 0 : i32
    %c0_i32_2 = arith.constant 0 : i32
    return %arg0, %c0_i32, %c0_i32_0, %c0_i32_1 : i32, i32, i32, i32
  }
  func.func @transform_1(%arg0: i32, %arg1: i32) -> (i32, i32, i32, i32) {
    %c0_i32 = arith.constant 0 : i32
    %c0_i32_0 = arith.constant 0 : i32
    %c0_i32_1 = arith.constant 0 : i32
    %c0_i32_2 = arith.constant 0 : i32
    return %arg0, %c0_i32, %c0_i32_0, %c0_i32_1 : i32, i32, i32, i32
  }
  func.func @transform_2(%arg0: i32, %arg1: i32) -> (i32, i32, i32) {
    %c0_i32 = arith.constant 0 : i32
    %c0_i32_0 = arith.constant 0 : i32
    return %arg0, %arg1, %c0_i32 : i32, i32, i32
  }
}

</mosaic_0001>

<llo_original>
// kernel: tpu_custom_call.1
$region0: #{tpu_custom_call.1}
  #allocation0 [shape = 'u32[]', space=smem, size = 0x4, offset = 0x4, fixed_abs, tag = 'smem constant byte address 0x4 - core index']
  #allocation1 [shape = 'u32[144,128]{1,0:T(1,128)}', space=vmem, size = 0x12000, scoped, tag = 'internal scratch']
  #allocation2 [shape = 'f32[128,128]{1,0:T(8,128)}', space=vmem, size = 0x10000, scoped, tag = 'scratch operand']
  %s0 = inlined_call_operand.hbm [shape: bf16[2,9,128,128], index: 0, kind: input, shape index: {}]
  %s1 = inlined_call_operand.vmem [shape: bf16[2,18,18,128], index: 1, kind: input, shape index: {}]
  %s2 = inlined_call_operand.hbm [shape: bf16[2,256,128], index: 2, kind: output, shape index: {}]
  %s3 = sld [smem:[#allocation0]]
  $region45: #{tpu_custom_call.1} parent=0
    _
  %s5 = ssub.s32 1, %s3
  %s6 = scalar_select 0, %s5, %s3
  $region1: #{tpu_custom_call.1} parent=0
    #allocation3 [shape = 'u8[589824]{0}', space=vmem, size = 0x90000, scoped, tag = 'input window, operand 0']
    #allocation4 [shape = 's32[2]{0}', space=sflag, size = 0x8, scoped, tag = 'scoped memory for tpu_custom_call.1']
    #allocation5 [shape = 's32[2]{0}', space=sflag, size = 0x8, scoped, tag = 'scoped memory for tpu_custom_call.1']
    #allocation6 [shape = 'u8[65536]{0}', space=vmem, size = 0x10000, scoped, tag = 'output window, operand 0']
    %7 = vsyncpa [#allocation4], 0
    %s8 = scalar_lea.sflag [#allocation4], 1
    %9 = vsyncpa %s8, 0
    %10 = vsyncpa [#allocation5], 0
    %s11 = scalar_lea.sflag [#allocation5], 1
    %12 = vsyncpa %s11, 0
    loop: start=0, step=1, limit=6
    $region2: #{tpu_custom_call.1} parent=1 // loop_pre_header
      _
    $region3: #{tpu_custom_call.1} parent=1 // loop_header
      %s14 = sphi 0, %s18
      %p15 = scmp.ge.s32.totalorder %s14, 6
      %s21 = sphi 0, %s33
      %s22 = sphi 0, %s29
      %s23 = sphi 0, %s21
      %s24 = sphi 0, %s22
      %s25 = sphi 0, %s23
      %s26 = sphi 0, %s24
      %s36 = sphi 0, %s38
      %s39 = sphi 0, %s36
      %s40 = sphi 0, %s39
      %s56 = sphi 0, %s40
      %s62 = sphi 0, %s64
      %s65 = sphi 0, %s62
      %s66 = sphi 0, %s65
      %s82 = sphi 0, %s66
      %s90 = sphi 0, %s92
      %s93 = sphi 0, %s90
      %s94 = sphi 0, %s93
      %s110 = sphi 0, %s94
    $region4: #{tpu_custom_call.1} parent=1 // loop_header_branch
      %17 = sbr.rel (%p15) target = $region8
    $region5: #{tpu_custom_call.1} parent=1 // loop_body
      %s19 = ssub.s32 %s14, 1
      %s20 = ssub.s32 %s14, 2
      %s27 = sadd.s32 1, %s22
      %p28 = scmp.ge.s32.totalorder %s27, 2
      %s29 = scalar_select %p28, 0, %s27
      %s30 = sadd.s32 1, %s21
      %s31 = scalar_select %p28, %s30, %s21
      %p32 = scmp.ge.s32.totalorder %s31, 2
      %s33 = scalar_select %p32, 0, %s31
      %s34 = ssub.s32 %s21, %s33
      %p35 = scmp.eq.s32.totalorder %s34, 0
      %s37 = sadd.s32 %s36, 1
      %s38 = scalar_select %p35, %s36, %s37
      %p41 = pneg %p35
      %p42 = scmp.eq.s32.totalorder %s14, 3
      %p43 = por %p41, %p42
      %p44 = scmp.ne.s32.totalorder %s36, %s39
      %p45 = scmp.eq.s32.totalorder %s14, 0
      %p46 = por %p44, %p45
      %p47 = scmp.ne.s32.totalorder %s36, %s39
      %p48 = scmp.eq.s32.totalorder %s19, 3
      %p49 = por %p47, %p48
      %p50 = scmp.ne.s32.totalorder %s39, %s40
      %p51 = scmp.eq.s32.totalorder %s19, 0
      %p52 = por %p50, %p51
      %p53 = scmp.ne.s32.totalorder %s39, %s40
      %p54 = scmp.eq.s32.totalorder %s20, 3
      %p55 = por %p53, %p54
      %p57 = scmp.ne.s32.totalorder %s40, %s56
      %p58 = scmp.eq.s32.totalorder %s20, 0
      %p59 = por %p57, %p58
      %s60 = ssub.s32 %s21, %s33
      %p61 = scmp.eq.s32.totalorder %s60, 0
      %s63 = sadd.s32 %s62, 1
      %s64 = scalar_select %p61, %s62, %s63
      %p67 = pneg %p61
      %p68 = scmp.eq.s32.totalorder %s14, 3
      %p69 = por %p67, %p68
      %p70 = scmp.ne.s32.totalorder %s62, %s65
      %p71 = scmp.eq.s32.totalorder %s14, 0
      %p72 = por %p70, %p71
      %p73 = scmp.ne.s32.totalorder %s62, %s65
      %p74 = scmp.eq.s32.totalorder %s19, 3
      %p75 = por %p73, %p74
      %p76 = scmp.ne.s32.totalorder %s65, %s66
      %p77 = scmp.eq.s32.totalorder %s19, 0
      %p78 = por %p76, %p77
      %p79 = scmp.ne.s32.totalorder %s65, %s66
      %p80 = scmp.eq.s32.totalorder %s20, 3
      %p81 = por %p79, %p80
      %p83 = scmp.ne.s32.totalorder %s66, %s82
      %p84 = scmp.eq.s32.totalorder %s20, 0
      %p85 = por %p83, %p84
      %s86 = ssub.s32 %s21, %s33
      %s87 = ssub.s32 %s22, %s29
      %s88 = sor.u32 %s86, %s87
      %p89 = scmp.eq.s32.totalorder %s88, 0
      %s91 = sadd.s32 %s90, 1
      %s92 = scalar_select %p89, %s90, %s91
      %p95 = pneg %p89
      %p96 = scmp.eq.s32.totalorder %s14, 3
      %p97 = por %p95, %p96
      %p98 = scmp.ne.s32.totalorder %s90, %s93
      %p99 = scmp.eq.s32.totalorder %s14, 0
      %p100 = por %p98, %p99
      %p101 = scmp.ne.s32.totalorder %s90, %s93
      %p102 = scmp.eq.s32.totalorder %s19, 3
      %p103 = por %p101, %p102
      %p104 = scmp.ne.s32.totalorder %s93, %s94
      %p105 = scmp.eq.s32.totalorder %s19, 0
      %p106 = por %p104, %p105
      %p107 = scmp.ne.s32.totalorder %s93, %s94
      %p108 = scmp.eq.s32.totalorder %s20, 3
      %p109 = por %p107, %p108
      %p111 = scmp.ne.s32.totalorder %s94, %s110
      %p112 = scmp.eq.s32.totalorder %s20, 0
      %p113 = por %p111, %p112
      %p114 = scmp.le.s32.totalorder 1, %s14
      %p115 = scmp.lt.s32.totalorder %s14, 5
      %p116 = pnand %p114, %p115
      %p117 = pneg %p116
      // Predicated region
      $region9: #{tpu_custom_call.1} parent=5 // pred_check
        _
      $region10: #{tpu_custom_call.1} parent=5 // pred_check_branch
        %119 = sbr.rel (%p116) target = $region12
      $region11: #{tpu_custom_call.1} parent=5 // pred_region
        %s120 = ssub.s32 %s14, 1
      $region12: #{tpu_custom_call.1} parent=5 // pred_fallthru
        _
      %p121 = scmp.lt.s32.totalorder %s14, 4
      // Predicated region
      $region13: #{tpu_custom_call.1} parent=5 // pred_check
        %p122 = pneg %p121
      $region14: #{tpu_custom_call.1} parent=5 // pred_check_branch
        %124 = sbr.rel (%p122) target = $region16
      $region15: #{tpu_custom_call.1} parent=5 // pred_region
        // Predicated region
        $region17: #{tpu_custom_call.1} parent=15 // pred_check
          %p125 = pneg %p46
        $region18: #{tpu_custom_call.1} parent=15 // pred_check_branch
          %127 = sbr.rel (%p125) target = $region20
        $region19: #{tpu_custom_call.1} parent=15 // pred_region
          %s128 = sand.u32 %s36, 1
          %s129 = scalar_lea.sflag [#allocation4], %s128
          %s130 = sand.u32 %s36, 1
          %s131 = smul.addr %s130, 576
          %s132 = scalar_lea.vmem [#allocation3], %s131
          %s134 = ssub.s32 9216, 9216
          %135 = vsyncadd %s129, %s134
          %s136 = smul.addr %s21, 144
          %s137 = smul.addr %s136, 64
          %s138 = scalar_lea.hbm %s0, %s137
          %s139 = sshll.u32 %s132, 4
          %s140 = int_to_ptr.vmem [resolvable:$true] %s139
          %145 = dma.hbm_to_vmem [thread:$0]  %s138, 9216, %s140, %s129, 64, 64, 4
        $region20: #{tpu_custom_call.1} parent=15 // pred_fallthru
          _
        // Predicated region
        $region21: #{tpu_custom_call.1} parent=15 // pred_check
          %p146 = pneg %p72
        $region22: #{tpu_custom_call.1} parent=15 // pred_check_branch
          %148 = sbr.rel (%p146) target = $region24
        $region23: #{tpu_custom_call.1} parent=15 // pred_region
          %p149 = scmp.lt.s32.totalorder %s21, 1
          %s150 = scalar_select %p149, %s21, 1
          %s151 = smul.addr %s150, 54
          %s152 = smul.addr %s151, 4
          %s153 = scalar_lea.vmem %s1, %s152
        $region24: #{tpu_custom_call.1} parent=15 // pred_fallthru
          _
      $region16: #{tpu_custom_call.1} parent=5 // pred_fallthru
        _
      %p154 = scmp.le.s32.totalorder 1, %s14
      %p155 = scmp.lt.s32.totalorder %s14, 5
      %p156 = pnand %p154, %p155
      %p157 = pneg %p156
      // Predicated region
      $region25: #{tpu_custom_call.1} parent=5 // pred_check
        _
      $region26: #{tpu_custom_call.1} parent=5 // pred_check_branch
        %159 = sbr.rel (%p156) target = $region28
      $region27: #{tpu_custom_call.1} parent=5 // pred_region
        %s160 = ssub.s32 %s14, 1
        %s161 = sand.u32 %s39, 1
        %s162 = scalar_lea.sflag [#allocation4], %s161
        %s163 = sand.u32 %s39, 1
        %s164 = smul.addr %s163, 576
        %s165 = scalar_lea.vmem [#allocation3], %s164
        // Predicated region
        $region29: #{tpu_custom_call.1} parent=27 // pred_check
          %p166 = pneg %p52
        $region30: #{tpu_custom_call.1} parent=27 // pred_check_branch
          %168 = sbr.rel (%p166) target = $region32
        $region31: #{tpu_custom_call.1} parent=27 // pred_region
          %169 = dma.done %s162, 9216
        $region32: #{tpu_custom_call.1} parent=27 // pred_fallthru
          _
        %s170 = sand.u32 %s39, 1
        %s171 = scalar_lea.sflag [#allocation4], %s170
        %s172 = sand.u32 %s39, 1
        %s173 = smul.addr %s172, 576
        %s174 = scalar_lea.vmem [#allocation3], %s173
        %p175 = pneg %p52
        %p176 = pneg %p49
        %p177 = scmp.lt.s32.totalorder %s23, 1
        %s178 = scalar_select %p177, %s23, 1
        %s179 = smul.addr %s178, 54
        %s180 = smul.addr %s179, 4
        %s181 = scalar_lea.vmem %s1, %s180
        %p182 = pneg %p78
        %p183 = pneg %p75
        %p184 = pneg %p106
        %p185 = pneg %p103
        %s186 = sand.u32 %s93, 1
        %s187 = scalar_lea.sflag [#allocation5], %s186
        %s188 = sand.u32 %s93, 1
        %s189 = smul.addr %s188, 64
        %s190 = scalar_lea.vmem [#allocation6], %s189
        %p191 = scmp.lt.s32.totalorder %s23, 1
        %s192 = scalar_select %p191, %s23, 1
        %s193 = smul.addr %s192, 54
        %s194 = smul.addr %s193, 4
        %s195 = scalar_lea.vmem %s1, %s194
        %s196 = smul.u32 16, %s24
        %s198 = smul.u32 %s24, 8
        %s199 = smul.u32 %s198, 3
        %s200 = smul.addr %s199, 4
        %s201 = scalar_lea.vmem %s195, %s200
        %v202 = vld [vmem:[%s201] sm:$0xf]
        %v203 = vld [vmem:[%s201 + $0x4] sm:$0xf]
        %v204 = vld [vmem:[%s201 + $0xc] sm:$0xf]
        %v205 = vld [vmem:[%s201 + $0x10] sm:$0xf]
        %v206 = vld [vmem:[%s201 + $0x18] sm:$0xf]
        %v207 = vld [vmem:[%s201 + $0x1c] sm:$0xf]
        %v208 = vld [vmem:[%s201 + $0x24] sm:$0xf]
        %v209 = vld [vmem:[%s201 + $0x28] sm:$0xf]
        %v210 = vld [vmem:[%s201 + $0x30] sm:$0xf]
        %v211 = vld [vmem:[%s201 + $0x34] sm:$0xf]
        %v212 = vld [vmem:[%s201 + $0x3c] sm:$0xf]
        %v213 = vld [vmem:[%s201 + $0x40] sm:$0xf]
        %v214 = vld [vmem:[%s201 + $0x48] sm:$0xf]
        %v215 = vld [vmem:[%s201 + $0x4c] sm:$0xf]
        %v216 = vld [vmem:[%s201 + $0x54] sm:$0xf]
        %v217 = vld [vmem:[%s201 + $0x58] sm:$0xf]
        %v218 = vld [vmem:[%s165] sm:$0xf]
        %v219 = vld [vmem:[%s165 + $0x4] sm:$0xf]
        %v220 = vld [vmem:[%s165 + $0x8] sm:$0xf]
        %v221 = vld [vmem:[%s165 + $0xc] sm:$0xf]
        %v222 = vld [vmem:[%s165 + $0x10] sm:$0xf]
        %v223 = vld [vmem:[%s165 + $0x14] sm:$0xf]
        %v224 = vld [vmem:[%s165 + $0x18] sm:$0xf]
        %v225 = vld [vmem:[%s165 + $0x1c] sm:$0xf]
        %v226 = vld [vmem:[%s165 + $0x20] sm:$0xf]
        %v227 = vld [vmem:[%s165 + $0x24] sm:$0xf]
        %v228 = vld [vmem:[%s165 + $0x28] sm:$0xf]
        %v229 = vld [vmem:[%s165 + $0x2c] sm:$0xf]
        %v230 = vld [vmem:[%s165 + $0x30] sm:$0xf]
        %v231 = vld [vmem:[%s165 + $0x34] sm:$0xf]
        %v232 = vld [vmem:[%s165 + $0x38] sm:$0xf]
        %v233 = vld [vmem:[%s165 + $0x3c] sm:$0xf]
        %v250 = vunpack.c.l.b16 %v202
        %v251 = vunpack.c.l.b16 %v203
        %v252 = vunpack.c.l.b16 %v204
        %v253 = vunpack.c.l.b16 %v205
        %v254 = vunpack.c.l.b16 %v206
        %v255 = vunpack.c.l.b16 %v207
        %v256 = vunpack.c.l.b16 %v208
        %v257 = vunpack.c.l.b16 %v209
        %v258 = vunpack.c.l.b16 %v210
        %v259 = vunpack.c.l.b16 %v211
        %v260 = vunpack.c.l.b16 %v212
        %v261 = vunpack.c.l.b16 %v213
        %v262 = vunpack.c.l.b16 %v214
        %v263 = vunpack.c.l.b16 %v215
        %v264 = vunpack.c.l.b16 %v216
        %v265 = vunpack.c.l.b16 %v217
        %v266 = vpack.c.b16 %v251, %v250
        %v267 = vpack.c.b16 %v253, %v252
        %v268 = vpack.c.b16 %v255, %v254
        %v269 = vpack.c.b16 %v257, %v256
        %v270 = vpack.c.b16 %v259, %v258
        %v271 = vpack.c.b16 %v261, %v260
        %v272 = vpack.c.b16 %v263, %v262
        %v273 = vpack.c.b16 %v265, %v264
        %v298 = vunpack.c.l.b16 %v218
        %v299 = vunpack.c.l.b16 %v219
        %v300 = vunpack.c.l.b16 %v220
        %v301 = vunpack.c.l.b16 %v221
        %v302 = vunpack.c.l.b16 %v222
        %v303 = vunpack.c.l.b16 %v223
        %v304 = vunpack.c.l.b16 %v224
        %v305 = vunpack.c.l.b16 %v225
        %v306 = vunpack.c.l.b16 %v226
        %v307 = vunpack.c.l.b16 %v227
        %v308 = vunpack.c.l.b16 %v228
        %v309 = vunpack.c.l.b16 %v229
        %v310 = vunpack.c.l.b16 %v230
        %v311 = vunpack.c.l.b16 %v231
        %v312 = vunpack.c.l.b16 %v232
        %v313 = vunpack.c.l.b16 %v233
        %v314 = vpack.c.b16 %v299, %v298
        %v315 = vpack.c.b16 %v301, %v300
        %v316 = vpack.c.b16 %v303, %v302
        %v317 = vpack.c.b16 %v305, %v304
        %v318 = vpack.c.b16 %v307, %v306
        %v319 = vpack.c.b16 %v309, %v308
        %v320 = vpack.c.b16 %v311, %v310
        %v321 = vpack.c.b16 %v313, %v312
        %330 = vmatprep.subr.bf16.mxu0 0
        %331 = vmatpush1.bf16.msra.mxu0 %v321
        %332 = vmatprep.subr.bf16.mxu0 0
        %333 = vmatpush1.bf16.msra.mxu0 %v320
        %334 = vmatprep.subr.bf16.mxu0 0
        %335 = vmatpush1.bf16.msra.mxu0 %v319
        %336 = vmatprep.subr.bf16.mxu0 0
        %337 = vmatpush1.bf16.msra.mxu0 %v318
        %338 = vmatprep.subr.bf16.mxu0 0
        %339 = vmatpush1.bf16.msra.mxu0 %v317
        %340 = vmatprep.subr.bf16.mxu0 0
        %341 = vmatpush1.bf16.msra.mxu0 %v316
        %342 = vmatprep.subr.bf16.mxu0 0
        %343 = vmatpush1.bf16.msra.mxu0 %v315
        %344 = vmatprep.subr.bf16.mxu0 0
        %345 = vmatpush1.bf16.msra.mxu0 %v314
        %346 = vmatprep.subr.bf16.mxu0 0
        %347 = vmatpush2.bf16.msra.mxu0 0
        %348 = vmatprep.subr.bf16.mxu0 0
        %349 = vmatpush2.bf16.msra.mxu0 0
        %350 = vmatprep.subr.bf16.mxu0 0
        %351 = vmatpush2.bf16.msra.mxu0 0
        %352 = vmatprep.subr.bf16.mxu0 0
        %353 = vmatpush2.bf16.msra.mxu0 0
        %354 = vmatprep.subr.bf16.mxu0 0
        %355 = vmatpush2.bf16.msra.mxu0 0
        %356 = vmatprep.subr.bf16.mxu0 0
        %357 = vmatpush2.bf16.msra.mxu0 0
        %358 = vmatprep.subr.bf16.mxu0 0
        %359 = vmatpush2.bf16.msra.mxu0 0
        %360 = vmatprep.subr.bf16.mxu0 0
        %361 = vmatpush2.bf16.msra.mxu0 0
        %362 = vmatprep.mubr.bf16.mxu0 0
        %363 = vmatmul.mubr.bf16.gmra.mxu0 %v266
        %v364 = vpop.f32.mrf.mxu0
        %v365 = vadd.f32 0.0, %v364
        %v366 = vpop.f32.mrf.mxu0
        %v367 = vpop.f32.mrf.mxu0
        %v368 = vadd.f32 0.0, %v367
        %v369 = vpop.f32.mrf.mxu0
        %370 = vmatprep.mubr.bf16.mxu0 0
        %371 = vmatmul.mubr.bf16.gmra.mxu0 %v267
        %v372 = vpop.f32.mrf.mxu0
        %v373 = vadd.f32 0.0, %v372
        %v374 = vpop.f32.mrf.mxu0
        %v375 = vpop.f32.mrf.mxu0
        %v376 = vadd.f32 0.0, %v375
        %v377 = vpop.f32.mrf.mxu0
        %378 = vmatprep.mubr.bf16.mxu0 0
        %379 = vmatmul.mubr.bf16.gmra.mxu0 %v268
        %v380 = vpop.f32.mrf.mxu0
        %v381 = vadd.f32 0.0, %v380
        %v382 = vpop.f32.mrf.mxu0
        %v383 = vpop.f32.mrf.mxu0
        %v384 = vadd.f32 0.0, %v383
        %v385 = vpop.f32.mrf.mxu0
        %386 = vmatprep.mubr.bf16.mxu0 0
        %387 = vmatmul.mubr.bf16.gmra.mxu0 %v269
        %v388 = vpop.f32.mrf.mxu0
        %v389 = vadd.f32 0.0, %v388
        %v390 = vpop.f32.mrf.mxu0
        %v391 = vpop.f32.mrf.mxu0
        %v392 = vadd.f32 0.0, %v391
        %v393 = vpop.f32.mrf.mxu0
        %394 = vmatprep.mubr.bf16.mxu0 0
        %395 = vmatmul.mubr.bf16.gmra.mxu0 %v270
        %v396 = vpop.f32.mrf.mxu0
        %v397 = vadd.f32 0.0, %v396
        %v398 = vpop.f32.mrf.mxu0
        %v399 = vpop.f32.mrf.mxu0
        %v400 = vadd.f32 0.0, %v399
        %v401 = vpop.f32.mrf.mxu0
        %402 = vmatprep.mubr.bf16.mxu0 0
        %403 = vmatmul.mubr.bf16.gmra.mxu0 %v271
        %v404 = vpop.f32.mrf.mxu0
        %v405 = vadd.f32 0.0, %v404
        %v406 = vpop.f32.mrf.mxu0
        %v407 = vpop.f32.mrf.mxu0
        %v408 = vadd.f32 0.0, %v407
        %v409 = vpop.f32.mrf.mxu0
        %410 = vmatprep.mubr.bf16.mxu0 0
        %411 = vmatmul.mubr.bf16.gmra.mxu0 %v272
        %v412 = vpop.f32.mrf.mxu0
        %v413 = vadd.f32 0.0, %v412
        %v414 = vpop.f32.mrf.mxu0
        %v415 = vpop.f32.mrf.mxu0
        %v416 = vadd.f32 0.0, %v415
        %v417 = vpop.f32.mrf.mxu0
        %418 = vmatprep.mubr.bf16.mxu0 0
        %419 = vmatmul.mubr.bf16.gmra.mxu0 %v273
        %v420 = vpop.f32.mrf.mxu0
        %v421 = vadd.f32 0.0, %v420
        %v422 = vpop.f32.mrf.mxu0
        %v423 = vpop.f32.mrf.mxu0
        %v424 = vadd.f32 0.0, %v423
        %v425 = vpop.f32.mrf.mxu0
        %426 = vdwg.mxu0
        %427 = vst [vmem:[#allocation2] sm:$0xff] %v365
        %428 = vst [vmem:[#allocation2 + $0x8] sm:$0xff] %v368
        %429 = vst [vmem:[#allocation2 + $0x10] sm:$0xff] %v373
        %430 = vst [vmem:[#allocation2 + $0x18] sm:$0xff] %v376
        %431 = vst [vmem:[#allocation2 + $0x20] sm:$0xff] %v381
        %432 = vst [vmem:[#allocation2 + $0x28] sm:$0xff] %v384
        %433 = vst [vmem:[#allocation2 + $0x30] sm:$0xff] %v389
        %434 = vst [vmem:[#allocation2 + $0x38] sm:$0xff] %v392
        %435 = vst [vmem:[#allocation2 + $0x40] sm:$0xff] %v397
        %436 = vst [vmem:[#allocation2 + $0x48] sm:$0xff] %v400
        %437 = vst [vmem:[#allocation2 + $0x50] sm:$0xff] %v405
        %438 = vst [vmem:[#allocation2 + $0x58] sm:$0xff] %v408
        %439 = vst [vmem:[#allocation2 + $0x60] sm:$0xff] %v413
        %440 = vst [vmem:[#allocation2 + $0x68] sm:$0xff] %v416
        %441 = vst [vmem:[#allocation2 + $0x70] sm:$0xff] %v421
        %442 = vst [vmem:[#allocation2 + $0x78] sm:$0xff] %v424
        %v443 = vld [vmem:[%s201] sm:$0xf]
        %v444 = vld [vmem:[%s201 + $0x4] sm:$0xf]
        %v445 = vld [vmem:[%s201 + $0x8] sm:$0x1]
        %v446 = vld [vmem:[%s201 + $0xc] sm:$0xf]
        %v447 = vld [vmem:[%s201 + $0x10] sm:$0xf]
        %v448 = vld [vmem:[%s201 + $0x14] sm:$0x1]
        %v449 = vld [vmem:[%s201 + $0x18] sm:$0xf]
        %v450 = vld [vmem:[%s201 + $0x1c] sm:$0xf]
        %v451 = vld [vmem:[%s201 + $0x20] sm:$0x1]
        %v452 = vld [vmem:[%s201 + $0x24] sm:$0xf]
        %v453 = vld [vmem:[%s201 + $0x28] sm:$0xf]
        %v454 = vld [vmem:[%s201 + $0x2c] sm:$0x1]
        %v455 = vld [vmem:[%s201 + $0x30] sm:$0xf]
        %v456 = vld [vmem:[%s201 + $0x34] sm:$0xf]
        %v457 = vld [vmem:[%s201 + $0x38] sm:$0x1]
        %v458 = vld [vmem:[%s201 + $0x3c] sm:$0xf]
        %v459 = vld [vmem:[%s201 + $0x40] sm:$0xf]
        %v460 = vld [vmem:[%s201 + $0x44] sm:$0x1]
        %v461 = vld [vmem:[%s201 + $0x48] sm:$0xf]
        %v462 = vld [vmem:[%s201 + $0x4c] sm:$0xf]
        %v463 = vld [vmem:[%s201 + $0x50] sm:$0x1]
        %v464 = vld [vmem:[%s201 + $0x54] sm:$0xf]
        %v465 = vld [vmem:[%s201 + $0x58] sm:$0xf]
        %v466 = vld [vmem:[%s201 + $0x5c] sm:$0x1]
        %vm467 = vsmask.f32 3328
        %vm468 = vsmask.f32 7440
        %vm469 = vmor %vm467, %vm468
        %v471 = vshrl.u32 %v443, 16
        %v473 = vrot.slane %v471, 4
        %v474 = vshll.u32 %v443, 16
        %v476 = vrot.slane %v474, 5
        %v477 = vor.u32 %v473, %v476
        %v478 = vrot.slane %v477, 4
        %v480 = vshll.u32 %v444, 16
        %v482 = vrot.slane %v480, 5
        %v483 = vsel %vm469, %v478, %v482
        %v484 = vshrl.u32 %v444, 16
        %v486 = vrot.slane %v484, 4
        %v487 = vor.u32 %v486, %v482
        %v488 = vrot.slane %v487, 4
        %v490 = vshll.u32 %v445, 16
        %v492 = vrot.slane %v490, 5
        %v493 = vsel %vm469, %v488, %v492
        %v495 = vshrl.u32 %v446, 16
        %v497 = vrot.slane %v495, 4
        %v498 = vshll.u32 %v446, 16
        %v500 = vrot.slane %v498, 5
        %v501 = vor.u32 %v497, %v500
        %v502 = vrot.slane %v501, 4
        %v504 = vshll.u32 %v447, 16
        %v506 = vrot.slane %v504, 5
        %v507 = vsel %vm469, %v502, %v506
        %v508 = vshrl.u32 %v447, 16
        %v510 = vrot.slane %v508, 4
        %v511 = vor.u32 %v510, %v506
        %v512 = vrot.slane %v511, 4
        %v514 = vshll.u32 %v448, 16
        %v516 = vrot.slane %v514, 5
        %v517 = vsel %vm469, %v512, %v516
        %v519 = vshrl.u32 %v449, 16
        %v521 = vrot.slane %v519, 4
        %v522 = vshll.u32 %v449, 16
        %v524 = vrot.slane %v522, 5
        %v525 = vor.u32 %v521, %v524
        %v526 = vrot.slane %v525, 4
        %v528 = vshll.u32 %v450, 16
        %v530 = vrot.slane %v528, 5
        %v531 = vsel %vm469, %v526, %v530
        %v532 = vshrl.u32 %v450, 16
        %v534 = vrot.slane %v532, 4
        %v535 = vor.u32 %v534, %v530
        %v536 = vrot.slane %v535, 4
        %v538 = vshll.u32 %v451, 16
        %v540 = vrot.slane %v538, 5
        %v541 = vsel %vm469, %v536, %v540
        %v543 = vshrl.u32 %v452, 16
        %v545 = vrot.slane %v543, 4
        %v546 = vshll.u32 %v452, 16
        %v548 = vrot.slane %v546, 5
        %v549 = vor.u32 %v545, %v548
        %v550 = vrot.slane %v549, 4
        %v552 = vshll.u32 %v453, 16
        %v554 = vrot.slane %v552, 5
        %v555 = vsel %vm469, %v550, %v554
        %v556 = vshrl.u32 %v453, 16
        %v558 = vrot.slane %v556, 4
        %v559 = vor.u32 %v558, %v554
        %v560 = vrot.slane %v559, 4
        %v562 = vshll.u32 %v454, 16
        %v564 = vrot.slane %v562, 5
        %v565 = vsel %vm469, %v560, %v564
        %v567 = vshrl.u32 %v455, 16
        %v569 = vrot.slane %v567, 4
        %v570 = vshll.u32 %v455, 16
        %v572 = vrot.slane %v570, 5
        %v573 = vor.u32 %v569, %v572
        %v574 = vrot.slane %v573, 4
        %v576 = vshll.u32 %v456, 16
        %v578 = vrot.slane %v576, 5
        %v579 = vsel %vm469, %v574, %v578
        %v580 = vshrl.u32 %v456, 16
        %v582 = vrot.slane %v580, 4
        %v583 = vor.u32 %v582, %v578
        %v584 = vrot.slane %v583, 4
        %v586 = vshll.u32 %v457, 16
        %v588 = vrot.slane %v586, 5
        %v589 = vsel %vm469, %v584, %v588
        %v591 = vshrl.u32 %v458, 16
        %v593 = vrot.slane %v591, 4
        %v594 = vshll.u32 %v458, 16
        %v596 = vrot.slane %v594, 5
        %v597 = vor.u32 %v593, %v596
        %v598 = vrot.slane %v597, 4
        %v600 = vshll.u32 %v459, 16
        %v602 = vrot.slane %v600, 5
        %v603 = vsel %vm469, %v598, %v602
        %v604 = vshrl.u32 %v459, 16
        %v606 = vrot.slane %v604, 4
        %v607 = vor.u32 %v606, %v602
        %v608 = vrot.slane %v607, 4
        %v610 = vshll.u32 %v460, 16
        %v612 = vrot.slane %v610, 5
        %v613 = vsel %vm469, %v608, %v612
        %v615 = vshrl.u32 %v461, 16
        %v617 = vrot.slane %v615, 4
        %v618 = vshll.u32 %v461, 16
        %v620 = vrot.slane %v618, 5
        %v621 = vor.u32 %v617, %v620
        %v622 = vrot.slane %v621, 4
        %v624 = vshll.u32 %v462, 16
        %v626 = vrot.slane %v624, 5
        %v627 = vsel %vm469, %v622, %v626
        %v628 = vshrl.u32 %v462, 16
        %v630 = vrot.slane %v628, 4
        %v631 = vor.u32 %v630, %v626
        %v632 = vrot.slane %v631, 4
        %v634 = vshll.u32 %v463, 16
        %v636 = vrot.slane %v634, 5
        %v637 = vsel %vm469, %v632, %v636
        %v639 = vshrl.u32 %v464, 16
        %v641 = vrot.slane %v639, 4
        %v642 = vshll.u32 %v464, 16
        %v644 = vrot.slane %v642, 5
        %v645 = vor.u32 %v641, %v644
        %v646 = vrot.slane %v645, 4
        %v648 = vshll.u32 %v465, 16
        %v650 = vrot.slane %v648, 5
        %v651 = vsel %vm469, %v646, %v650
        %v652 = vshrl.u32 %v465, 16
        %v654 = vrot.slane %v652, 4
        %v655 = vor.u32 %v654, %v650
        %v656 = vrot.slane %v655, 4
        %v658 = vshll.u32 %v466, 16
        %v660 = vrot.slane %v658, 5
        %v661 = vsel %vm469, %v656, %v660
        %s662 = scalar_lea.vmem %s165, 64 [#allocation3]
        %v663 = vld [vmem:[%s662] sm:$0xf]
        %v664 = vld [vmem:[%s662 + $0x4] sm:$0xf]
        %v665 = vld [vmem:[%s662 + $0x8] sm:$0xf]
        %v666 = vld [vmem:[%s662 + $0xc] sm:$0xf]
        %v667 = vld [vmem:[%s662 + $0x10] sm:$0xf]
        %v668 = vld [vmem:[%s662 + $0x14] sm:$0xf]
        %v669 = vld [vmem:[%s662 + $0x18] sm:$0xf]
        %v670 = vld [vmem:[%s662 + $0x1c] sm:$0xf]
        %v671 = vld [vmem:[%s662 + $0x20] sm:$0xf]
        %v672 = vld [vmem:[%s662 + $0x24] sm:$0xf]
        %v673 = vld [vmem:[%s662 + $0x28] sm:$0xf]
        %v674 = vld [vmem:[%s662 + $0x2c] sm:$0xf]
        %v675 = vld [vmem:[%s662 + $0x30] sm:$0xf]
        %v676 = vld [vmem:[%s662 + $0x34] sm:$0xf]
        %v677 = vld [vmem:[%s662 + $0x38] sm:$0xf]
        %v678 = vld [vmem:[%s662 + $0x3c] sm:$0xf]
        %v679 = vunpack.c.l.b16 %v483
        %v680 = vunpack.c.l.b16 %v493
        %v681 = vunpack.c.l.b16 %v507
        %v682 = vunpack.c.l.b16 %v517
        %v683 = vunpack.c.l.b16 %v531
        %v684 = vunpack.c.l.b16 %v541
        %v685 = vunpack.c.l.b16 %v555
        %v686 = vunpack.c.l.b16 %v565
        %v687 = vunpack.c.l.b16 %v579
        %v688 = vunpack.c.l.b16 %v589
        %v689 = vunpack.c.l.b16 %v603
        %v690 = vunpack.c.l.b16 %v613
        %v691 = vunpack.c.l.b16 %v627
        %v692 = vunpack.c.l.b16 %v637
        %v693 = vunpack.c.l.b16 %v651
        %v694 = vunpack.c.l.b16 %v661
        %v695 = vpack.c.b16 %v680, %v679
        %v696 = vpack.c.b16 %v682, %v681
        %v697 = vpack.c.b16 %v684, %v683
        %v698 = vpack.c.b16 %v686, %v685
        %v699 = vpack.c.b16 %v688, %v687
        %v700 = vpack.c.b16 %v690, %v689
        %v701 = vpack.c.b16 %v692, %v691
        %v702 = vpack.c.b16 %v694, %v693
        %v727 = vunpack.c.l.b16 %v663
        %v728 = vunpack.c.l.b16 %v664
        %v729 = vunpack.c.l.b16 %v665
        %v730 = vunpack.c.l.b16 %v666
        %v731 = vunpack.c.l.b16 %v667
        %v732 = vunpack.c.l.b16 %v668
        %v733 = vunpack.c.l.b16 %v669
        %v734 = vunpack.c.l.b16 %v670
        %v735 = vunpack.c.l.b16 %v671
        %v736 = vunpack.c.l.b16 %v672
        %v737 = vunpack.c.l.b16 %v673
        %v738 = vunpack.c.l.b16 %v674
        %v739 = vunpack.c.l.b16 %v675
        %v740 = vunpack.c.l.b16 %v676
        %v741 = vunpack.c.l.b16 %v677
        %v742 = vunpack.c.l.b16 %v678
        %v743 = vpack.c.b16 %v728, %v727
        %v744 = vpack.c.b16 %v730, %v729
        %v745 = vpack.c.b16 %v732, %v731
        %v746 = vpack.c.b16 %v734, %v733
        %v747 = vpack.c.b16 %v736, %v735
        %v748 = vpack.c.b16 %v738, %v737
        %v749 = vpack.c.b16 %v740, %v739
        %v750 = vpack.c.b16 %v742, %v741
        %759 = vmatprep.subr.bf16.mxu0 0
        %760 = vmatpush1.bf16.msra.mxu0 %v750
        %761 = vmatprep.subr.bf16.mxu0 0
        %762 = vmatpush1.bf16.msra.mxu0 %v749
        %763 = vmatprep.subr.bf16.mxu0 0
        %764 = vmatpush1.bf16.msra.mxu0 %v748
        %765 = vmatprep.subr.bf16.mxu0 0
        %766 = vmatpush1.bf16.msra.mxu0 %v747
        %767 = vmatprep.subr.bf16.mxu0 0
        %768 = vmatpush1.bf16.msra.mxu0 %v746
        %769 = vmatprep.subr.bf16.mxu0 0
        %770 = vmatpush1.bf16.msra.mxu0 %v745
        %771 = vmatprep.subr.bf16.mxu0 0
        %772 = vmatpush1.bf16.msra.mxu0 %v744
        %773 = vmatprep.subr.bf16.mxu0 0
        %774 = vmatpush1.bf16.msra.mxu0 %v743
        %775 = vmatprep.subr.bf16.mxu0 0
        %776 = vmatpush2.bf16.msra.mxu0 0
        %777 = vmatprep.subr.bf16.mxu0 0
        %778 = vmatpush2.bf16.msra.mxu0 0
        %779 = vmatprep.subr.bf16.mxu0 0
        %780 = vmatpush2.bf16.msra.mxu0 0
        %781 = vmatprep.subr.bf16.mxu0 0
        %782 = vmatpush2.bf16.msra.mxu0 0
        %783 = vmatprep.subr.bf16.mxu0 0
        %784 = vmatpush2.bf16.msra.mxu0 0
        %785 = vmatprep.subr.bf16.mxu0 0
        %786 = vmatpush2.bf16.msra.mxu0 0
        %787 = vmatprep.subr.bf16.mxu0 0
        %788 = vmatpush2.bf16.msra.mxu0 0
        %789 = vmatprep.subr.bf16.mxu0 0
        %790 = vmatpush2.bf16.msra.mxu0 0
        %791 = vmatprep.mubr.bf16.mxu0 0
        %792 = vmatmul.mubr.bf16.gmra.mxu0 %v695
        %v793 = vpop.f32.mrf.mxu0
        %v794 = vadd.f32 0.0, %v793
        %v795 = vpop.f32.mrf.mxu0
        %v796 = vpop.f32.mrf.mxu0
        %v797 = vadd.f32 0.0, %v796
        %v798 = vpop.f32.mrf.mxu0
        %799 = vmatprep.mubr.bf16.mxu0 0
        %800 = vmatmul.mubr.bf16.gmra.mxu0 %v696
        %v801 = vpop.f32.mrf.mxu0
        %v802 = vadd.f32 0.0, %v801
        %v803 = vpop.f32.mrf.mxu0
        %v804 = vpop.f32.mrf.mxu0
        %v805 = vadd.f32 0.0, %v804
        %v806 = vpop.f32.mrf.mxu0
        %807 = vmatprep.mubr.bf16.mxu0 0
        %808 = vmatmul.mubr.bf16.gmra.mxu0 %v697
        %v809 = vpop.f32.mrf.mxu0
        %v810 = vadd.f32 0.0, %v809
        %v811 = vpop.f32.mrf.mxu0
        %v812 = vpop.f32.mrf.mxu0
        %v813 = vadd.f32 0.0, %v812
        %v814 = vpop.f32.mrf.mxu0
        %815 = vmatprep.mubr.bf16.mxu0 0
        %816 = vmatmul.mubr.bf16.gmra.mxu0 %v698
        %v817 = vpop.f32.mrf.mxu0
        %v818 = vadd.f32 0.0, %v817
        %v819 = vpop.f32.mrf.mxu0
        %v820 = vpop.f32.mrf.mxu0
        %v821 = vadd.f32 0.0, %v820
        %v822 = vpop.f32.mrf.mxu0
        %823 = vmatprep.mubr.bf16.mxu0 0
        %824 = vmatmul.mubr.bf16.gmra.mxu0 %v699
        %v825 = vpop.f32.mrf.mxu0
        %v826 = vadd.f32 0.0, %v825
        %v827 = vpop.f32.mrf.mxu0
        %v828 = vpop.f32.mrf.mxu0
        %v829 = vadd.f32 0.0, %v828
        %v830 = vpop.f32.mrf.mxu0
        %831 = vmatprep.mubr.bf16.mxu0 0
        %832 = vmatmul.mubr.bf16.gmra.mxu0 %v700
        %v833 = vpop.f32.mrf.mxu0
        %v834 = vadd.f32 0.0, %v833
        %v835 = vpop.f32.mrf.mxu0
        %v836 = vpop.f32.mrf.mxu0
        %v837 = vadd.f32 0.0, %v836
        %v838 = vpop.f32.mrf.mxu0
        %839 = vmatprep.mubr.bf16.mxu0 0
        %840 = vmatmul.mubr.bf16.gmra.mxu0 %v701
        %v841 = vpop.f32.mrf.mxu0
        %v842 = vadd.f32 0.0, %v841
        %v843 = vpop.f32.mrf.mxu0
        %v844 = vpop.f32.mrf.mxu0
        %v845 = vadd.f32 0.0, %v844
        %v846 = vpop.f32.mrf.mxu0
        %847 = vmatprep.mubr.bf16.mxu0 0
        %848 = vmatmul.mubr.bf16.gmra.mxu0 %v702
        %v849 = vpop.f32.mrf.mxu0
        %v850 = vadd.f32 0.0, %v849
        %v851 = vpop.f32.mrf.mxu0
        %v852 = vpop.f32.mrf.mxu0
        %v853 = vadd.f32 0.0, %v852
        %v854 = vpop.f32.mrf.mxu0
        %855 = vdwg.mxu0
        %v856 = vld [vmem:[#allocation2] sm:$0xff]
        %v857 = vld [vmem:[#allocation2 + $0x8] sm:$0xff]
        %v858 = vld [vmem:[#allocation2 + $0x10] sm:$0xff]
        %v859 = vld [vmem:[#allocation2 + $0x18] sm:$0xff]
        %v860 = vld [vmem:[#allocation2 + $0x20] sm:$0xff]
        %v861 = vld [vmem:[#allocation2 + $0x28] sm:$0xff]
        %v862 = vld [vmem:[#allocation2 + $0x30] sm:$0xff]
        %v863 = vld [vmem:[#allocation2 + $0x38] sm:$0xff]
        %v864 = vld [vmem:[#allocation2 + $0x40] sm:$0xff]
        %v865 = vld [vmem:[#allocation2 + $0x48] sm:$0xff]
        %v866 = vld [vmem:[#allocation2 + $0x50] sm:$0xff]
        %v867 = vld [vmem:[#allocation2 + $0x58] sm:$0xff]
        %v868 = vld [vmem:[#allocation2 + $0x60] sm:$0xff]
        %v869 = vld [vmem:[#allocation2 + $0x68] sm:$0xff]
        %v870 = vld [vmem:[#allocation2 + $0x70] sm:$0xff]
        %v871 = vld [vmem:[#allocation2 + $0x78] sm:$0xff]
        %v872 = vadd.f32 %v856, %v794
        %v873 = vadd.f32 %v857, %v797
        %v874 = vadd.f32 %v858, %v802
        %v875 = vadd.f32 %v859, %v805
        %v876 = vadd.f32 %v860, %v810
        %v877 = vadd.f32 %v861, %v813
        %v878 = vadd.f32 %v862, %v818
        %v879 = vadd.f32 %v863, %v821
        %v880 = vadd.f32 %v864, %v826
        %v881 = vadd.f32 %v865, %v829
        %v882 = vadd.f32 %v866, %v834
        %v883 = vadd.f32 %v867, %v837
        %v884 = vadd.f32 %v868, %v842
        %v885 = vadd.f32 %v869, %v845
        %v886 = vadd.f32 %v870, %v850
        %v887 = vadd.f32 %v871, %v853
        %888 = vst [vmem:[#allocation2] sm:$0xff] %v872
        %889 = vst [vmem:[#allocation2 + $0x8] sm:$0xff] %v873
        %890 = vst [vmem:[#allocation2 + $0x10] sm:$0xff] %v874
        %891 = vst [vmem:[#allocation2 + $0x18] sm:$0xff] %v875
        %892 = vst [vmem:[#allocation2 + $0x20] sm:$0xff] %v876
        %893 = vst [vmem:[#allocation2 + $0x28] sm:$0xff] %v877
        %894 = vst [vmem:[#allocation2 + $0x30] sm:$0xff] %v878
        %895 = vst [vmem:[#allocation2 + $0x38] sm:$0xff] %v879
        %896 = vst [vmem:[#allocation2 + $0x40] sm:$0xff] %v880
        %897 = vst [vmem:[#allocation2 + $0x48] sm:$0xff] %v881
        %898 = vst [vmem:[#allocation2 + $0x50] sm:$0xff] %v882
        %899 = vst [vmem:[#allocation2 + $0x58] sm:$0xff] %v883
        %900 = vst [vmem:[#allocation2 + $0x60] sm:$0xff] %v884
        %901 = vst [vmem:[#allocation2 + $0x68] sm:$0xff] %v885
        %902 = vst [vmem:[#allocation2 + $0x70] sm:$0xff] %v886
        %903 = vst [vmem:[#allocation2 + $0x78] sm:$0xff] %v887
        %v904 = vld [vmem:[%s201] sm:$0xe]
        %v905 = vld [vmem:[%s201 + $0x4] sm:$0xf]
        %v906 = vld [vmem:[%s201 + $0x8] sm:$0x1]
        %v907 = vld [vmem:[%s201 + $0xc] sm:$0xe]
        %v908 = vld [vmem:[%s201 + $0x10] sm:$0xf]
        %v909 = vld [vmem:[%s201 + $0x14] sm:$0x1]
        %v910 = vld [vmem:[%s201 + $0x18] sm:$0xe]
        %v911 = vld [vmem:[%s201 + $0x1c] sm:$0xf]
        %v912 = vld [vmem:[%s201 + $0x20] sm:$0x1]
        %v913 = vld [vmem:[%s201 + $0x24] sm:$0xe]
        %v914 = vld [vmem:[%s201 + $0x28] sm:$0xf]
        %v915 = vld [vmem:[%s201 + $0x2c] sm:$0x1]
        %v916 = vld [vmem:[%s201 + $0x30] sm:$0xe]
        %v917 = vld [vmem:[%s201 + $0x34] sm:$0xf]
        %v918 = vld [vmem:[%s201 + $0x38] sm:$0x1]
        %v919 = vld [vmem:[%s201 + $0x3c] sm:$0xe]
        %v920 = vld [vmem:[%s201 + $0x40] sm:$0xf]
        %v921 = vld [vmem:[%s201 + $0x44] sm:$0x1]
        %v922 = vld [vmem:[%s201 + $0x48] sm:$0xe]
        %v923 = vld [vmem:[%s201 + $0x4c] sm:$0xf]
        %v924 = vld [vmem:[%s201 + $0x50] sm:$0x1]
        %v925 = vld [vmem:[%s201 + $0x54] sm:$0xe]
        %v926 = vld [vmem:[%s201 + $0x58] sm:$0xf]
        %v927 = vld [vmem:[%s201 + $0x5c] sm:$0x1]
        %vm952 = vcmask 1042432
        %vm953 = vcmask 1046532
        %vm954 = vmor %vm952, %vm953
        %v955 = vrot.slane %v904, 5
        %v956 = vrot.slane %v955, 4
        %v957 = vrot.slane %v905, 5
        %v958 = vsel %vm954, %v956, %v957
        %v959 = vrot.slane %v957, 4
        %v960 = vrot.slane %v906, 5
        %v961 = vsel %vm954, %v959, %v960
        %v962 = vrot.slane %v907, 5
        %v963 = vrot.slane %v962, 4
        %v964 = vrot.slane %v908, 5
        %v965 = vsel %vm954, %v963, %v964
        %v966 = vrot.slane %v964, 4
        %v967 = vrot.slane %v909, 5
        %v968 = vsel %vm954, %v966, %v967
        %v969 = vrot.slane %v910, 5
        %v970 = vrot.slane %v969, 4
        %v971 = vrot.slane %v911, 5
        %v972 = vsel %vm954, %v970, %v971
        %v973 = vrot.slane %v971, 4
        %v974 = vrot.slane %v912, 5
        %v975 = vsel %vm954, %v973, %v974
        %v976 = vrot.slane %v913, 5
        %v977 = vrot.slane %v976, 4
        %v978 = vrot.slane %v914, 5
        %v979 = vsel %vm954, %v977, %v978
        %v980 = vrot.slane %v978, 4
        %v981 = vrot.slane %v915, 5
        %v982 = vsel %vm954, %v980, %v981
        %v983 = vrot.slane %v916, 5
        %v984 = vrot.slane %v983, 4
        %v985 = vrot.slane %v917, 5
        %v986 = vsel %vm954, %v984, %v985
        %v987 = vrot.slane %v985, 4
        %v988 = vrot.slane %v918, 5
        %v989 = vsel %vm954, %v987, %v988
        %v990 = vrot.slane %v919, 5
        %v991 = vrot.slane %v990, 4
        %v992 = vrot.slane %v920, 5
        %v993 = vsel %vm954, %v991, %v992
        %v994 = vrot.slane %v992, 4
        %v995 = vrot.slane %v921, 5
        %v996 = vsel %vm954, %v994, %v995
        %v997 = vrot.slane %v922, 5
        %v998 = vrot.slane %v997, 4
        %v999 = vrot.slane %v923, 5
        %v1000 = vsel %vm954, %v998, %v999
        %v1001 = vrot.slane %v999, 4
        %v1002 = vrot.slane %v924, 5
        %v1003 = vsel %vm954, %v1001, %v1002
        %v1004 = vrot.slane %v925, 5
        %v1005 = vrot.slane %v1004, 4
        %v1006 = vrot.slane %v926, 5
        %v1007 = vsel %vm954, %v1005, %v1006
        %v1008 = vrot.slane %v1006, 4
        %v1009 = vrot.slane %v927, 5
        %v1010 = vsel %vm954, %v1008, %v1009
        %s1011 = scalar_lea.vmem %s165, 128 [#allocation3]
        %v1012 = vld [vmem:[%s1011] sm:$0xf]
        %v1013 = vld [vmem:[%s1011 + $0x4] sm:$0xf]
        %v1014 = vld [vmem:[%s1011 + $0x8] sm:$0xf]
        %v1015 = vld [vmem:[%s1011 + $0xc] sm:$0xf]
        %v1016 = vld [vmem:[%s1011 + $0x10] sm:$0xf]
        %v1017 = vld [vmem:[%s1011 + $0x14] sm:$0xf]
        %v1018 = vld [vmem:[%s1011 + $0x18] sm:$0xf]
        %v1019 = vld [vmem:[%s1011 + $0x1c] sm:$0xf]
        %v1020 = vld [vmem:[%s1011 + $0x20] sm:$0xf]
        %v1021 = vld [vmem:[%s1011 + $0x24] sm:$0xf]
        %v1022 = vld [vmem:[%s1011 + $0x28] sm:$0xf]
        %v1023 = vld [vmem:[%s1011 + $0x2c] sm:$0xf]
        %v1024 = vld [vmem:[%s1011 + $0x30] sm:$0xf]
        %v1025 = vld [vmem:[%s1011 + $0x34] sm:$0xf]
        %v1026 = vld [vmem:[%s1011 + $0x38] sm:$0xf]
        %v1027 = vld [vmem:[%s1011 + $0x3c] sm:$0xf]
        %v1028 = vunpack.c.l.b16 %v958
        %v1029 = vunpack.c.l.b16 %v961
        %v1030 = vunpack.c.l.b16 %v965
        %v1031 = vunpack.c.l.b16 %v968
        %v1032 = vunpack.c.l.b16 %v972
        %v1033 = vunpack.c.l.b16 %v975
        %v1034 = vunpack.c.l.b16 %v979
        %v1035 = vunpack.c.l.b16 %v982
        %v1036 = vunpack.c.l.b16 %v986
        %v1037 = vunpack.c.l.b16 %v989
        %v1038 = vunpack.c.l.b16 %v993
        %v1039 = vunpack.c.l.b16 %v996
        %v1040 = vunpack.c.l.b16 %v1000
        %v1041 = vunpack.c.l.b16 %v1003
        %v1042 = vunpack.c.l.b16 %v1007
        %v1043 = vunpack.c.l.b16 %v1010
        %v1044 = vpack.c.b16 %v1029, %v1028
        %v1045 = vpack.c.b16 %v1031, %v1030
        %v1046 = vpack.c.b16 %v1033, %v1032
        %v1047 = vpack.c.b16 %v1035, %v1034
        %v1048 = vpack.c.b16 %v1037, %v1036
        %v1049 = vpack.c.b16 %v1039, %v1038
        %v1050 = vpack.c.b16 %v1041, %v1040
        %v1051 = vpack.c.b16 %v1043, %v1042
        %v1076 = vunpack.c.l.b16 %v1012
        %v1077 = vunpack.c.l.b16 %v1013
        %v1078 = vunpack.c.l.b16 %v1014
        %v1079 = vunpack.c.l.b16 %v1015
        %v1080 = vunpack.c.l.b16 %v1016
        %v1081 = vunpack.c.l.b16 %v1017
        %v1082 = vunpack.c.l.b16 %v1018
        %v1083 = vunpack.c.l.b16 %v1019
        %v1084 = vunpack.c.l.b16 %v1020
        %v1085 = vunpack.c.l.b16 %v1021
        %v1086 = vunpack.c.l.b16 %v1022
        %v1087 = vunpack.c.l.b16 %v1023
        %v1088 = vunpack.c.l.b16 %v1024
        %v1089 = vunpack.c.l.b16 %v1025
        %v1090 = vunpack.c.l.b16 %v1026
        %v1091 = vunpack.c.l.b16 %v1027
        %v1092 = vpack.c.b16 %v1077, %v1076
        %v1093 = vpack.c.b16 %v1079, %v1078
        %v1094 = vpack.c.b16 %v1081, %v1080
        %v1095 = vpack.c.b16 %v1083, %v1082
        %v1096 = vpack.c.b16 %v1085, %v1084
        %v1097 = vpack.c.b16 %v1087, %v1086
        %v1098 = vpack.c.b16 %v1089, %v1088
        %v1099 = vpack.c.b16 %v1091, %v1090
        %1108 = vmatprep.subr.bf16.mxu0 0
        %1109 = vmatpush1.bf16.msra.mxu0 %v1099
        %1110 = vmatprep.subr.bf16.mxu0 0
        %1111 = vmatpush1.bf16.msra.mxu0 %v1098
        %1112 = vmatprep.subr.bf16.mxu0 0
        %1113 = vmatpush1.bf16.msra.mxu0 %v1097
        %1114 = vmatprep.subr.bf16.mxu0 0
        %1115 = vmatpush1.bf16.msra.mxu0 %v1096
        %1116 = vmatprep.subr.bf16.mxu0 0
        %1117 = vmatpush1.bf16.msra.mxu0 %v1095
        %1118 = vmatprep.subr.bf16.mxu0 0
        %1119 = vmatpush1.bf16.msra.mxu0 %v1094
        %1120 = vmatprep.subr.bf16.mxu0 0
        %1121 = vmatpush1.bf16.msra.mxu0 %v1093
        %1122 = vmatprep.subr.bf16.mxu0 0
        %1123 = vmatpush1.bf16.msra.mxu0 %v1092
        %1124 = vmatprep.subr.bf16.mxu0 0
        %1125 = vmatpush2.bf16.msra.mxu0 0
        %1126 = vmatprep.subr.bf16.mxu0 0
        %1127 = vmatpush2.bf16.msra.mxu0 0
        %1128 = vmatprep.subr.bf16.mxu0 0
        %1129 = vmatpush2.bf16.msra.mxu0 0
        %1130 = vmatprep.subr.bf16.mxu0 0
        %1131 = vmatpush2.bf16.msra.mxu0 0
        %1132 = vmatprep.subr.bf16.mxu0 0
        %1133 = vmatpush2.bf16.msra.mxu0 0
        %1134 = vmatprep.subr.bf16.mxu0 0
        %1135 = vmatpush2.bf16.msra.mxu0 0
        %1136 = vmatprep.subr.bf16.mxu0 0
        %1137 = vmatpush2.bf16.msra.mxu0 0
        %1138 = vmatprep.subr.bf16.mxu0 0
        %1139 = vmatpush2.bf16.msra.mxu0 0
        %1140 = vmatprep.mubr.bf16.mxu0 0
        %1141 = vmatmul.mubr.bf16.gmra.mxu0 %v1044
        %v1142 = vpop.f32.mrf.mxu0
        %v1143 = vadd.f32 0.0, %v1142
        %v1144 = vpop.f32.mrf.mxu0
        %v1145 = vpop.f32.mrf.mxu0
        %v1146 = vadd.f32 0.0, %v1145
        %v1147 = vpop.f32.mrf.mxu0
        %1148 = vmatprep.mubr.bf16.mxu0 0
        %1149 = vmatmul.mubr.bf16.gmra.mxu0 %v1045
        %v1150 = vpop.f32.mrf.mxu0
        %v1151 = vadd.f32 0.0, %v1150
        %v1152 = vpop.f32.mrf.mxu0
        %v1153 = vpop.f32.mrf.mxu0
        %v1154 = vadd.f32 0.0, %v1153
        %v1155 = vpop.f32.mrf.mxu0
        %1156 = vmatprep.mubr.bf16.mxu0 0
        %1157 = vmatmul.mubr.bf16.gmra.mxu0 %v1046
        %v1158 = vpop.f32.mrf.mxu0
        %v1159 = vadd.f32 0.0, %v1158
        %v1160 = vpop.f32.mrf.mxu0
        %v1161 = vpop.f32.mrf.mxu0
        %v1162 = vadd.f32 0.0, %v1161
        %v1163 = vpop.f32.mrf.mxu0
        %1164 = vmatprep.mubr.bf16.mxu0 0
        %1165 = vmatmul.mubr.bf16.gmra.mxu0 %v1047
        %v1166 = vpop.f32.mrf.mxu0
        %v1167 = vadd.f32 0.0, %v1166
        %v1168 = vpop.f32.mrf.mxu0
        %v1169 = vpop.f32.mrf.mxu0
        %v1170 = vadd.f32 0.0, %v1169
        %v1171 = vpop.f32.mrf.mxu0
        %1172 = vmatprep.mubr.bf16.mxu0 0
        %1173 = vmatmul.mubr.bf16.gmra.mxu0 %v1048
        %v1174 = vpop.f32.mrf.mxu0
        %v1175 = vadd.f32 0.0, %v1174
        %v1176 = vpop.f32.mrf.mxu0
        %v1177 = vpop.f32.mrf.mxu0
        %v1178 = vadd.f32 0.0, %v1177
        %v1179 = vpop.f32.mrf.mxu0
        %1180 = vmatprep.mubr.bf16.mxu0 0
        %1181 = vmatmul.mubr.bf16.gmra.mxu0 %v1049
        %v1182 = vpop.f32.mrf.mxu0
        %v1183 = vadd.f32 0.0, %v1182
        %v1184 = vpop.f32.mrf.mxu0
        %v1185 = vpop.f32.mrf.mxu0
        %v1186 = vadd.f32 0.0, %v1185
        %v1187 = vpop.f32.mrf.mxu0
        %1188 = vmatprep.mubr.bf16.mxu0 0
        %1189 = vmatmul.mubr.bf16.gmra.mxu0 %v1050
        %v1190 = vpop.f32.mrf.mxu0
        %v1191 = vadd.f32 0.0, %v1190
        %v1192 = vpop.f32.mrf.mxu0
        %v1193 = vpop.f32.mrf.mxu0
        %v1194 = vadd.f32 0.0, %v1193
        %v1195 = vpop.f32.mrf.mxu0
        %1196 = vmatprep.mubr.bf16.mxu0 0
        %1197 = vmatmul.mubr.bf16.gmra.mxu0 %v1051
        %v1198 = vpop.f32.mrf.mxu0
        %v1199 = vadd.f32 0.0, %v1198
        %v1200 = vpop.f32.mrf.mxu0
        %v1201 = vpop.f32.mrf.mxu0
        %v1202 = vadd.f32 0.0, %v1201
        %v1203 = vpop.f32.mrf.mxu0
        %1204 = vdwg.mxu0
        %v1205 = vld [vmem:[#allocation2] sm:$0xff]
        %v1206 = vld [vmem:[#allocation2 + $0x8] sm:$0xff]
        %v1207 = vld [vmem:[#allocation2 + $0x10] sm:$0xff]
        %v1208 = vld [vmem:[#allocation2 + $0x18] sm:$0xff]
        %v1209 = vld [vmem:[#allocation2 + $0x20] sm:$0xff]
        %v1210 = vld [vmem:[#allocation2 + $0x28] sm:$0xff]
        %v1211 = vld [vmem:[#allocation2 + $0x30] sm:$0xff]
        %v1212 = vld [vmem:[#allocation2 + $0x38] sm:$0xff]
        %v1213 = vld [vmem:[#allocation2 + $0x40] sm:$0xff]
        %v1214 = vld [vmem:[#allocation2 + $0x48] sm:$0xff]
        %v1215 = vld [vmem:[#allocation2 + $0x50] sm:$0xff]
        %v1216 = vld [vmem:[#allocation2 + $0x58] sm:$0xff]
        %v1217 = vld [vmem:[#allocation2 + $0x60] sm:$0xff]
        %v1218 = vld [vmem:[#allocation2 + $0x68] sm:$0xff]
        %v1219 = vld [vmem:[#allocation2 + $0x70] sm:$0xff]
        %v1220 = vld [vmem:[#allocation2 + $0x78] sm:$0xff]
        %v1221 = vadd.f32 %v1205, %v1143
        %v1222 = vadd.f32 %v1206, %v1146
        %v1223 = vadd.f32 %v1207, %v1151
        %v1224 = vadd.f32 %v1208, %v1154
        %v1225 = vadd.f32 %v1209, %v1159
        %v1226 = vadd.f32 %v1210, %v1162
        %v1227 = vadd.f32 %v1211, %v1167
        %v1228 = vadd.f32 %v1212, %v1170
        %v1229 = vadd.f32 %v1213, %v1175
        %v1230 = vadd.f32 %v1214, %v1178
        %v1231 = vadd.f32 %v1215, %v1183
        %v1232 = vadd.f32 %v1216, %v1186
        %v1233 = vadd.f32 %v1217, %v1191
        %v1234 = vadd.f32 %v1218, %v1194
        %v1235 = vadd.f32 %v1219, %v1199
        %v1236 = vadd.f32 %v1220, %v1202
        %1237 = vst [vmem:[#allocation2] sm:$0xff] %v1221
        %1238 = vst [vmem:[#allocation2 + $0x8] sm:$0xff] %v1222
        %1239 = vst [vmem:[#allocation2 + $0x10] sm:$0xff] %v1223
        %1240 = vst [vmem:[#allocation2 + $0x18] sm:$0xff] %v1224
        %1241 = vst [vmem:[#allocation2 + $0x20] sm:$0xff] %v1225
        %1242 = vst [vmem:[#allocation2 + $0x28] sm:$0xff] %v1226
        %1243 = vst [vmem:[#allocation2 + $0x30] sm:$0xff] %v1227
        %1244 = vst [vmem:[#allocation2 + $0x38] sm:$0xff] %v1228
        %1245 = vst [vmem:[#allocation2 + $0x40] sm:$0xff] %v1229
        %1246 = vst [vmem:[#allocation2 + $0x48] sm:$0xff] %v1230
        %1247 = vst [vmem:[#allocation2 + $0x50] sm:$0xff] %v1231
        %1248 = vst [vmem:[#allocation2 + $0x58] sm:$0xff] %v1232
        %1249 = vst [vmem:[#allocation2 + $0x60] sm:$0xff] %v1233
        %1250 = vst [vmem:[#allocation2 + $0x68] sm:$0xff] %v1234
        %1251 = vst [vmem:[#allocation2 + $0x70] sm:$0xff] %v1235
        %1252 = vst [vmem:[#allocation2 + $0x78] sm:$0xff] %v1236
        %s1253 = sadd.s32 %s198, 1
        %s1254 = smul.u32 %s1253, 3
        %s1255 = smul.addr %s1254, 4
        %s1256 = scalar_lea.vmem %s195, %s1255
        %v1257 = vld [vmem:[%s1256] sm:$0xf]
        %v1258 = vld [vmem:[%s1256 + $0x4] sm:$0xf]
        %v1259 = vld [vmem:[%s1256 + $0xc] sm:$0xf]
        %v1260 = vld [vmem:[%s1256 + $0x10] sm:$0xf]
        %v1261 = vld [vmem:[%s1256 + $0x18] sm:$0xf]
        %v1262 = vld [vmem:[%s1256 + $0x1c] sm:$0xf]
        %v1263 = vld [vmem:[%s1256 + $0x24] sm:$0xf]
        %v1264 = vld [vmem:[%s1256 + $0x28] sm:$0xf]
        %v1265 = vld [vmem:[%s1256 + $0x30] sm:$0xf]
        %v1266 = vld [vmem:[%s1256 + $0x34] sm:$0xf]
        %v1267 = vld [vmem:[%s1256 + $0x3c] sm:$0xf]
        %v1268 = vld [vmem:[%s1256 + $0x40] sm:$0xf]
        %v1269 = vld [vmem:[%s1256 + $0x48] sm:$0xf]
        %v1270 = vld [vmem:[%s1256 + $0x4c] sm:$0xf]
        %v1271 = vld [vmem:[%s1256 + $0x54] sm:$0xf]
        %v1272 = vld [vmem:[%s1256 + $0x58] sm:$0xf]
        %s1273 = scalar_lea.vmem %s165, 192 [#allocation3]
        %v1274 = vld [vmem:[%s1273] sm:$0xf]
        %v1275 = vld [vmem:[%s1273 + $0x4] sm:$0xf]
        %v1276 = vld [vmem:[%s1273 + $0x8] sm:$0xf]
        %v1277 = vld [vmem:[%s1273 + $0xc] sm:$0xf]
        %v1278 = vld [vmem:[%s1273 + $0x10] sm:$0xf]
        %v1279 = vld [vmem:[%s1273 + $0x14] sm:$0xf]
        %v1280 = vld [vmem:[%s1273 + $0x18] sm:$0xf]
        %v1281 = vld [vmem:[%s1273 + $0x1c] sm:$0xf]
        %v1282 = vld [vmem:[%s1273 + $0x20] sm:$0xf]
        %v1283 = vld [vmem:[%s1273 + $0x24] sm:$0xf]
        %v1284 = vld [vmem:[%s1273 + $0x28] sm:$0xf]
        %v1285 = vld [vmem:[%s1273 + $0x2c] sm:$0xf]
        %v1286 = vld [vmem:[%s1273 + $0x30] sm:$0xf]
        %v1287 = vld [vmem:[%s1273 + $0x34] sm:$0xf]
        %v1288 = vld [vmem:[%s1273 + $0x38] sm:$0xf]
        %v1289 = vld [vmem:[%s1273 + $0x3c] sm:$0xf]
        %v1306 = vunpack.c.l.b16 %v1257
        %v1307 = vunpack.c.l.b16 %v1258
        %v1308 = vunpack.c.l.b16 %v1259
        %v1309 = vunpack.c.l.b16 %v1260
        %v1310 = vunpack.c.l.b16 %v1261
        %v1311 = vunpack.c.l.b16 %v1262
        %v1312 = vunpack.c.l.b16 %v1263
        %v1313 = vunpack.c.l.b16 %v1264
        %v1314 = vunpack.c.l.b16 %v1265
        %v1315 = vunpack.c.l.b16 %v1266
        %v1316 = vunpack.c.l.b16 %v1267
        %v1317 = vunpack.c.l.b16 %v1268
        %v1318 = vunpack.c.l.b16 %v1269
        %v1319 = vunpack.c.l.b16 %v1270
        %v1320 = vunpack.c.l.b16 %v1271
        %v1321 = vunpack.c.l.b16 %v1272
        %v1322 = vpack.c.b16 %v1307, %v1306
        %v1323 = vpack.c.b16 %v1309, %v1308
        %v1324 = vpack.c.b16 %v1311, %v1310
        %v1325 = vpack.c.b16 %v1313, %v1312
        %v1326 = vpack.c.b16 %v1315, %v1314
        %v1327 = vpack.c.b16 %v1317, %v1316
        %v1328 = vpack.c.b16 %v1319, %v1318
        %v1329 = vpack.c.b16 %v1321, %v1320
        %v1354 = vunpack.c.l.b16 %v1274
        %v1355 = vunpack.c.l.b16 %v1275
        %v1356 = vunpack.c.l.b16 %v1276
        %v1357 = vunpack.c.l.b16 %v1277
        %v1358 = vunpack.c.l.b16 %v1278
        %v1359 = vunpack.c.l.b16 %v1279
        %v1360 = vunpack.c.l.b16 %v1280
        %v1361 = vunpack.c.l.b16 %v1281
        %v1362 = vunpack.c.l.b16 %v1282
        %v1363 = vunpack.c.l.b16 %v1283
        %v1364 = vunpack.c.l.b16 %v1284
        %v1365 = vunpack.c.l.b16 %v1285
        %v1366 = vunpack.c.l.b16 %v1286
        %v1367 = vunpack.c.l.b16 %v1287
        %v1368 = vunpack.c.l.b16 %v1288
        %v1369 = vunpack.c.l.b16 %v1289
        %v1370 = vpack.c.b16 %v1355, %v1354
        %v1371 = vpack.c.b16 %v1357, %v1356
        %v1372 = vpack.c.b16 %v1359, %v1358
        %v1373 = vpack.c.b16 %v1361, %v1360
        %v1374 = vpack.c.b16 %v1363, %v1362
        %v1375 = vpack.c.b16 %v1365, %v1364
        %v1376 = vpack.c.b16 %v1367, %v1366
        %v1377 = vpack.c.b16 %v1369, %v1368
        %1386 = vmatprep.subr.bf16.mxu0 0
        %1387 = vmatpush1.bf16.msra.mxu0 %v1377
        %1388 = vmatprep.subr.bf16.mxu0 0
        %1389 = vmatpush1.bf16.msra.mxu0 %v1376
        %1390 = vmatprep.subr.bf16.mxu0 0
        %1391 = vmatpush1.bf16.msra.mxu0 %v1375
        %1392 = vmatprep.subr.bf16.mxu0 0
        %1393 = vmatpush1.bf16.msra.mxu0 %v1374
        %1394 = vmatprep.subr.bf16.mxu0 0
        %1395 = vmatpush1.bf16.msra.mxu0 %v1373
        %1396 = vmatprep.subr.bf16.mxu0 0
        %1397 = vmatpush1.bf16.msra.mxu0 %v1372
        %1398 = vmatprep.subr.bf16.mxu0 0
        %1399 = vmatpush1.bf16.msra.mxu0 %v1371
        %1400 = vmatprep.subr.bf16.mxu0 0
        %1401 = vmatpush1.bf16.msra.mxu0 %v1370
        %1402 = vmatprep.subr.bf16.mxu0 0
        %1403 = vmatpush2.bf16.msra.mxu0 0
        %1404 = vmatprep.subr.bf16.mxu0 0
        %1405 = vmatpush2.bf16.msra.mxu0 0
        %1406 = vmatprep.subr.bf16.mxu0 0
        %1407 = vmatpush2.bf16.msra.mxu0 0
        %1408 = vmatprep.subr.bf16.mxu0 0
        %1409 = vmatpush2.bf16.msra.mxu0 0
        %1410 = vmatprep.subr.bf16.mxu0 0
        %1411 = vmatpush2.bf16.msra.mxu0 0
        %1412 = vmatprep.subr.bf16.mxu0 0
        %1413 = vmatpush2.bf16.msra.mxu0 0
        %1414 = vmatprep.subr.bf16.mxu0 0
        %1415 = vmatpush2.bf16.msra.mxu0 0
        %1416 = vmatprep.subr.bf16.mxu0 0
        %1417 = vmatpush2.bf16.msra.mxu0 0
        %1418 = vmatprep.mubr.bf16.mxu0 0
        %1419 = vmatmul.mubr.bf16.gmra.mxu0 %v1322
        %v1420 = vpop.f32.mrf.mxu0
        %v1421 = vadd.f32 0.0, %v1420
        %v1422 = vpop.f32.mrf.mxu0
        %v1423 = vpop.f32.mrf.mxu0
        %v1424 = vadd.f32 0.0, %v1423
        %v1425 = vpop.f32.mrf.mxu0
        %1426 = vmatprep.mubr.bf16.mxu0 0
        %1427 = vmatmul.mubr.bf16.gmra.mxu0 %v1323
        %v1428 = vpop.f32.mrf.mxu0
        %v1429 = vadd.f32 0.0, %v1428
        %v1430 = vpop.f32.mrf.mxu0
        %v1431 = vpop.f32.mrf.mxu0
        %v1432 = vadd.f32 0.0, %v1431
        %v1433 = vpop.f32.mrf.mxu0
        %1434 = vmatprep.mubr.bf16.mxu0 0
        %1435 = vmatmul.mubr.bf16.gmra.mxu0 %v1324
        %v1436 = vpop.f32.mrf.mxu0
        %v1437 = vadd.f32 0.0, %v1436
        %v1438 = vpop.f32.mrf.mxu0
        %v1439 = vpop.f32.mrf.mxu0
        %v1440 = vadd.f32 0.0, %v1439
        %v1441 = vpop.f32.mrf.mxu0
        %1442 = vmatprep.mubr.bf16.mxu0 0
        %1443 = vmatmul.mubr.bf16.gmra.mxu0 %v1325
        %v1444 = vpop.f32.mrf.mxu0
        %v1445 = vadd.f32 0.0, %v1444
        %v1446 = vpop.f32.mrf.mxu0
        %v1447 = vpop.f32.mrf.mxu0
        %v1448 = vadd.f32 0.0, %v1447
        %v1449 = vpop.f32.mrf.mxu0
        %1450 = vmatprep.mubr.bf16.mxu0 0
        %1451 = vmatmul.mubr.bf16.gmra.mxu0 %v1326
        %v1452 = vpop.f32.mrf.mxu0
        %v1453 = vadd.f32 0.0, %v1452
        %v1454 = vpop.f32.mrf.mxu0
        %v1455 = vpop.f32.mrf.mxu0
        %v1456 = vadd.f32 0.0, %v1455
        %v1457 = vpop.f32.mrf.mxu0
        %1458 = vmatprep.mubr.bf16.mxu0 0
        %1459 = vmatmul.mubr.bf16.gmra.mxu0 %v1327
        %v1460 = vpop.f32.mrf.mxu0
        %v1461 = vadd.f32 0.0, %v1460
        %v1462 = vpop.f32.mrf.mxu0
        %v1463 = vpop.f32.mrf.mxu0
        %v1464 = vadd.f32 0.0, %v1463
        %v1465 = vpop.f32.mrf.mxu0
        %1466 = vmatprep.mubr.bf16.mxu0 0
        %1467 = vmatmul.mubr.bf16.gmra.mxu0 %v1328
        %v1468 = vpop.f32.mrf.mxu0
        %v1469 = vadd.f32 0.0, %v1468
        %v1470 = vpop.f32.mrf.mxu0
        %v1471 = vpop.f32.mrf.mxu0
        %v1472 = vadd.f32 0.0, %v1471
        %v1473 = vpop.f32.mrf.mxu0
        %1474 = vmatprep.mubr.bf16.mxu0 0
        %1475 = vmatmul.mubr.bf16.gmra.mxu0 %v1329
        %v1476 = vpop.f32.mrf.mxu0
        %v1477 = vadd.f32 0.0, %v1476
        %v1478 = vpop.f32.mrf.mxu0
        %v1479 = vpop.f32.mrf.mxu0
        %v1480 = vadd.f32 0.0, %v1479
        %v1481 = vpop.f32.mrf.mxu0
        %1482 = vdwg.mxu0
        %v1483 = vld [vmem:[#allocation2] sm:$0xff]
        %v1484 = vld [vmem:[#allocation2 + $0x8] sm:$0xff]
        %v1485 = vld [vmem:[#allocation2 + $0x10] sm:$0xff]
        %v1486 = vld [vmem:[#allocation2 + $0x18] sm:$0xff]
        %v1487 = vld [vmem:[#allocation2 + $0x20] sm:$0xff]
        %v1488 = vld [vmem:[#allocation2 + $0x28] sm:$0xff]
        %v1489 = vld [vmem:[#allocation2 + $0x30] sm:$0xff]
        %v1490 = vld [vmem:[#allocation2 + $0x38] sm:$0xff]
        %v1491 = vld [vmem:[#allocation2 + $0x40] sm:$0xff]
        %v1492 = vld [vmem:[#allocation2 + $0x48] sm:$0xff]
        %v1493 = vld [vmem:[#allocation2 + $0x50] sm:$0xff]
        %v1494 = vld [vmem:[#allocation2 + $0x58] sm:$0xff]
        %v1495 = vld [vmem:[#allocation2 + $0x60] sm:$0xff]
        %v1496 = vld [vmem:[#allocation2 + $0x68] sm:$0xff]
        %v1497 = vld [vmem:[#allocation2 + $0x70] sm:$0xff]
        %v1498 = vld [vmem:[#allocation2 + $0x78] sm:$0xff]
        %v1499 = vadd.f32 %v1483, %v1421
        %v1500 = vadd.f32 %v1484, %v1424
        %v1501 = vadd.f32 %v1485, %v1429
        %v1502 = vadd.f32 %v1486, %v1432
        %v1503 = vadd.f32 %v1487, %v1437
        %v1504 = vadd.f32 %v1488, %v1440
        %v1505 = vadd.f32 %v1489, %v1445
        %v1506 = vadd.f32 %v1490, %v1448
        %v1507 = vadd.f32 %v1491, %v1453
        %v1508 = vadd.f32 %v1492, %v1456
        %v1509 = vadd.f32 %v1493, %v1461
        %v1510 = vadd.f32 %v1494, %v1464
        %v1511 = vadd.f32 %v1495, %v1469
        %v1512 = vadd.f32 %v1496, %v1472
        %v1513 = vadd.f32 %v1497, %v1477
        %v1514 = vadd.f32 %v1498, %v1480
        %1515 = vst [vmem:[#allocation2] sm:$0xff] %v1499
        %1516 = vst [vmem:[#allocation2 + $0x8] sm:$0xff] %v1500
        %1517 = vst [vmem:[#allocation2 + $0x10] sm:$0xff] %v1501
        %1518 = vst [vmem:[#allocation2 + $0x18] sm:$0xff] %v1502
        %1519 = vst [vmem:[#allocation2 + $0x20] sm:$0xff] %v1503
        %1520 = vst [vmem:[#allocation2 + $0x28] sm:$0xff] %v1504
        %1521 = vst [vmem:[#allocation2 + $0x30] sm:$0xff] %v1505
        %1522 = vst [vmem:[#allocation2 + $0x38] sm:$0xff] %v1506
        %1523 = vst [vmem:[#allocation2 + $0x40] sm:$0xff] %v1507
        %1524 = vst [vmem:[#allocation2 + $0x48] sm:$0xff] %v1508
        %1525 = vst [vmem:[#allocation2 + $0x50] sm:$0xff] %v1509
        %1526 = vst [vmem:[#allocation2 + $0x58] sm:$0xff] %v1510
        %1527 = vst [vmem:[#allocation2 + $0x60] sm:$0xff] %v1511
        %1528 = vst [vmem:[#allocation2 + $0x68] sm:$0xff] %v1512
        %1529 = vst [vmem:[#allocation2 + $0x70] sm:$0xff] %v1513
        %1530 = vst [vmem:[#allocation2 + $0x78] sm:$0xff] %v1514
        %v1531 = vld [vmem:[%s1256] sm:$0xf]
        %v1532 = vld [vmem:[%s1256 + $0x4] sm:$0xf]
        %v1533 = vld [vmem:[%s1256 + $0x8] sm:$0x1]
        %v1534 = vld [vmem:[%s1256 + $0xc] sm:$0xf]
        %v1535 = vld [vmem:[%s1256 + $0x10] sm:$0xf]
        %v1536 = vld [vmem:[%s1256 + $0x14] sm:$0x1]
        %v1537 = vld [vmem:[%s1256 + $0x18] sm:$0xf]
        %v1538 = vld [vmem:[%s1256 + $0x1c] sm:$0xf]
        %v1539 = vld [vmem:[%s1256 + $0x20] sm:$0x1]
        %v1540 = vld [vmem:[%s1256 + $0x24] sm:$0xf]
        %v1541 = vld [vmem:[%s1256 + $0x28] sm:$0xf]
        %v1542 = vld [vmem:[%s1256 + $0x2c] sm:$0x1]
        %v1543 = vld [vmem:[%s1256 + $0x30] sm:$0xf]
        %v1544 = vld [vmem:[%s1256 + $0x34] sm:$0xf]
        %v1545 = vld [vmem:[%s1256 + $0x38] sm:$0x1]
        %v1546 = vld [vmem:[%s1256 + $0x3c] sm:$0xf]
        %v1547 = vld [vmem:[%s1256 + $0x40] sm:$0xf]
        %v1548 = vld [vmem:[%s1256 + $0x44] sm:$0x1]
        %v1549 = vld [vmem:[%s1256 + $0x48] sm:$0xf]
        %v1550 = vld [vmem:[%s1256 + $0x4c] sm:$0xf]
        %v1551 = vld [vmem:[%s1256 + $0x50] sm:$0x1]
        %v1552 = vld [vmem:[%s1256 + $0x54] sm:$0xf]
        %v1553 = vld [vmem:[%s1256 + $0x58] sm:$0xf]
        %v1554 = vld [vmem:[%s1256 + $0x5c] sm:$0x1]
        %v1556 = vshrl.u32 %v1531, 16
        %v1558 = vrot.slane %v1556, 4
        %v1559 = vshll.u32 %v1531, 16
        %v1561 = vrot.slane %v1559, 5
        %v1562 = vor.u32 %v1558, %v1561
        %v1563 = vrot.slane %v1562, 4
        %v1565 = vshll.u32 %v1532, 16
        %v1567 = vrot.slane %v1565, 5
        %v1568 = vsel %vm469, %v1563, %v1567
        %v1569 = vshrl.u32 %v1532, 16
        %v1571 = vrot.slane %v1569, 4
        %v1572 = vor.u32 %v1571, %v1567
        %v1573 = vrot.slane %v1572, 4
        %v1575 = vshll.u32 %v1533, 16
        %v1577 = vrot.slane %v1575, 5
        %v1578 = vsel %vm469, %v1573, %v1577
        %v1580 = vshrl.u32 %v1534, 16
        %v1582 = vrot.slane %v1580, 4
        %v1583 = vshll.u32 %v1534, 16
        %v1585 = vrot.slane %v1583, 5
        %v1586 = vor.u32 %v1582, %v1585
        %v1587 = vrot.slane %v1586, 4
        %v1589 = vshll.u32 %v1535, 16
        %v1591 = vrot.slane %v1589, 5
        %v1592 = vsel %vm469, %v1587, %v1591
        %v1593 = vshrl.u32 %v1535, 16
        %v1595 = vrot.slane %v1593, 4
        %v1596 = vor.u32 %v1595, %v1591
        %v1597 = vrot.slane %v1596, 4
        %v1599 = vshll.u32 %v1536, 16
        %v1601 = vrot.slane %v1599, 5
        %v1602 = vsel %vm469, %v1597, %v1601
        %v1604 = vshrl.u32 %v1537, 16
        %v1606 = vrot.slane %v1604, 4
        %v1607 = vshll.u32 %v1537, 16
        %v1609 = vrot.slane %v1607, 5
        %v1610 = vor.u32 %v1606, %v1609
        %v1611 = vrot.slane %v1610, 4
        %v1613 = vshll.u32 %v1538, 16
        %v1615 = vrot.slane %v1613, 5
        %v1616 = vsel %vm469, %v1611, %v1615
        %v1617 = vshrl.u32 %v1538, 16
        %v1619 = vrot.slane %v1617, 4
        %v1620 = vor.u32 %v1619, %v1615
        %v1621 = vrot.slane %v1620, 4
        %v1623 = vshll.u32 %v1539, 16
        %v1625 = vrot.slane %v1623, 5
        %v1626 = vsel %vm469, %v1621, %v1625
        %v1628 = vshrl.u32 %v1540, 16
        %v1630 = vrot.slane %v1628, 4
        %v1631 = vshll.u32 %v1540, 16
        %v1633 = vrot.slane %v1631, 5
        %v1634 = vor.u32 %v1630, %v1633
        %v1635 = vrot.slane %v1634, 4
        %v1637 = vshll.u32 %v1541, 16
        %v1639 = vrot.slane %v1637, 5
        %v1640 = vsel %vm469, %v1635, %v1639
        %v1641 = vshrl.u32 %v1541, 16
        %v1643 = vrot.slane %v1641, 4
        %v1644 = vor.u32 %v1643, %v1639
        %v1645 = vrot.slane %v1644, 4
        %v1647 = vshll.u32 %v1542, 16
        %v1649 = vrot.slane %v1647, 5
        %v1650 = vsel %vm469, %v1645, %v1649
        %v1652 = vshrl.u32 %v1543, 16
        %v1654 = vrot.slane %v1652, 4
        %v1655 = vshll.u32 %v1543, 16
        %v1657 = vrot.slane %v1655, 5
        %v1658 = vor.u32 %v1654, %v1657
        %v1659 = vrot.slane %v1658, 4
        %v1661 = vshll.u32 %v1544, 16
        %v1663 = vrot.slane %v1661, 5
        %v1664 = vsel %vm469, %v1659, %v1663
        %v1665 = vshrl.u32 %v1544, 16
        %v1667 = vrot.slane %v1665, 4
        %v1668 = vor.u32 %v1667, %v1663
        %v1669 = vrot.slane %v1668, 4
        %v1671 = vshll.u32 %v1545, 16
        %v1673 = vrot.slane %v1671, 5
        %v1674 = vsel %vm469, %v1669, %v1673
        %v1676 = vshrl.u32 %v1546, 16
        %v1678 = vrot.slane %v1676, 4
        %v1679 = vshll.u32 %v1546, 16
        %v1681 = vrot.slane %v1679, 5
        %v1682 = vor.u32 %v1678, %v1681
        %v1683 = vrot.slane %v1682, 4
        %v1685 = vshll.u32 %v1547, 16
        %v1687 = vrot.slane %v1685, 5
        %v1688 = vsel %vm469, %v1683, %v1687
        %v1689 = vshrl.u32 %v1547, 16
        %v1691 = vrot.slane %v1689, 4
        %v1692 = vor.u32 %v1691, %v1687
        %v1693 = vrot.slane %v1692, 4
        %v1695 = vshll.u32 %v1548, 16
        %v1697 = vrot.slane %v1695, 5
        %v1698 = vsel %vm469, %v1693, %v1697
        %v1700 = vshrl.u32 %v1549, 16
        %v1702 = vrot.slane %v1700, 4
        %v1703 = vshll.u32 %v1549, 16
        %v1705 = vrot.slane %v1703, 5
        %v1706 = vor.u32 %v1702, %v1705
        %v1707 = vrot.slane %v1706, 4
        %v1709 = vshll.u32 %v1550, 16
        %v1711 = vrot.slane %v1709, 5
        %v1712 = vsel %vm469, %v1707, %v1711
        %v1713 = vshrl.u32 %v1550, 16
        %v1715 = vrot.slane %v1713, 4
        %v1716 = vor.u32 %v1715, %v1711
        %v1717 = vrot.slane %v1716, 4
        %v1719 = vshll.u32 %v1551, 16
        %v1721 = vrot.slane %v1719, 5
        %v1722 = vsel %vm469, %v1717, %v1721
        %v1724 = vshrl.u32 %v1552, 16
        %v1726 = vrot.slane %v1724, 4
        %v1727 = vshll.u32 %v1552, 16
        %v1729 = vrot.slane %v1727, 5
        %v1730 = vor.u32 %v1726, %v1729
        %v1731 = vrot.slane %v1730, 4
        %v1733 = vshll.u32 %v1553, 16
        %v1735 = vrot.slane %v1733, 5
        %v1736 = vsel %vm469, %v1731, %v1735
        %v1737 = vshrl.u32 %v1553, 16
        %v1739 = vrot.slane %v1737, 4
        %v1740 = vor.u32 %v1739, %v1735
        %v1741 = vrot.slane %v1740, 4
        %v1743 = vshll.u32 %v1554, 16
        %v1745 = vrot.slane %v1743, 5
        %v1746 = vsel %vm469, %v1741, %v1745
        %s1747 = scalar_lea.vmem %s165, 256 [#allocation3]
        %v1748 = vld [vmem:[%s1747] sm:$0xf]
        %v1749 = vld [vmem:[%s1747 + $0x4] sm:$0xf]
        %v1750 = vld [vmem:[%s1747 + $0x8] sm:$0xf]
        %v1751 = vld [vmem:[%s1747 + $0xc] sm:$0xf]
        %v1752 = vld [vmem:[%s1747 + $0x10] sm:$0xf]
        %v1753 = vld [vmem:[%s1747 + $0x14] sm:$0xf]
        %v1754 = vld [vmem:[%s1747 + $0x18] sm:$0xf]
        %v1755 = vld [vmem:[%s1747 + $0x1c] sm:$0xf]
        %v1756 = vld [vmem:[%s1747 + $0x20] sm:$0xf]
        %v1757 = vld [vmem:[%s1747 + $0x24] sm:$0xf]
        %v1758 = vld [vmem:[%s1747 + $0x28] sm:$0xf]
        %v1759 = vld [vmem:[%s1747 + $0x2c] sm:$0xf]
        %v1760 = vld [vmem:[%s1747 + $0x30] sm:$0xf]
        %v1761 = vld [vmem:[%s1747 + $0x34] sm:$0xf]
        %v1762 = vld [vmem:[%s1747 + $0x38] sm:$0xf]
        %v1763 = vld [vmem:[%s1747 + $0x3c] sm:$0xf]
        %v1764 = vunpack.c.l.b16 %v1568
        %v1765 = vunpack.c.l.b16 %v1578
        %v1766 = vunpack.c.l.b16 %v1592
        %v1767 = vunpack.c.l.b16 %v1602
        %v1768 = vunpack.c.l.b16 %v1616
        %v1769 = vunpack.c.l.b16 %v1626
        %v1770 = vunpack.c.l.b16 %v1640
        %v1771 = vunpack.c.l.b16 %v1650
        %v1772 = vunpack.c.l.b16 %v1664
        %v1773 = vunpack.c.l.b16 %v1674
        %v1774 = vunpack.c.l.b16 %v1688
        %v1775 = vunpack.c.l.b16 %v1698
        %v1776 = vunpack.c.l.b16 %v1712
        %v1777 = vunpack.c.l.b16 %v1722
        %v1778 = vunpack.c.l.b16 %v1736
        %v1779 = vunpack.c.l.b16 %v1746
        %v1780 = vpack.c.b16 %v1765, %v1764
        %v1781 = vpack.c.b16 %v1767, %v1766
        %v1782 = vpack.c.b16 %v1769, %v1768
        %v1783 = vpack.c.b16 %v1771, %v1770
        %v1784 = vpack.c.b16 %v1773, %v1772
        %v1785 = vpack.c.b16 %v1775, %v1774
        %v1786 = vpack.c.b16 %v1777, %v1776
        %v1787 = vpack.c.b16 %v1779, %v1778
        %v1812 = vunpack.c.l.b16 %v1748
        %v1813 = vunpack.c.l.b16 %v1749
        %v1814 = vunpack.c.l.b16 %v1750
        %v1815 = vunpack.c.l.b16 %v1751
        %v1816 = vunpack.c.l.b16 %v1752
        %v1817 = vunpack.c.l.b16 %v1753
        %v1818 = vunpack.c.l.b16 %v1754
        %v1819 = vunpack.c.l.b16 %v1755
        %v1820 = vunpack.c.l.b16 %v1756
        %v1821 = vunpack.c.l.b16 %v1757
        %v1822 = vunpack.c.l.b16 %v1758
        %v1823 = vunpack.c.l.b16 %v1759
        %v1824 = vunpack.c.l.b16 %v1760
        %v1825 = vunpack.c.l.b16 %v1761
        %v1826 = vunpack.c.l.b16 %v1762
        %v1827 = vunpack.c.l.b16 %v1763
        %v1828 = vpack.c.b16 %v1813, %v1812
        %v1829 = vpack.c.b16 %v1815, %v1814
        %v1830 = vpack.c.b16 %v1817, %v1816
        %v1831 = vpack.c.b16 %v1819, %v1818
        %v1832 = vpack.c.b16 %v1821, %v1820
        %v1833 = vpack.c.b16 %v1823, %v1822
        %v1834 = vpack.c.b16 %v1825, %v1824
        %v1835 = vpack.c.b16 %v1827, %v1826
        %1844 = vmatprep.subr.bf16.mxu0 0
        %1845 = vmatpush1.bf16.msra.mxu0 %v1835
        %1846 = vmatprep.subr.bf16.mxu0 0
        %1847 = vmatpush1.bf16.msra.mxu0 %v1834
        %1848 = vmatprep.subr.bf16.mxu0 0
        %1849 = vmatpush1.bf16.msra.mxu0 %v1833
        %1850 = vmatprep.subr.bf16.mxu0 0
        %1851 = vmatpush1.bf16.msra.mxu0 %v1832
        %1852 = vmatprep.subr.bf16.mxu0 0
        %1853 = vmatpush1.bf16.msra.mxu0 %v1831
        %1854 = vmatprep.subr.bf16.mxu0 0
        %1855 = vmatpush1.bf16.msra.mxu0 %v1830
        %1856 = vmatprep.subr.bf16.mxu0 0
        %1857 = vmatpush1.bf16.msra.mxu0 %v1829
        %1858 = vmatprep.subr.bf16.mxu0 0
        %1859 = vmatpush1.bf16.msra.mxu0 %v1828
        %1860 = vmatprep.subr.bf16.mxu0 0
        %1861 = vmatpush2.bf16.msra.mxu0 0
        %1862 = vmatprep.subr.bf16.mxu0 0
        %1863 = vmatpush2.bf16.msra.mxu0 0
        %1864 = vmatprep.subr.bf16.mxu0 0
        %1865 = vmatpush2.bf16.msra.mxu0 0
        %1866 = vmatprep.subr.bf16.mxu0 0
        %1867 = vmatpush2.bf16.msra.mxu0 0
        %1868 = vmatprep.subr.bf16.mxu0 0
        %1869 = vmatpush2.bf16.msra.mxu0 0
        %1870 = vmatprep.subr.bf16.mxu0 0
        %1871 = vmatpush2.bf16.msra.mxu0 0
        %1872 = vmatprep.subr.bf16.mxu0 0
        %1873 = vmatpush2.bf16.msra.mxu0 0
        %1874 = vmatprep.subr.bf16.mxu0 0
        %1875 = vmatpush2.bf16.msra.mxu0 0
        %1876 = vmatprep.mubr.bf16.mxu0 0
        %1877 = vmatmul.mubr.bf16.gmra.mxu0 %v1780
        %v1878 = vpop.f32.mrf.mxu0
        %v1879 = vadd.f32 0.0, %v1878
        %v1880 = vpop.f32.mrf.mxu0
        %v1881 = vpop.f32.mrf.mxu0
        %v1882 = vadd.f32 0.0, %v1881
        %v1883 = vpop.f32.mrf.mxu0
        %1884 = vmatprep.mubr.bf16.mxu0 0
        %1885 = vmatmul.mubr.bf16.gmra.mxu0 %v1781
        %v1886 = vpop.f32.mrf.mxu0
        %v1887 = vadd.f32 0.0, %v1886
        %v1888 = vpop.f32.mrf.mxu0
        %v1889 = vpop.f32.mrf.mxu0
        %v1890 = vadd.f32 0.0, %v1889
        %v1891 = vpop.f32.mrf.mxu0
        %1892 = vmatprep.mubr.bf16.mxu0 0
        %1893 = vmatmul.mubr.bf16.gmra.mxu0 %v1782
        %v1894 = vpop.f32.mrf.mxu0
        %v1895 = vadd.f32 0.0, %v1894
        %v1896 = vpop.f32.mrf.mxu0
        %v1897 = vpop.f32.mrf.mxu0
        %v1898 = vadd.f32 0.0, %v1897
        %v1899 = vpop.f32.mrf.mxu0
        %1900 = vmatprep.mubr.bf16.mxu0 0
        %1901 = vmatmul.mubr.bf16.gmra.mxu0 %v1783
        %v1902 = vpop.f32.mrf.mxu0
        %v1903 = vadd.f32 0.0, %v1902
        %v1904 = vpop.f32.mrf.mxu0
        %v1905 = vpop.f32.mrf.mxu0
        %v1906 = vadd.f32 0.0, %v1905
        %v1907 = vpop.f32.mrf.mxu0
        %1908 = vmatprep.mubr.bf16.mxu0 0
        %1909 = vmatmul.mubr.bf16.gmra.mxu0 %v1784
        %v1910 = vpop.f32.mrf.mxu0
        %v1911 = vadd.f32 0.0, %v1910
        %v1912 = vpop.f32.mrf.mxu0
        %v1913 = vpop.f32.mrf.mxu0
        %v1914 = vadd.f32 0.0, %v1913
        %v1915 = vpop.f32.mrf.mxu0
        %1916 = vmatprep.mubr.bf16.mxu0 0
        %1917 = vmatmul.mubr.bf16.gmra.mxu0 %v1785
        %v1918 = vpop.f32.mrf.mxu0
        %v1919 = vadd.f32 0.0, %v1918
        %v1920 = vpop.f32.mrf.mxu0
        %v1921 = vpop.f32.mrf.mxu0
        %v1922 = vadd.f32 0.0, %v1921
        %v1923 = vpop.f32.mrf.mxu0
        %1924 = vmatprep.mubr.bf16.mxu0 0
        %1925 = vmatmul.mubr.bf16.gmra.mxu0 %v1786
        %v1926 = vpop.f32.mrf.mxu0
        %v1927 = vadd.f32 0.0, %v1926
        %v1928 = vpop.f32.mrf.mxu0
        %v1929 = vpop.f32.mrf.mxu0
        %v1930 = vadd.f32 0.0, %v1929
        %v1931 = vpop.f32.mrf.mxu0
        %1932 = vmatprep.mubr.bf16.mxu0 0
        %1933 = vmatmul.mubr.bf16.gmra.mxu0 %v1787
        %v1934 = vpop.f32.mrf.mxu0
        %v1935 = vadd.f32 0.0, %v1934
        %v1936 = vpop.f32.mrf.mxu0
        %v1937 = vpop.f32.mrf.mxu0
        %v1938 = vadd.f32 0.0, %v1937
        %v1939 = vpop.f32.mrf.mxu0
        %1940 = vdwg.mxu0
        %v1941 = vld [vmem:[#allocation2] sm:$0xff]
        %v1942 = vld [vmem:[#allocation2 + $0x8] sm:$0xff]
        %v1943 = vld [vmem:[#allocation2 + $0x10] sm:$0xff]
        %v1944 = vld [vmem:[#allocation2 + $0x18] sm:$0xff]
        %v1945 = vld [vmem:[#allocation2 + $0x20] sm:$0xff]
        %v1946 = vld [vmem:[#allocation2 + $0x28] sm:$0xff]
        %v1947 = vld [vmem:[#allocation2 + $0x30] sm:$0xff]
        %v1948 = vld [vmem:[#allocation2 + $0x38] sm:$0xff]
        %v1949 = vld [vmem:[#allocation2 + $0x40] sm:$0xff]
        %v1950 = vld [vmem:[#allocation2 + $0x48] sm:$0xff]
        %v1951 = vld [vmem:[#allocation2 + $0x50] sm:$0xff]
        %v1952 = vld [vmem:[#allocation2 + $0x58] sm:$0xff]
        %v1953 = vld [vmem:[#allocation2 + $0x60] sm:$0xff]
        %v1954 = vld [vmem:[#allocation2 + $0x68] sm:$0xff]
        %v1955 = vld [vmem:[#allocation2 + $0x70] sm:$0xff]
        %v1956 = vld [vmem:[#allocation2 + $0x78] sm:$0xff]
        %v1957 = vadd.f32 %v1941, %v1879
        %v1958 = vadd.f32 %v1942, %v1882
        %v1959 = vadd.f32 %v1943, %v1887
        %v1960 = vadd.f32 %v1944, %v1890
        %v1961 = vadd.f32 %v1945, %v1895
        %v1962 = vadd.f32 %v1946, %v1898
        %v1963 = vadd.f32 %v1947, %v1903
        %v1964 = vadd.f32 %v1948, %v1906
        %v1965 = vadd.f32 %v1949, %v1911
        %v1966 = vadd.f32 %v1950, %v1914
        %v1967 = vadd.f32 %v1951, %v1919
        %v1968 = vadd.f32 %v1952, %v1922
        %v1969 = vadd.f32 %v1953, %v1927
        %v1970 = vadd.f32 %v1954, %v1930
        %v1971 = vadd.f32 %v1955, %v1935
        %v1972 = vadd.f32 %v1956, %v1938
        %1973 = vst [vmem:[#allocation2] sm:$0xff] %v1957
        %1974 = vst [vmem:[#allocation2 + $0x8] sm:$0xff] %v1958
        %1975 = vst [vmem:[#allocation2 + $0x10] sm:$0xff] %v1959
        %1976 = vst [vmem:[#allocation2 + $0x18] sm:$0xff] %v1960
        %1977 = vst [vmem:[#allocation2 + $0x20] sm:$0xff] %v1961
        %1978 = vst [vmem:[#allocation2 + $0x28] sm:$0xff] %v1962
        %1979 = vst [vmem:[#allocation2 + $0x30] sm:$0xff] %v1963
        %1980 = vst [vmem:[#allocation2 + $0x38] sm:$0xff] %v1964
        %1981 = vst [vmem:[#allocation2 + $0x40] sm:$0xff] %v1965
        %1982 = vst [vmem:[#allocation2 + $0x48] sm:$0xff] %v1966
        %1983 = vst [vmem:[#allocation2 + $0x50] sm:$0xff] %v1967
        %1984 = vst [vmem:[#allocation2 + $0x58] sm:$0xff] %v1968
        %1985 = vst [vmem:[#allocation2 + $0x60] sm:$0xff] %v1969
        %1986 = vst [vmem:[#allocation2 + $0x68] sm:$0xff] %v1970
        %1987 = vst [vmem:[#allocation2 + $0x70] sm:$0xff] %v1971
        %1988 = vst [vmem:[#allocation2 + $0x78] sm:$0xff] %v1972
        %v1989 = vld [vmem:[%s1256] sm:$0xe]
        %v1990 = vld [vmem:[%s1256 + $0x4] sm:$0xf]
        %v1991 = vld [vmem:[%s1256 + $0x8] sm:$0x1]
        %v1992 = vld [vmem:[%s1256 + $0xc] sm:$0xe]
        %v1993 = vld [vmem:[%s1256 + $0x10] sm:$0xf]
        %v1994 = vld [vmem:[%s1256 + $0x14] sm:$0x1]
        %v1995 = vld [vmem:[%s1256 + $0x18] sm:$0xe]
        %v1996 = vld [vmem:[%s1256 + $0x1c] sm:$0xf]
        %v1997 = vld [vmem:[%s1256 + $0x20] sm:$0x1]
        %v1998 = vld [vmem:[%s1256 + $0x24] sm:$0xe]
        %v1999 = vld [vmem:[%s1256 + $0x28] sm:$0xf]
        %v2000 = vld [vmem:[%s1256 + $0x2c] sm:$0x1]
        %v2001 = vld [vmem:[%s1256 + $0x30] sm:$0xe]
        %v2002 = vld [vmem:[%s1256 + $0x34] sm:$0xf]
        %v2003 = vld [vmem:[%s1256 + $0x38] sm:$0x1]
        %v2004 = vld [vmem:[%s1256 + $0x3c] sm:$0xe]
        %v2005 = vld [vmem:[%s1256 + $0x40] sm:$0xf]
        %v2006 = vld [vmem:[%s1256 + $0x44] sm:$0x1]
        %v2007 = vld [vmem:[%s1256 + $0x48] sm:$0xe]
        %v2008 = vld [vmem:[%s1256 + $0x4c] sm:$0xf]
        %v2009 = vld [vmem:[%s1256 + $0x50] sm:$0x1]
        %v2010 = vld [vmem:[%s1256 + $0x54] sm:$0xe]
        %v2011 = vld [vmem:[%s1256 + $0x58] sm:$0xf]
        %v2012 = vld [vmem:[%s1256 + $0x5c] sm:$0x1]
        %v2037 = vrot.slane %v1989, 5
        %v2038 = vrot.slane %v2037, 4
        %v2039 = vrot.slane %v1990, 5
        %v2040 = vsel %vm954, %v2038, %v2039
        %v2041 = vrot.slane %v2039, 4
        %v2042 = vrot.slane %v1991, 5
        %v2043 = vsel %vm954, %v2041, %v2042
        %v2044 = vrot.slane %v1992, 5
        %v2045 = vrot.slane %v2044, 4
        %v2046 = vrot.slane %v1993, 5
        %v2047 = vsel %vm954, %v2045, %v2046
        %v2048 = vrot.slane %v2046, 4
        %v2049 = vrot.slane %v1994, 5
        %v2050 = vsel %vm954, %v2048, %v2049
        %v2051 = vrot.slane %v1995, 5
        %v2052 = vrot.slane %v2051, 4
        %v2053 = vrot.slane %v1996, 5
        %v2054 = vsel %vm954, %v2052, %v2053
        %v2055 = vrot.slane %v2053, 4
        %v2056 = vrot.slane %v1997, 5
        %v2057 = vsel %vm954, %v2055, %v2056
        %v2058 = vrot.slane %v1998, 5
        %v2059 = vrot.slane %v2058, 4
        %v2060 = vrot.slane %v1999, 5
        %v2061 = vsel %vm954, %v2059, %v2060
        %v2062 = vrot.slane %v2060, 4
        %v2063 = vrot.slane %v2000, 5
        %v2064 = vsel %vm954, %v2062, %v2063
        %v2065 = vrot.slane %v2001, 5
        %v2066 = vrot.slane %v2065, 4
        %v2067 = vrot.slane %v2002, 5
        %v2068 = vsel %vm954, %v2066, %v2067
        %v2069 = vrot.slane %v2067, 4
        %v2070 = vrot.slane %v2003, 5
        %v2071 = vsel %vm954, %v2069, %v2070
        %v2072 = vrot.slane %v2004, 5
        %v2073 = vrot.slane %v2072, 4
        %v2074 = vrot.slane %v2005, 5
        %v2075 = vsel %vm954, %v2073, %v2074
        %v2076 = vrot.slane %v2074, 4
        %v2077 = vrot.slane %v2006, 5
        %v2078 = vsel %vm954, %v2076, %v2077
        %v2079 = vrot.slane %v2007, 5
        %v2080 = vrot.slane %v2079, 4
        %v2081 = vrot.slane %v2008, 5
        %v2082 = vsel %vm954, %v2080, %v2081
        %v2083 = vrot.slane %v2081, 4
        %v2084 = vrot.slane %v2009, 5
        %v2085 = vsel %vm954, %v2083, %v2084
        %v2086 = vrot.slane %v2010, 5
        %v2087 = vrot.slane %v2086, 4
        %v2088 = vrot.slane %v2011, 5
        %v2089 = vsel %vm954, %v2087, %v2088
        %v2090 = vrot.slane %v2088, 4
        %v2091 = vrot.slane %v2012, 5
        %v2092 = vsel %vm954, %v2090, %v2091
        %s2093 = scalar_lea.vmem %s165, 320 [#allocation3]
        %v2094 = vld [vmem:[%s2093] sm:$0xf]
        %v2095 = vld [vmem:[%s2093 + $0x4] sm:$0xf]
        %v2096 = vld [vmem:[%s2093 + $0x8] sm:$0xf]
        %v2097 = vld [vmem:[%s2093 + $0xc] sm:$0xf]
        %v2098 = vld [vmem:[%s2093 + $0x10] sm:$0xf]
        %v2099 = vld [vmem:[%s2093 + $0x14] sm:$0xf]
        %v2100 = vld [vmem:[%s2093 + $0x18] sm:$0xf]
        %v2101 = vld [vmem:[%s2093 + $0x1c] sm:$0xf]
        %v2102 = vld [vmem:[%s2093 + $0x20] sm:$0xf]
        %v2103 = vld [vmem:[%s2093 + $0x24] sm:$0xf]
        %v2104 = vld [vmem:[%s2093 + $0x28] sm:$0xf]
        %v2105 = vld [vmem:[%s2093 + $0x2c] sm:$0xf]
        %v2106 = vld [vmem:[%s2093 + $0x30] sm:$0xf]
        %v2107 = vld [vmem:[%s2093 + $0x34] sm:$0xf]
        %v2108 = vld [vmem:[%s2093 + $0x38] sm:$0xf]
        %v2109 = vld [vmem:[%s2093 + $0x3c] sm:$0xf]
        %v2110 = vunpack.c.l.b16 %v2040
        %v2111 = vunpack.c.l.b16 %v2043
        %v2112 = vunpack.c.l.b16 %v2047
        %v2113 = vunpack.c.l.b16 %v2050
        %v2114 = vunpack.c.l.b16 %v2054
        %v2115 = vunpack.c.l.b16 %v2057
        %v2116 = vunpack.c.l.b16 %v2061
        %v2117 = vunpack.c.l.b16 %v2064
        %v2118 = vunpack.c.l.b16 %v2068
        %v2119 = vunpack.c.l.b16 %v2071
        %v2120 = vunpack.c.l.b16 %v2075
        %v2121 = vunpack.c.l.b16 %v2078
        %v2122 = vunpack.c.l.b16 %v2082
        %v2123 = vunpack.c.l.b16 %v2085
        %v2124 = vunpack.c.l.b16 %v2089
        %v2125 = vunpack.c.l.b16 %v2092
        %v2126 = vpack.c.b16 %v2111, %v2110
        %v2127 = vpack.c.b16 %v2113, %v2112
        %v2128 = vpack.c.b16 %v2115, %v2114
        %v2129 = vpack.c.b16 %v2117, %v2116
        %v2130 = vpack.c.b16 %v2119, %v2118
        %v2131 = vpack.c.b16 %v2121, %v2120
        %v2132 = vpack.c.b16 %v2123, %v2122
        %v2133 = vpack.c.b16 %v2125, %v2124
        %v2158 = vunpack.c.l.b16 %v2094
        %v2159 = vunpack.c.l.b16 %v2095
        %v2160 = vunpack.c.l.b16 %v2096
        %v2161 = vunpack.c.l.b16 %v2097
        %v2162 = vunpack.c.l.b16 %v2098
        %v2163 = vunpack.c.l.b16 %v2099
        %v2164 = vunpack.c.l.b16 %v2100
        %v2165 = vunpack.c.l.b16 %v2101
        %v2166 = vunpack.c.l.b16 %v2102
        %v2167 = vunpack.c.l.b16 %v2103
        %v2168 = vunpack.c.l.b16 %v2104
        %v2169 = vunpack.c.l.b16 %v2105
        %v2170 = vunpack.c.l.b16 %v2106
        %v2171 = vunpack.c.l.b16 %v2107
        %v2172 = vunpack.c.l.b16 %v2108
        %v2173 = vunpack.c.l.b16 %v2109
        %v2174 = vpack.c.b16 %v2159, %v2158
        %v2175 = vpack.c.b16 %v2161, %v2160
        %v2176 = vpack.c.b16 %v2163, %v2162
        %v2177 = vpack.c.b16 %v2165, %v2164
        %v2178 = vpack.c.b16 %v2167, %v2166
        %v2179 = vpack.c.b16 %v2169, %v2168
        %v2180 = vpack.c.b16 %v2171, %v2170
        %v2181 = vpack.c.b16 %v2173, %v2172
        %2190 = vmatprep.subr.bf16.mxu0 0
        %2191 = vmatpush1.bf16.msra.mxu0 %v2181
        %2192 = vmatprep.subr.bf16.mxu0 0
        %2193 = vmatpush1.bf16.msra.mxu0 %v2180
        %2194 = vmatprep.subr.bf16.mxu0 0
        %2195 = vmatpush1.bf16.msra.mxu0 %v2179
        %2196 = vmatprep.subr.bf16.mxu0 0
        %2197 = vmatpush1.bf16.msra.mxu0 %v2178
        %2198 = vmatprep.subr.bf16.mxu0 0
        %2199 = vmatpush1.bf16.msra.mxu0 %v2177
        %2200 = vmatprep.subr.bf16.mxu0 0
        %2201 = vmatpush1.bf16.msra.mxu0 %v2176
        %2202 = vmatprep.subr.bf16.mxu0 0
        %2203 = vmatpush1.bf16.msra.mxu0 %v2175
        %2204 = vmatprep.subr.bf16.mxu0 0
        %2205 = vmatpush1.bf16.msra.mxu0 %v2174
        %2206 = vmatprep.subr.bf16.mxu0 0
        %2207 = vmatpush2.bf16.msra.mxu0 0
        %2208 = vmatprep.subr.bf16.mxu0 0
        %2209 = vmatpush2.bf16.msra.mxu0 0
        %2210 = vmatprep.subr.bf16.mxu0 0
        %2211 = vmatpush2.bf16.msra.mxu0 0
        %2212 = vmatprep.subr.bf16.mxu0 0
        %2213 = vmatpush2.bf16.msra.mxu0 0
        %2214 = vmatprep.subr.bf16.mxu0 0
        %2215 = vmatpush2.bf16.msra.mxu0 0
        %2216 = vmatprep.subr.bf16.mxu0 0
        %2217 = vmatpush2.bf16.msra.mxu0 0
        %2218 = vmatprep.subr.bf16.mxu0 0
        %2219 = vmatpush2.bf16.msra.mxu0 0
        %2220 = vmatprep.subr.bf16.mxu0 0
        %2221 = vmatpush2.bf16.msra.mxu0 0
        %2222 = vmatprep.mubr.bf16.mxu0 0
        %2223 = vmatmul.mubr.bf16.gmra.mxu0 %v2126
        %v2224 = vpop.f32.mrf.mxu0
        %v2225 = vadd.f32 0.0, %v2224
        %v2226 = vpop.f32.mrf.mxu0
        %v2227 = vpop.f32.mrf.mxu0
        %v2228 = vadd.f32 0.0, %v2227
        %v2229 = vpop.f32.mrf.mxu0
        %2230 = vmatprep.mubr.bf16.mxu0 0
        %2231 = vmatmul.mubr.bf16.gmra.mxu0 %v2127
        %v2232 = vpop.f32.mrf.mxu0
        %v2233 = vadd.f32 0.0, %v2232
        %v2234 = vpop.f32.mrf.mxu0
        %v2235 = vpop.f32.mrf.mxu0
        %v2236 = vadd.f32 0.0, %v2235
        %v2237 = vpop.f32.mrf.mxu0
        %2238 = vmatprep.mubr.bf16.mxu0 0
        %2239 = vmatmul.mubr.bf16.gmra.mxu0 %v2128
        %v2240 = vpop.f32.mrf.mxu0
        %v2241 = vadd.f32 0.0, %v2240
        %v2242 = vpop.f32.mrf.mxu0
        %v2243 = vpop.f32.mrf.mxu0
        %v2244 = vadd.f32 0.0, %v2243
        %v2245 = vpop.f32.mrf.mxu0
        %2246 = vmatprep.mubr.bf16.mxu0 0
        %2247 = vmatmul.mubr.bf16.gmra.mxu0 %v2129
        %v2248 = vpop.f32.mrf.mxu0
        %v2249 = vadd.f32 0.0, %v2248
        %v2250 = vpop.f32.mrf.mxu0
        %v2251 = vpop.f32.mrf.mxu0
        %v2252 = vadd.f32 0.0, %v2251
        %v2253 = vpop.f32.mrf.mxu0
        %2254 = vmatprep.mubr.bf16.mxu0 0
        %2255 = vmatmul.mubr.bf16.gmra.mxu0 %v2130
        %v2256 = vpop.f32.mrf.mxu0
        %v2257 = vadd.f32 0.0, %v2256
        %v2258 = vpop.f32.mrf.mxu0
        %v2259 = vpop.f32.mrf.mxu0
        %v2260 = vadd.f32 0.0, %v2259
        %v2261 = vpop.f32.mrf.mxu0
        %2262 = vmatprep.mubr.bf16.mxu0 0
        %2263 = vmatmul.mubr.bf16.gmra.mxu0 %v2131
        %v2264 = vpop.f32.mrf.mxu0
        %v2265 = vadd.f32 0.0, %v2264
        %v2266 = vpop.f32.mrf.mxu0
        %v2267 = vpop.f32.mrf.mxu0
        %v2268 = vadd.f32 0.0, %v2267
        %v2269 = vpop.f32.mrf.mxu0
        %2270 = vmatprep.mubr.bf16.mxu0 0
        %2271 = vmatmul.mubr.bf16.gmra.mxu0 %v2132
        %v2272 = vpop.f32.mrf.mxu0
        %v2273 = vadd.f32 0.0, %v2272
        %v2274 = vpop.f32.mrf.mxu0
        %v2275 = vpop.f32.mrf.mxu0
        %v2276 = vadd.f32 0.0, %v2275
        %v2277 = vpop.f32.mrf.mxu0
        %2278 = vmatprep.mubr.bf16.mxu0 0
        %2279 = vmatmul.mubr.bf16.gmra.mxu0 %v2133
        %v2280 = vpop.f32.mrf.mxu0
        %v2281 = vadd.f32 0.0, %v2280
        %v2282 = vpop.f32.mrf.mxu0
        %v2283 = vpop.f32.mrf.mxu0
        %v2284 = vadd.f32 0.0, %v2283
        %v2285 = vpop.f32.mrf.mxu0
        %2286 = vdwg.mxu0
        %v2287 = vld [vmem:[#allocation2] sm:$0xff]
        %v2288 = vld [vmem:[#allocation2 + $0x8] sm:$0xff]
        %v2289 = vld [vmem:[#allocation2 + $0x10] sm:$0xff]
        %v2290 = vld [vmem:[#allocation2 + $0x18] sm:$0xff]
        %v2291 = vld [vmem:[#allocation2 + $0x20] sm:$0xff]
        %v2292 = vld [vmem:[#allocation2 + $0x28] sm:$0xff]
        %v2293 = vld [vmem:[#allocation2 + $0x30] sm:$0xff]
        %v2294 = vld [vmem:[#allocation2 + $0x38] sm:$0xff]
        %v2295 = vld [vmem:[#allocation2 + $0x40] sm:$0xff]
        %v2296 = vld [vmem:[#allocation2 + $0x48] sm:$0xff]
        %v2297 = vld [vmem:[#allocation2 + $0x50] sm:$0xff]
        %v2298 = vld [vmem:[#allocation2 + $0x58] sm:$0xff]
        %v2299 = vld [vmem:[#allocation2 + $0x60] sm:$0xff]
        %v2300 = vld [vmem:[#allocation2 + $0x68] sm:$0xff]
        %v2301 = vld [vmem:[#allocation2 + $0x70] sm:$0xff]
        %v2302 = vld [vmem:[#allocation2 + $0x78] sm:$0xff]
        %v2303 = vadd.f32 %v2287, %v2225
        %v2304 = vadd.f32 %v2288, %v2228
        %v2305 = vadd.f32 %v2289, %v2233
        %v2306 = vadd.f32 %v2290, %v2236
        %v2307 = vadd.f32 %v2291, %v2241
        %v2308 = vadd.f32 %v2292, %v2244
        %v2309 = vadd.f32 %v2293, %v2249
        %v2310 = vadd.f32 %v2294, %v2252
        %v2311 = vadd.f32 %v2295, %v2257
        %v2312 = vadd.f32 %v2296, %v2260
        %v2313 = vadd.f32 %v2297, %v2265
        %v2314 = vadd.f32 %v2298, %v2268
        %v2315 = vadd.f32 %v2299, %v2273
        %v2316 = vadd.f32 %v2300, %v2276
        %v2317 = vadd.f32 %v2301, %v2281
        %v2318 = vadd.f32 %v2302, %v2284
        %2319 = vst [vmem:[#allocation2] sm:$0xff] %v2303
        %2320 = vst [vmem:[#allocation2 + $0x8] sm:$0xff] %v2304
        %2321 = vst [vmem:[#allocation2 + $0x10] sm:$0xff] %v2305
        %2322 = vst [vmem:[#allocation2 + $0x18] sm:$0xff] %v2306
        %2323 = vst [vmem:[#allocation2 + $0x20] sm:$0xff] %v2307
        %2324 = vst [vmem:[#allocation2 + $0x28] sm:$0xff] %v2308
        %2325 = vst [vmem:[#allocation2 + $0x30] sm:$0xff] %v2309
        %2326 = vst [vmem:[#allocation2 + $0x38] sm:$0xff] %v2310
        %2327 = vst [vmem:[#allocation2 + $0x40] sm:$0xff] %v2311
        %2328 = vst [vmem:[#allocation2 + $0x48] sm:$0xff] %v2312
        %2329 = vst [vmem:[#allocation2 + $0x50] sm:$0xff] %v2313
        %2330 = vst [vmem:[#allocation2 + $0x58] sm:$0xff] %v2314
        %2331 = vst [vmem:[#allocation2 + $0x60] sm:$0xff] %v2315
        %2332 = vst [vmem:[#allocation2 + $0x68] sm:$0xff] %v2316
        %2333 = vst [vmem:[#allocation2 + $0x70] sm:$0xff] %v2317
        %2334 = vst [vmem:[#allocation2 + $0x78] sm:$0xff] %v2318
        %s2335 = sadd.s32 %s198, 2
        %s2336 = smul.u32 %s2335, 3
        %s2337 = smul.addr %s2336, 4
        %s2338 = scalar_lea.vmem %s195, %s2337
        %v2339 = vld [vmem:[%s2338] sm:$0xf]
        %v2340 = vld [vmem:[%s2338 + $0x4] sm:$0xf]
        %v2341 = vld [vmem:[%s2338 + $0xc] sm:$0xf]
        %v2342 = vld [vmem:[%s2338 + $0x10] sm:$0xf]
        %v2343 = vld [vmem:[%s2338 + $0x18] sm:$0xf]
        %v2344 = vld [vmem:[%s2338 + $0x1c] sm:$0xf]
        %v2345 = vld [vmem:[%s2338 + $0x24] sm:$0xf]
        %v2346 = vld [vmem:[%s2338 + $0x28] sm:$0xf]
        %v2347 = vld [vmem:[%s2338 + $0x30] sm:$0xf]
        %v2348 = vld [vmem:[%s2338 + $0x34] sm:$0xf]
        %v2349 = vld [vmem:[%s2338 + $0x3c] sm:$0xf]
        %v2350 = vld [vmem:[%s2338 + $0x40] sm:$0xf]
        %v2351 = vld [vmem:[%s2338 + $0x48] sm:$0xf]
        %v2352 = vld [vmem:[%s2338 + $0x4c] sm:$0xf]
        %v2353 = vld [vmem:[%s2338 + $0x54] sm:$0xf]
        %v2354 = vld [vmem:[%s2338 + $0x58] sm:$0xf]
        %s2355 = scalar_lea.vmem %s165, 384 [#allocation3]
        %v2356 = vld [vmem:[%s2355] sm:$0xf]
        %v2357 = vld [vmem:[%s2355 + $0x4] sm:$0xf]
        %v2358 = vld [vmem:[%s2355 + $0x8] sm:$0xf]
        %v2359 = vld [vmem:[%s2355 + $0xc] sm:$0xf]
        %v2360 = vld [vmem:[%s2355 + $0x10] sm:$0xf]
        %v2361 = vld [vmem:[%s2355 + $0x14] sm:$0xf]
        %v2362 = vld [vmem:[%s2355 + $0x18] sm:$0xf]
        %v2363 = vld [vmem:[%s2355 + $0x1c] sm:$0xf]
        %v2364 = vld [vmem:[%s2355 + $0x20] sm:$0xf]
        %v2365 = vld [vmem:[%s2355 + $0x24] sm:$0xf]
        %v2366 = vld [vmem:[%s2355 + $0x28] sm:$0xf]
        %v2367 = vld [vmem:[%s2355 + $0x2c] sm:$0xf]
        %v2368 = vld [vmem:[%s2355 + $0x30] sm:$0xf]
        %v2369 = vld [vmem:[%s2355 + $0x34] sm:$0xf]
        %v2370 = vld [vmem:[%s2355 + $0x38] sm:$0xf]
        %v2371 = vld [vmem:[%s2355 + $0x3c] sm:$0xf]
        %v2388 = vunpack.c.l.b16 %v2339
        %v2389 = vunpack.c.l.b16 %v2340
        %v2390 = vunpack.c.l.b16 %v2341
        %v2391 = vunpack.c.l.b16 %v2342
        %v2392 = vunpack.c.l.b16 %v2343
        %v2393 = vunpack.c.l.b16 %v2344
        %v2394 = vunpack.c.l.b16 %v2345
        %v2395 = vunpack.c.l.b16 %v2346
        %v2396 = vunpack.c.l.b16 %v2347
        %v2397 = vunpack.c.l.b16 %v2348
        %v2398 = vunpack.c.l.b16 %v2349
        %v2399 = vunpack.c.l.b16 %v2350
        %v2400 = vunpack.c.l.b16 %v2351
        %v2401 = vunpack.c.l.b16 %v2352
        %v2402 = vunpack.c.l.b16 %v2353
        %v2403 = vunpack.c.l.b16 %v2354
        %v2404 = vpack.c.b16 %v2389, %v2388
        %v2405 = vpack.c.b16 %v2391, %v2390
        %v2406 = vpack.c.b16 %v2393, %v2392
        %v2407 = vpack.c.b16 %v2395, %v2394
        %v2408 = vpack.c.b16 %v2397, %v2396
        %v2409 = vpack.c.b16 %v2399, %v2398
        %v2410 = vpack.c.b16 %v2401, %v2400
        %v2411 = vpack.c.b16 %v2403, %v2402
        %v2436 = vunpack.c.l.b16 %v2356
        %v2437 = vunpack.c.l.b16 %v2357
        %v2438 = vunpack.c.l.b16 %v2358
        %v2439 = vunpack.c.l.b16 %v2359
        %v2440 = vunpack.c.l.b16 %v2360
        %v2441 = vunpack.c.l.b16 %v2361
        %v2442 = vunpack.c.l.b16 %v2362
        %v2443 = vunpack.c.l.b16 %v2363
        %v2444 = vunpack.c.l.b16 %v2364
        %v2445 = vunpack.c.l.b16 %v2365
        %v2446 = vunpack.c.l.b16 %v2366
        %v2447 = vunpack.c.l.b16 %v2367
        %v2448 = vunpack.c.l.b16 %v2368
        %v2449 = vunpack.c.l.b16 %v2369
        %v2450 = vunpack.c.l.b16 %v2370
        %v2451 = vunpack.c.l.b16 %v2371
        %v2452 = vpack.c.b16 %v2437, %v2436
        %v2453 = vpack.c.b16 %v2439, %v2438
        %v2454 = vpack.c.b16 %v2441, %v2440
        %v2455 = vpack.c.b16 %v2443, %v2442
        %v2456 = vpack.c.b16 %v2445, %v2444
        %v2457 = vpack.c.b16 %v2447, %v2446
        %v2458 = vpack.c.b16 %v2449, %v2448
        %v2459 = vpack.c.b16 %v2451, %v2450
        %2468 = vmatprep.subr.bf16.mxu0 0
        %2469 = vmatpush1.bf16.msra.mxu0 %v2459
        %2470 = vmatprep.subr.bf16.mxu0 0
        %2471 = vmatpush1.bf16.msra.mxu0 %v2458
        %2472 = vmatprep.subr.bf16.mxu0 0
        %2473 = vmatpush1.bf16.msra.mxu0 %v2457
        %2474 = vmatprep.subr.bf16.mxu0 0
        %2475 = vmatpush1.bf16.msra.mxu0 %v2456
        %2476 = vmatprep.subr.bf16.mxu0 0
        %2477 = vmatpush1.bf16.msra.mxu0 %v2455
        %2478 = vmatprep.subr.bf16.mxu0 0
        %2479 = vmatpush1.bf16.msra.mxu0 %v2454
        %2480 = vmatprep.subr.bf16.mxu0 0
        %2481 = vmatpush1.bf16.msra.mxu0 %v2453
        %2482 = vmatprep.subr.bf16.mxu0 0
        %2483 = vmatpush1.bf16.msra.mxu0 %v2452
        %2484 = vmatprep.subr.bf16.mxu0 0
        %2485 = vmatpush2.bf16.msra.mxu0 0
        %2486 = vmatprep.subr.bf16.mxu0 0
        %2487 = vmatpush2.bf16.msra.mxu0 0
        %2488 = vmatprep.subr.bf16.mxu0 0
        %2489 = vmatpush2.bf16.msra.mxu0 0
        %2490 = vmatprep.subr.bf16.mxu0 0
        %2491 = vmatpush2.bf16.msra.mxu0 0
        %2492 = vmatprep.subr.bf16.mxu0 0
        %2493 = vmatpush2.bf16.msra.mxu0 0
        %2494 = vmatprep.subr.bf16.mxu0 0
        %2495 = vmatpush2.bf16.msra.mxu0 0
        %2496 = vmatprep.subr.bf16.mxu0 0
        %2497 = vmatpush2.bf16.msra.mxu0 0
        %2498 = vmatprep.subr.bf16.mxu0 0
        %2499 = vmatpush2.bf16.msra.mxu0 0
        %2500 = vmatprep.mubr.bf16.mxu0 0
        %2501 = vmatmul.mubr.bf16.gmra.mxu0 %v2404
        %v2502 = vpop.f32.mrf.mxu0
        %v2503 = vadd.f32 0.0, %v2502
        %v2504 = vpop.f32.mrf.mxu0
        %v2505 = vpop.f32.mrf.mxu0
        %v2506 = vadd.f32 0.0, %v2505
        %v2507 = vpop.f32.mrf.mxu0
        %2508 = vmatprep.mubr.bf16.mxu0 0
        %2509 = vmatmul.mubr.bf16.gmra.mxu0 %v2405
        %v2510 = vpop.f32.mrf.mxu0
        %v2511 = vadd.f32 0.0, %v2510
        %v2512 = vpop.f32.mrf.mxu0
        %v2513 = vpop.f32.mrf.mxu0
        %v2514 = vadd.f32 0.0, %v2513
        %v2515 = vpop.f32.mrf.mxu0
        %2516 = vmatprep.mubr.bf16.mxu0 0
        %2517 = vmatmul.mubr.bf16.gmra.mxu0 %v2406
        %v2518 = vpop.f32.mrf.mxu0
        %v2519 = vadd.f32 0.0, %v2518
        %v2520 = vpop.f32.mrf.mxu0
        %v2521 = vpop.f32.mrf.mxu0
        %v2522 = vadd.f32 0.0, %v2521
        %v2523 = vpop.f32.mrf.mxu0
        %2524 = vmatprep.mubr.bf16.mxu0 0
        %2525 = vmatmul.mubr.bf16.gmra.mxu0 %v2407
        %v2526 = vpop.f32.mrf.mxu0
        %v2527 = vadd.f32 0.0, %v2526
        %v2528 = vpop.f32.mrf.mxu0
        %v2529 = vpop.f32.mrf.mxu0
        %v2530 = vadd.f32 0.0, %v2529
        %v2531 = vpop.f32.mrf.mxu0
        %2532 = vmatprep.mubr.bf16.mxu0 0
        %2533 = vmatmul.mubr.bf16.gmra.mxu0 %v2408
        %v2534 = vpop.f32.mrf.mxu0
        %v2535 = vadd.f32 0.0, %v2534
        %v2536 = vpop.f32.mrf.mxu0
        %v2537 = vpop.f32.mrf.mxu0
        %v2538 = vadd.f32 0.0, %v2537
        %v2539 = vpop.f32.mrf.mxu0
        %2540 = vmatprep.mubr.bf16.mxu0 0
        %2541 = vmatmul.mubr.bf16.gmra.mxu0 %v2409
        %v2542 = vpop.f32.mrf.mxu0
        %v2543 = vadd.f32 0.0, %v2542
        %v2544 = vpop.f32.mrf.mxu0
        %v2545 = vpop.f32.mrf.mxu0
        %v2546 = vadd.f32 0.0, %v2545
        %v2547 = vpop.f32.mrf.mxu0
        %2548 = vmatprep.mubr.bf16.mxu0 0
        %2549 = vmatmul.mubr.bf16.gmra.mxu0 %v2410
        %v2550 = vpop.f32.mrf.mxu0
        %v2551 = vadd.f32 0.0, %v2550
        %v2552 = vpop.f32.mrf.mxu0
        %v2553 = vpop.f32.mrf.mxu0
        %v2554 = vadd.f32 0.0, %v2553
        %v2555 = vpop.f32.mrf.mxu0
        %2556 = vmatprep.mubr.bf16.mxu0 0
        %2557 = vmatmul.mubr.bf16.gmra.mxu0 %v2411
        %v2558 = vpop.f32.mrf.mxu0
        %v2559 = vadd.f32 0.0, %v2558
        %v2560 = vpop.f32.mrf.mxu0
        %v2561 = vpop.f32.mrf.mxu0
        %v2562 = vadd.f32 0.0, %v2561
        %v2563 = vpop.f32.mrf.mxu0
        %2564 = vdwg.mxu0
        %v2565 = vld [vmem:[#allocation2] sm:$0xff]
        %v2566 = vld [vmem:[#allocation2 + $0x8] sm:$0xff]
        %v2567 = vld [vmem:[#allocation2 + $0x10] sm:$0xff]
        %v2568 = vld [vmem:[#allocation2 + $0x18] sm:$0xff]
        %v2569 = vld [vmem:[#allocation2 + $0x20] sm:$0xff]
        %v2570 = vld [vmem:[#allocation2 + $0x28] sm:$0xff]
        %v2571 = vld [vmem:[#allocation2 + $0x30] sm:$0xff]
        %v2572 = vld [vmem:[#allocation2 + $0x38] sm:$0xff]
        %v2573 = vld [vmem:[#allocation2 + $0x40] sm:$0xff]
        %v2574 = vld [vmem:[#allocation2 + $0x48] sm:$0xff]
        %v2575 = vld [vmem:[#allocation2 + $0x50] sm:$0xff]
        %v2576 = vld [vmem:[#allocation2 + $0x58] sm:$0xff]
        %v2577 = vld [vmem:[#allocation2 + $0x60] sm:$0xff]
        %v2578 = vld [vmem:[#allocation2 + $0x68] sm:$0xff]
        %v2579 = vld [vmem:[#allocation2 + $0x70] sm:$0xff]
        %v2580 = vld [vmem:[#allocation2 + $0x78] sm:$0xff]
        %v2581 = vadd.f32 %v2565, %v2503
        %v2582 = vadd.f32 %v2566, %v2506
        %v2583 = vadd.f32 %v2567, %v2511
        %v2584 = vadd.f32 %v2568, %v2514
        %v2585 = vadd.f32 %v2569, %v2519
        %v2586 = vadd.f32 %v2570, %v2522
        %v2587 = vadd.f32 %v2571, %v2527
        %v2588 = vadd.f32 %v2572, %v2530
        %v2589 = vadd.f32 %v2573, %v2535
        %v2590 = vadd.f32 %v2574, %v2538
        %v2591 = vadd.f32 %v2575, %v2543
        %v2592 = vadd.f32 %v2576, %v2546
        %v2593 = vadd.f32 %v2577, %v2551
        %v2594 = vadd.f32 %v2578, %v2554
        %v2595 = vadd.f32 %v2579, %v2559
        %v2596 = vadd.f32 %v2580, %v2562
        %2597 = vst [vmem:[#allocation2] sm:$0xff] %v2581
        %2598 = vst [vmem:[#allocation2 + $0x8] sm:$0xff] %v2582
        %2599 = vst [vmem:[#allocation2 + $0x10] sm:$0xff] %v2583
        %2600 = vst [vmem:[#allocation2 + $0x18] sm:$0xff] %v2584
        %2601 = vst [vmem:[#allocation2 + $0x20] sm:$0xff] %v2585
        %2602 = vst [vmem:[#allocation2 + $0x28] sm:$0xff] %v2586
        %2603 = vst [vmem:[#allocation2 + $0x30] sm:$0xff] %v2587
        %2604 = vst [vmem:[#allocation2 + $0x38] sm:$0xff] %v2588
        %2605 = vst [vmem:[#allocation2 + $0x40] sm:$0xff] %v2589
        %2606 = vst [vmem:[#allocation2 + $0x48] sm:$0xff] %v2590
        %2607 = vst [vmem:[#allocation2 + $0x50] sm:$0xff] %v2591
        %2608 = vst [vmem:[#allocation2 + $0x58] sm:$0xff] %v2592
        %2609 = vst [vmem:[#allocation2 + $0x60] sm:$0xff] %v2593
        %2610 = vst [vmem:[#allocation2 + $0x68] sm:$0xff] %v2594
        %2611 = vst [vmem:[#allocation2 + $0x70] sm:$0xff] %v2595
        %2612 = vst [vmem:[#allocation2 + $0x78] sm:$0xff] %v2596
        %v2613 = vld [vmem:[%s2338] sm:$0xf]
        %v2614 = vld [vmem:[%s2338 + $0x4] sm:$0xf]
        %v2615 = vld [vmem:[%s2338 + $0x8] sm:$0x1]
        %v2616 = vld [vmem:[%s2338 + $0xc] sm:$0xf]
        %v2617 = vld [vmem:[%s2338 + $0x10] sm:$0xf]
        %v2618 = vld [vmem:[%s2338 + $0x14] sm:$0x1]
        %v2619 = vld [vmem:[%s2338 + $0x18] sm:$0xf]
        %v2620 = vld [vmem:[%s2338 + $0x1c] sm:$0xf]
        %v2621 = vld [vmem:[%s2338 + $0x20] sm:$0x1]
        %v2622 = vld [vmem:[%s2338 + $0x24] sm:$0xf]
        %v2623 = vld [vmem:[%s2338 + $0x28] sm:$0xf]
        %v2624 = vld [vmem:[%s2338 + $0x2c] sm:$0x1]
        %v2625 = vld [vmem:[%s2338 + $0x30] sm:$0xf]
        %v2626 = vld [vmem:[%s2338 + $0x34] sm:$0xf]
        %v2627 = vld [vmem:[%s2338 + $0x38] sm:$0x1]
        %v2628 = vld [vmem:[%s2338 + $0x3c] sm:$0xf]
        %v2629 = vld [vmem:[%s2338 + $0x40] sm:$0xf]
        %v2630 = vld [vmem:[%s2338 + $0x44] sm:$0x1]
        %v2631 = vld [vmem:[%s2338 + $0x48] sm:$0xf]
        %v2632 = vld [vmem:[%s2338 + $0x4c] sm:$0xf]
        %v2633 = vld [vmem:[%s2338 + $0x50] sm:$0x1]
        %v2634 = vld [vmem:[%s2338 + $0x54] sm:$0xf]
        %v2635 = vld [vmem:[%s2338 + $0x58] sm:$0xf]
        %v2636 = vld [vmem:[%s2338 + $0x5c] sm:$0x1]
        %v2638 = vshrl.u32 %v2613, 16
        %v2640 = vrot.slane %v2638, 4
        %v2641 = vshll.u32 %v2613, 16
        %v2643 = vrot.slane %v2641, 5
        %v2644 = vor.u32 %v2640, %v2643
        %v2645 = vrot.slane %v2644, 4
        %v2647 = vshll.u32 %v2614, 16
        %v2649 = vrot.slane %v2647, 5
        %v2650 = vsel %vm469, %v2645, %v2649
        %v2651 = vshrl.u32 %v2614, 16
        %v2653 = vrot.slane %v2651, 4
        %v2654 = vor.u32 %v2653, %v2649
        %v2655 = vrot.slane %v2654, 4
        %v2657 = vshll.u32 %v2615, 16
        %v2659 = vrot.slane %v2657, 5
        %v2660 = vsel %vm469, %v2655, %v2659
        %v2662 = vshrl.u32 %v2616, 16
        %v2664 = vrot.slane %v2662, 4
        %v2665 = vshll.u32 %v2616, 16
        %v2667 = vrot.slane %v2665, 5
        %v2668 = vor.u32 %v2664, %v2667
        %v2669 = vrot.slane %v2668, 4
        %v2671 = vshll.u32 %v2617, 16
        %v2673 = vrot.slane %v2671, 5
        %v2674 = vsel %vm469, %v2669, %v2673
        %v2675 = vshrl.u32 %v2617, 16
        %v2677 = vrot.slane %v2675, 4
        %v2678 = vor.u32 %v2677, %v2673
        %v2679 = vrot.slane %v2678, 4
        %v2681 = vshll.u32 %v2618, 16
        %v2683 = vrot.slane %v2681, 5
        %v2684 = vsel %vm469, %v2679, %v2683
        %v2686 = vshrl.u32 %v2619, 16
        %v2688 = vrot.slane %v2686, 4
        %v2689 = vshll.u32 %v2619, 16
        %v2691 = vrot.slane %v2689, 5
        %v2692 = vor.u32 %v2688, %v2691
        %v2693 = vrot.slane %v2692, 4
        %v2695 = vshll.u32 %v2620, 16
        %v2697 = vrot.slane %v2695, 5
        %v2698 = vsel %vm469, %v2693, %v2697
        %v2699 = vshrl.u32 %v2620, 16
        %v2701 = vrot.slane %v2699, 4
        %v2702 = vor.u32 %v2701, %v2697
        %v2703 = vrot.slane %v2702, 4
        %v2705 = vshll.u32 %v2621, 16
        %v2707 = vrot.slane %v2705, 5
        %v2708 = vsel %vm469, %v2703, %v2707
        %v2710 = vshrl.u32 %v2622, 16
        %v2712 = vrot.slane %v2710, 4
        %v2713 = vshll.u32 %v2622, 16
        %v2715 = vrot.slane %v2713, 5
        %v2716 = vor.u32 %v2712, %v2715
        %v2717 = vrot.slane %v2716, 4
        %v2719 = vshll.u32 %v2623, 16
        %v2721 = vrot.slane %v2719, 5
        %v2722 = vsel %vm469, %v2717, %v2721
        %v2723 = vshrl.u32 %v2623, 16
        %v2725 = vrot.slane %v2723, 4
        %v2726 = vor.u32 %v2725, %v2721
        %v2727 = vrot.slane %v2726, 4
        %v2729 = vshll.u32 %v2624, 16
        %v2731 = vrot.slane %v2729, 5
        %v2732 = vsel %vm469, %v2727, %v2731
        %v2734 = vshrl.u32 %v2625, 16
        %v2736 = vrot.slane %v2734, 4
        %v2737 = vshll.u32 %v2625, 16
        %v2739 = vrot.slane %v2737, 5
        %v2740 = vor.u32 %v2736, %v2739
        %v2741 = vrot.slane %v2740, 4
        %v2743 = vshll.u32 %v2626, 16
        %v2745 = vrot.slane %v2743, 5
        %v2746 = vsel %vm469, %v2741, %v2745
        %v2747 = vshrl.u32 %v2626, 16
        %v2749 = vrot.slane %v2747, 4
        %v2750 = vor.u32 %v2749, %v2745
        %v2751 = vrot.slane %v2750, 4
        %v2753 = vshll.u32 %v2627, 16
        %v2755 = vrot.slane %v2753, 5
        %v2756 = vsel %vm469, %v2751, %v2755
        %v2758 = vshrl.u32 %v2628, 16
        %v2760 = vrot.slane %v2758, 4
        %v2761 = vshll.u32 %v2628, 16
        %v2763 = vrot.slane %v2761, 5
        %v2764 = vor.u32 %v2760, %v2763
        %v2765 = vrot.slane %v2764, 4
        %v2767 = vshll.u32 %v2629, 16
        %v2769 = vrot.slane %v2767, 5
        %v2770 = vsel %vm469, %v2765, %v2769
        %v2771 = vshrl.u32 %v2629, 16
        %v2773 = vrot.slane %v2771, 4
        %v2774 = vor.u32 %v2773, %v2769
        %v2775 = vrot.slane %v2774, 4
        %v2777 = vshll.u32 %v2630, 16
        %v2779 = vrot.slane %v2777, 5
        %v2780 = vsel %vm469, %v2775, %v2779
        %v2782 = vshrl.u32 %v2631, 16
        %v2784 = vrot.slane %v2782, 4
        %v2785 = vshll.u32 %v2631, 16
        %v2787 = vrot.slane %v2785, 5
        %v2788 = vor.u32 %v2784, %v2787
        %v2789 = vrot.slane %v2788, 4
        %v2791 = vshll.u32 %v2632, 16
        %v2793 = vrot.slane %v2791, 5
        %v2794 = vsel %vm469, %v2789, %v2793
        %v2795 = vshrl.u32 %v2632, 16
        %v2797 = vrot.slane %v2795, 4
        %v2798 = vor.u32 %v2797, %v2793
        %v2799 = vrot.slane %v2798, 4
        %v2801 = vshll.u32 %v2633, 16
        %v2803 = vrot.slane %v2801, 5
        %v2804 = vsel %vm469, %v2799, %v2803
        %v2806 = vshrl.u32 %v2634, 16
        %v2808 = vrot.slane %v2806, 4
        %v2809 = vshll.u32 %v2634, 16
        %v2811 = vrot.slane %v2809, 5
        %v2812 = vor.u32 %v2808, %v2811
        %v2813 = vrot.slane %v2812, 4
        %v2815 = vshll.u32 %v2635, 16
        %v2817 = vrot.slane %v2815, 5
        %v2818 = vsel %vm469, %v2813, %v2817
        %v2819 = vshrl.u32 %v2635, 16
        %v2821 = vrot.slane %v2819, 4
        %v2822 = vor.u32 %v2821, %v2817
        %v2823 = vrot.slane %v2822, 4
        %v2825 = vshll.u32 %v2636, 16
        %v2827 = vrot.slane %v2825, 5
        %v2828 = vsel %vm469, %v2823, %v2827
        %s2829 = scalar_lea.vmem %s165, 448 [#allocation3]
        %v2830 = vld [vmem:[%s2829] sm:$0xf]
        %v2831 = vld [vmem:[%s2829 + $0x4] sm:$0xf]
        %v2832 = vld [vmem:[%s2829 + $0x8] sm:$0xf]
        %v2833 = vld [vmem:[%s2829 + $0xc] sm:$0xf]
        %v2834 = vld [vmem:[%s2829 + $0x10] sm:$0xf]
        %v2835 = vld [vmem:[%s2829 + $0x14] sm:$0xf]
        %v2836 = vld [vmem:[%s2829 + $0x18] sm:$0xf]
        %v2837 = vld [vmem:[%s2829 + $0x1c] sm:$0xf]
        %v2838 = vld [vmem:[%s2829 + $0x20] sm:$0xf]
        %v2839 = vld [vmem:[%s2829 + $0x24] sm:$0xf]
        %v2840 = vld [vmem:[%s2829 + $0x28] sm:$0xf]
        %v2841 = vld [vmem:[%s2829 + $0x2c] sm:$0xf]
        %v2842 = vld [vmem:[%s2829 + $0x30] sm:$0xf]
        %v2843 = vld [vmem:[%s2829 + $0x34] sm:$0xf]
        %v2844 = vld [vmem:[%s2829 + $0x38] sm:$0xf]
        %v2845 = vld [vmem:[%s2829 + $0x3c] sm:$0xf]
        %v2846 = vunpack.c.l.b16 %v2650
        %v2847 = vunpack.c.l.b16 %v2660
        %v2848 = vunpack.c.l.b16 %v2674
        %v2849 = vunpack.c.l.b16 %v2684
        %v2850 = vunpack.c.l.b16 %v2698
        %v2851 = vunpack.c.l.b16 %v2708
        %v2852 = vunpack.c.l.b16 %v2722
        %v2853 = vunpack.c.l.b16 %v2732
        %v2854 = vunpack.c.l.b16 %v2746
        %v2855 = vunpack.c.l.b16 %v2756
        %v2856 = vunpack.c.l.b16 %v2770
        %v2857 = vunpack.c.l.b16 %v2780
        %v2858 = vunpack.c.l.b16 %v2794
        %v2859 = vunpack.c.l.b16 %v2804
        %v2860 = vunpack.c.l.b16 %v2818
        %v2861 = vunpack.c.l.b16 %v2828
        %v2862 = vpack.c.b16 %v2847, %v2846
        %v2863 = vpack.c.b16 %v2849, %v2848
        %v2864 = vpack.c.b16 %v2851, %v2850
        %v2865 = vpack.c.b16 %v2853, %v2852
        %v2866 = vpack.c.b16 %v2855, %v2854
        %v2867 = vpack.c.b16 %v2857, %v2856
        %v2868 = vpack.c.b16 %v2859, %v2858
        %v2869 = vpack.c.b16 %v2861, %v2860
        %v2894 = vunpack.c.l.b16 %v2830
        %v2895 = vunpack.c.l.b16 %v2831
        %v2896 = vunpack.c.l.b16 %v2832
        %v2897 = vunpack.c.l.b16 %v2833
        %v2898 = vunpack.c.l.b16 %v2834
        %v2899 = vunpack.c.l.b16 %v2835
        %v2900 = vunpack.c.l.b16 %v2836
        %v2901 = vunpack.c.l.b16 %v2837
        %v2902 = vunpack.c.l.b16 %v2838
        %v2903 = vunpack.c.l.b16 %v2839
        %v2904 = vunpack.c.l.b16 %v2840
        %v2905 = vunpack.c.l.b16 %v2841
        %v2906 = vunpack.c.l.b16 %v2842
        %v2907 = vunpack.c.l.b16 %v2843
        %v2908 = vunpack.c.l.b16 %v2844
        %v2909 = vunpack.c.l.b16 %v2845
        %v2910 = vpack.c.b16 %v2895, %v2894
        %v2911 = vpack.c.b16 %v2897, %v2896
        %v2912 = vpack.c.b16 %v2899, %v2898
        %v2913 = vpack.c.b16 %v2901, %v2900
        %v2914 = vpack.c.b16 %v2903, %v2902
        %v2915 = vpack.c.b16 %v2905, %v2904
        %v2916 = vpack.c.b16 %v2907, %v2906
        %v2917 = vpack.c.b16 %v2909, %v2908
        %2926 = vmatprep.subr.bf16.mxu0 0
        %2927 = vmatpush1.bf16.msra.mxu0 %v2917
        %2928 = vmatprep.subr.bf16.mxu0 0
        %2929 = vmatpush1.bf16.msra.mxu0 %v2916
        %2930 = vmatprep.subr.bf16.mxu0 0
        %2931 = vmatpush1.bf16.msra.mxu0 %v2915
        %2932 = vmatprep.subr.bf16.mxu0 0
        %2933 = vmatpush1.bf16.msra.mxu0 %v2914
        %2934 = vmatprep.subr.bf16.mxu0 0
        %2935 = vmatpush1.bf16.msra.mxu0 %v2913
        %2936 = vmatprep.subr.bf16.mxu0 0
        %2937 = vmatpush1.bf16.msra.mxu0 %v2912
        %2938 = vmatprep.subr.bf16.mxu0 0
        %2939 = vmatpush1.bf16.msra.mxu0 %v2911
        %2940 = vmatprep.subr.bf16.mxu0 0
        %2941 = vmatpush1.bf16.msra.mxu0 %v2910
        %2942 = vmatprep.subr.bf16.mxu0 0
        %2943 = vmatpush2.bf16.msra.mxu0 0
        %2944 = vmatprep.subr.bf16.mxu0 0
        %2945 = vmatpush2.bf16.msra.mxu0 0
        %2946 = vmatprep.subr.bf16.mxu0 0
        %2947 = vmatpush2.bf16.msra.mxu0 0
        %2948 = vmatprep.subr.bf16.mxu0 0
        %2949 = vmatpush2.bf16.msra.mxu0 0
        %2950 = vmatprep.subr.bf16.mxu0 0
        %2951 = vmatpush2.bf16.msra.mxu0 0
        %2952 = vmatprep.subr.bf16.mxu0 0
        %2953 = vmatpush2.bf16.msra.mxu0 0
        %2954 = vmatprep.subr.bf16.mxu0 0
        %2955 = vmatpush2.bf16.msra.mxu0 0
        %2956 = vmatprep.subr.bf16.mxu0 0
        %2957 = vmatpush2.bf16.msra.mxu0 0
        %2958 = vmatprep.mubr.bf16.mxu0 0
        %2959 = vmatmul.mubr.bf16.gmra.mxu0 %v2862
        %v2960 = vpop.f32.mrf.mxu0
        %v2961 = vadd.f32 0.0, %v2960
        %v2962 = vpop.f32.mrf.mxu0
        %v2963 = vpop.f32.mrf.mxu0
        %v2964 = vadd.f32 0.0, %v2963
        %v2965 = vpop.f32.mrf.mxu0
        %2966 = vmatprep.mubr.bf16.mxu0 0
        %2967 = vmatmul.mubr.bf16.gmra.mxu0 %v2863
        %v2968 = vpop.f32.mrf.mxu0
        %v2969 = vadd.f32 0.0, %v2968
        %v2970 = vpop.f32.mrf.mxu0
        %v2971 = vpop.f32.mrf.mxu0
        %v2972 = vadd.f32 0.0, %v2971
        %v2973 = vpop.f32.mrf.mxu0
        %2974 = vmatprep.mubr.bf16.mxu0 0
        %2975 = vmatmul.mubr.bf16.gmra.mxu0 %v2864
        %v2976 = vpop.f32.mrf.mxu0
        %v2977 = vadd.f32 0.0, %v2976
        %v2978 = vpop.f32.mrf.mxu0
        %v2979 = vpop.f32.mrf.mxu0
        %v2980 = vadd.f32 0.0, %v2979
        %v2981 = vpop.f32.mrf.mxu0
        %2982 = vmatprep.mubr.bf16.mxu0 0
        %2983 = vmatmul.mubr.bf16.gmra.mxu0 %v2865
        %v2984 = vpop.f32.mrf.mxu0
        %v2985 = vadd.f32 0.0, %v2984
        %v2986 = vpop.f32.mrf.mxu0
        %v2987 = vpop.f32.mrf.mxu0
        %v2988 = vadd.f32 0.0, %v2987
        %v2989 = vpop.f32.mrf.mxu0
        %2990 = vmatprep.mubr.bf16.mxu0 0
        %2991 = vmatmul.mubr.bf16.gmra.mxu0 %v2866
        %v2992 = vpop.f32.mrf.mxu0
        %v2993 = vadd.f32 0.0, %v2992
        %v2994 = vpop.f32.mrf.mxu0
        %v2995 = vpop.f32.mrf.mxu0
        %v2996 = vadd.f32 0.0, %v2995
        %v2997 = vpop.f32.mrf.mxu0
        %2998 = vmatprep.mubr.bf16.mxu0 0
        %2999 = vmatmul.mubr.bf16.gmra.mxu0 %v2867
        %v3000 = vpop.f32.mrf.mxu0
        %v3001 = vadd.f32 0.0, %v3000
        %v3002 = vpop.f32.mrf.mxu0
        %v3003 = vpop.f32.mrf.mxu0
        %v3004 = vadd.f32 0.0, %v3003
        %v3005 = vpop.f32.mrf.mxu0
        %3006 = vmatprep.mubr.bf16.mxu0 0
        %3007 = vmatmul.mubr.bf16.gmra.mxu0 %v2868
        %v3008 = vpop.f32.mrf.mxu0
        %v3009 = vadd.f32 0.0, %v3008
        %v3010 = vpop.f32.mrf.mxu0
        %v3011 = vpop.f32.mrf.mxu0
        %v3012 = vadd.f32 0.0, %v3011
        %v3013 = vpop.f32.mrf.mxu0
        %3014 = vmatprep.mubr.bf16.mxu0 0
        %3015 = vmatmul.mubr.bf16.gmra.mxu0 %v2869
        %v3016 = vpop.f32.mrf.mxu0
        %v3017 = vadd.f32 0.0, %v3016
        %v3018 = vpop.f32.mrf.mxu0
        %v3019 = vpop.f32.mrf.mxu0
        %v3020 = vadd.f32 0.0, %v3019
        %v3021 = vpop.f32.mrf.mxu0
        %3022 = vdwg.mxu0
        %v3023 = vld [vmem:[#allocation2] sm:$0xff]
        %v3024 = vld [vmem:[#allocation2 + $0x8] sm:$0xff]
        %v3025 = vld [vmem:[#allocation2 + $0x10] sm:$0xff]
        %v3026 = vld [vmem:[#allocation2 + $0x18] sm:$0xff]
        %v3027 = vld [vmem:[#allocation2 + $0x20] sm:$0xff]
        %v3028 = vld [vmem:[#allocation2 + $0x28] sm:$0xff]
        %v3029 = vld [vmem:[#allocation2 + $0x30] sm:$0xff]
        %v3030 = vld [vmem:[#allocation2 + $0x38] sm:$0xff]
        %v3031 = vld [vmem:[#allocation2 + $0x40] sm:$0xff]
        %v3032 = vld [vmem:[#allocation2 + $0x48] sm:$0xff]
        %v3033 = vld [vmem:[#allocation2 + $0x50] sm:$0xff]
        %v3034 = vld [vmem:[#allocation2 + $0x58] sm:$0xff]
        %v3035 = vld [vmem:[#allocation2 + $0x60] sm:$0xff]
        %v3036 = vld [vmem:[#allocation2 + $0x68] sm:$0xff]
        %v3037 = vld [vmem:[#allocation2 + $0x70] sm:$0xff]
        %v3038 = vld [vmem:[#allocation2 + $0x78] sm:$0xff]
        %v3039 = vadd.f32 %v3023, %v2961
        %v3040 = vadd.f32 %v3024, %v2964
        %v3041 = vadd.f32 %v3025, %v2969
        %v3042 = vadd.f32 %v3026, %v2972
        %v3043 = vadd.f32 %v3027, %v2977
        %v3044 = vadd.f32 %v3028, %v2980
        %v3045 = vadd.f32 %v3029, %v2985
        %v3046 = vadd.f32 %v3030, %v2988
        %v3047 = vadd.f32 %v3031, %v2993
        %v3048 = vadd.f32 %v3032, %v2996
        %v3049 = vadd.f32 %v3033, %v3001
        %v3050 = vadd.f32 %v3034, %v3004
        %v3051 = vadd.f32 %v3035, %v3009
        %v3052 = vadd.f32 %v3036, %v3012
        %v3053 = vadd.f32 %v3037, %v3017
        %v3054 = vadd.f32 %v3038, %v3020
        %3055 = vst [vmem:[#allocation2] sm:$0xff] %v3039
        %3056 = vst [vmem:[#allocation2 + $0x8] sm:$0xff] %v3040
        %3057 = vst [vmem:[#allocation2 + $0x10] sm:$0xff] %v3041
        %3058 = vst [vmem:[#allocation2 + $0x18] sm:$0xff] %v3042
        %3059 = vst [vmem:[#allocation2 + $0x20] sm:$0xff] %v3043
        %3060 = vst [vmem:[#allocation2 + $0x28] sm:$0xff] %v3044
        %3061 = vst [vmem:[#allocation2 + $0x30] sm:$0xff] %v3045
        %3062 = vst [vmem:[#allocation2 + $0x38] sm:$0xff] %v3046
        %3063 = vst [vmem:[#allocation2 + $0x40] sm:$0xff] %v3047
        %3064 = vst [vmem:[#allocation2 + $0x48] sm:$0xff] %v3048
        %3065 = vst [vmem:[#allocation2 + $0x50] sm:$0xff] %v3049
        %3066 = vst [vmem:[#allocation2 + $0x58] sm:$0xff] %v3050
        %3067 = vst [vmem:[#allocation2 + $0x60] sm:$0xff] %v3051
        %3068 = vst [vmem:[#allocation2 + $0x68] sm:$0xff] %v3052
        %3069 = vst [vmem:[#allocation2 + $0x70] sm:$0xff] %v3053
        %3070 = vst [vmem:[#allocation2 + $0x78] sm:$0xff] %v3054
        %v3071 = vld [vmem:[%s2338] sm:$0xe]
        %v3072 = vld [vmem:[%s2338 + $0x4] sm:$0xf]
        %v3073 = vld [vmem:[%s2338 + $0x8] sm:$0x1]
        %v3074 = vld [vmem:[%s2338 + $0xc] sm:$0xe]
        %v3075 = vld [vmem:[%s2338 + $0x10] sm:$0xf]
        %v3076 = vld [vmem:[%s2338 + $0x14] sm:$0x1]
        %v3077 = vld [vmem:[%s2338 + $0x18] sm:$0xe]
        %v3078 = vld [vmem:[%s2338 + $0x1c] sm:$0xf]
        %v3079 = vld [vmem:[%s2338 + $0x20] sm:$0x1]
        %v3080 = vld [vmem:[%s2338 + $0x24] sm:$0xe]
        %v3081 = vld [vmem:[%s2338 + $0x28] sm:$0xf]
        %v3082 = vld [vmem:[%s2338 + $0x2c] sm:$0x1]
        %v3083 = vld [vmem:[%s2338 + $0x30] sm:$0xe]
        %v3084 = vld [vmem:[%s2338 + $0x34] sm:$0xf]
        %v3085 = vld [vmem:[%s2338 + $0x38] sm:$0x1]
        %v3086 = vld [vmem:[%s2338 + $0x3c] sm:$0xe]
        %v3087 = vld [vmem:[%s2338 + $0x40] sm:$0xf]
        %v3088 = vld [vmem:[%s2338 + $0x44] sm:$0x1]
        %v3089 = vld [vmem:[%s2338 + $0x48] sm:$0xe]
        %v3090 = vld [vmem:[%s2338 + $0x4c] sm:$0xf]
        %v3091 = vld [vmem:[%s2338 + $0x50] sm:$0x1]
        %v3092 = vld [vmem:[%s2338 + $0x54] sm:$0xe]
        %v3093 = vld [vmem:[%s2338 + $0x58] sm:$0xf]
        %v3094 = vld [vmem:[%s2338 + $0x5c] sm:$0x1]
        %v3119 = vrot.slane %v3071, 5
        %v3120 = vrot.slane %v3119, 4
        %v3121 = vrot.slane %v3072, 5
        %v3122 = vsel %vm954, %v3120, %v3121
        %v3123 = vrot.slane %v3121, 4
        %v3124 = vrot.slane %v3073, 5
        %v3125 = vsel %vm954, %v3123, %v3124
        %v3126 = vrot.slane %v3074, 5
        %v3127 = vrot.slane %v3126, 4
        %v3128 = vrot.slane %v3075, 5
        %v3129 = vsel %vm954, %v3127, %v3128
        %v3130 = vrot.slane %v3128, 4
        %v3131 = vrot.slane %v3076, 5
        %v3132 = vsel %vm954, %v3130, %v3131
        %v3133 = vrot.slane %v3077, 5
        %v3134 = vrot.slane %v3133, 4
        %v3135 = vrot.slane %v3078, 5
        %v3136 = vsel %vm954, %v3134, %v3135
        %v3137 = vrot.slane %v3135, 4
        %v3138 = vrot.slane %v3079, 5
        %v3139 = vsel %vm954, %v3137, %v3138
        %v3140 = vrot.slane %v3080, 5
        %v3141 = vrot.slane %v3140, 4
        %v3142 = vrot.slane %v3081, 5
        %v3143 = vsel %vm954, %v3141, %v3142
        %v3144 = vrot.slane %v3142, 4
        %v3145 = vrot.slane %v3082, 5
        %v3146 = vsel %vm954, %v3144, %v3145
        %v3147 = vrot.slane %v3083, 5
        %v3148 = vrot.slane %v3147, 4
        %v3149 = vrot.slane %v3084, 5
        %v3150 = vsel %vm954, %v3148, %v3149
        %v3151 = vrot.slane %v3149, 4
        %v3152 = vrot.slane %v3085, 5
        %v3153 = vsel %vm954, %v3151, %v3152
        %v3154 = vrot.slane %v3086, 5
        %v3155 = vrot.slane %v3154, 4
        %v3156 = vrot.slane %v3087, 5
        %v3157 = vsel %vm954, %v3155, %v3156
        %v3158 = vrot.slane %v3156, 4
        %v3159 = vrot.slane %v3088, 5
        %v3160 = vsel %vm954, %v3158, %v3159
        %v3161 = vrot.slane %v3089, 5
        %v3162 = vrot.slane %v3161, 4
        %v3163 = vrot.slane %v3090, 5
        %v3164 = vsel %vm954, %v3162, %v3163
        %v3165 = vrot.slane %v3163, 4
        %v3166 = vrot.slane %v3091, 5
        %v3167 = vsel %vm954, %v3165, %v3166
        %v3168 = vrot.slane %v3092, 5
        %v3169 = vrot.slane %v3168, 4
        %v3170 = vrot.slane %v3093, 5
        %v3171 = vsel %vm954, %v3169, %v3170
        %v3172 = vrot.slane %v3170, 4
        %v3173 = vrot.slane %v3094, 5
        %v3174 = vsel %vm954, %v3172, %v3173
        %s3175 = scalar_lea.vmem %s165, 512 [#allocation3]
        %v3176 = vld [vmem:[%s3175] sm:$0xf]
        %v3177 = vld [vmem:[%s3175 + $0x4] sm:$0xf]
        %v3178 = vld [vmem:[%s3175 + $0x8] sm:$0xf]
        %v3179 = vld [vmem:[%s3175 + $0xc] sm:$0xf]
        %v3180 = vld [vmem:[%s3175 + $0x10] sm:$0xf]
        %v3181 = vld [vmem:[%s3175 + $0x14] sm:$0xf]
        %v3182 = vld [vmem:[%s3175 + $0x18] sm:$0xf]
        %v3183 = vld [vmem:[%s3175 + $0x1c] sm:$0xf]
        %v3184 = vld [vmem:[%s3175 + $0x20] sm:$0xf]
        %v3185 = vld [vmem:[%s3175 + $0x24] sm:$0xf]
        %v3186 = vld [vmem:[%s3175 + $0x28] sm:$0xf]
        %v3187 = vld [vmem:[%s3175 + $0x2c] sm:$0xf]
        %v3188 = vld [vmem:[%s3175 + $0x30] sm:$0xf]
        %v3189 = vld [vmem:[%s3175 + $0x34] sm:$0xf]
        %v3190 = vld [vmem:[%s3175 + $0x38] sm:$0xf]
        %v3191 = vld [vmem:[%s3175 + $0x3c] sm:$0xf]
        %v3192 = vunpack.c.l.b16 %v3122
        %v3193 = vunpack.c.l.b16 %v3125
        %v3194 = vunpack.c.l.b16 %v3129
        %v3195 = vunpack.c.l.b16 %v3132
        %v3196 = vunpack.c.l.b16 %v3136
        %v3197 = vunpack.c.l.b16 %v3139
        %v3198 = vunpack.c.l.b16 %v3143
        %v3199 = vunpack.c.l.b16 %v3146
        %v3200 = vunpack.c.l.b16 %v3150
        %v3201 = vunpack.c.l.b16 %v3153
        %v3202 = vunpack.c.l.b16 %v3157
        %v3203 = vunpack.c.l.b16 %v3160
        %v3204 = vunpack.c.l.b16 %v3164
        %v3205 = vunpack.c.l.b16 %v3167
        %v3206 = vunpack.c.l.b16 %v3171
        %v3207 = vunpack.c.l.b16 %v3174
        %v3208 = vpack.c.b16 %v3193, %v3192
        %v3209 = vpack.c.b16 %v3195, %v3194
        %v3210 = vpack.c.b16 %v3197, %v3196
        %v3211 = vpack.c.b16 %v3199, %v3198
        %v3212 = vpack.c.b16 %v3201, %v3200
        %v3213 = vpack.c.b16 %v3203, %v3202
        %v3214 = vpack.c.b16 %v3205, %v3204
        %v3215 = vpack.c.b16 %v3207, %v3206
        %v3240 = vunpack.c.l.b16 %v3176
        %v3241 = vunpack.c.l.b16 %v3177
        %v3242 = vunpack.c.l.b16 %v3178
        %v3243 = vunpack.c.l.b16 %v3179
        %v3244 = vunpack.c.l.b16 %v3180
        %v3245 = vunpack.c.l.b16 %v3181
        %v3246 = vunpack.c.l.b16 %v3182
        %v3247 = vunpack.c.l.b16 %v3183
        %v3248 = vunpack.c.l.b16 %v3184
        %v3249 = vunpack.c.l.b16 %v3185
        %v3250 = vunpack.c.l.b16 %v3186
        %v3251 = vunpack.c.l.b16 %v3187
        %v3252 = vunpack.c.l.b16 %v3188
        %v3253 = vunpack.c.l.b16 %v3189
        %v3254 = vunpack.c.l.b16 %v3190
        %v3255 = vunpack.c.l.b16 %v3191
        %v3256 = vpack.c.b16 %v3241, %v3240
        %v3257 = vpack.c.b16 %v3243, %v3242
        %v3258 = vpack.c.b16 %v3245, %v3244
        %v3259 = vpack.c.b16 %v3247, %v3246
        %v3260 = vpack.c.b16 %v3249, %v3248
        %v3261 = vpack.c.b16 %v3251, %v3250
        %v3262 = vpack.c.b16 %v3253, %v3252
        %v3263 = vpack.c.b16 %v3255, %v3254
        %3272 = vmatprep.subr.bf16.mxu0 0
        %3273 = vmatpush1.bf16.msra.mxu0 %v3263
        %3274 = vmatprep.subr.bf16.mxu0 0
        %3275 = vmatpush1.bf16.msra.mxu0 %v3262
        %3276 = vmatprep.subr.bf16.mxu0 0
        %3277 = vmatpush1.bf16.msra.mxu0 %v3261
        %3278 = vmatprep.subr.bf16.mxu0 0
        %3279 = vmatpush1.bf16.msra.mxu0 %v3260
        %3280 = vmatprep.subr.bf16.mxu0 0
        %3281 = vmatpush1.bf16.msra.mxu0 %v3259
        %3282 = vmatprep.subr.bf16.mxu0 0
        %3283 = vmatpush1.bf16.msra.mxu0 %v3258
        %3284 = vmatprep.subr.bf16.mxu0 0
        %3285 = vmatpush1.bf16.msra.mxu0 %v3257
        %3286 = vmatprep.subr.bf16.mxu0 0
        %3287 = vmatpush1.bf16.msra.mxu0 %v3256
        %3288 = vmatprep.subr.bf16.mxu0 0
        %3289 = vmatpush2.bf16.msra.mxu0 0
        %3290 = vmatprep.subr.bf16.mxu0 0
        %3291 = vmatpush2.bf16.msra.mxu0 0
        %3292 = vmatprep.subr.bf16.mxu0 0
        %3293 = vmatpush2.bf16.msra.mxu0 0
        %3294 = vmatprep.subr.bf16.mxu0 0
        %3295 = vmatpush2.bf16.msra.mxu0 0
        %3296 = vmatprep.subr.bf16.mxu0 0
        %3297 = vmatpush2.bf16.msra.mxu0 0
        %3298 = vmatprep.subr.bf16.mxu0 0
        %3299 = vmatpush2.bf16.msra.mxu0 0
        %3300 = vmatprep.subr.bf16.mxu0 0
        %3301 = vmatpush2.bf16.msra.mxu0 0
        %3302 = vmatprep.subr.bf16.mxu0 0
        %3303 = vmatpush2.bf16.msra.mxu0 0
        %3304 = vmatprep.mubr.bf16.mxu0 0
        %3305 = vmatmul.mubr.bf16.gmra.mxu0 %v3208
        %v3306 = vpop.f32.mrf.mxu0
        %v3307 = vadd.f32 0.0, %v3306
        %v3308 = vpop.f32.mrf.mxu0
        %v3309 = vpop.f32.mrf.mxu0
        %v3310 = vadd.f32 0.0, %v3309
        %v3311 = vpop.f32.mrf.mxu0
        %3312 = vmatprep.mubr.bf16.mxu0 0
        %3313 = vmatmul.mubr.bf16.gmra.mxu0 %v3209
        %v3314 = vpop.f32.mrf.mxu0
        %v3315 = vadd.f32 0.0, %v3314
        %v3316 = vpop.f32.mrf.mxu0
        %v3317 = vpop.f32.mrf.mxu0
        %v3318 = vadd.f32 0.0, %v3317
        %v3319 = vpop.f32.mrf.mxu0
        %3320 = vmatprep.mubr.bf16.mxu0 0
        %3321 = vmatmul.mubr.bf16.gmra.mxu0 %v3210
        %v3322 = vpop.f32.mrf.mxu0
        %v3323 = vadd.f32 0.0, %v3322
        %v3324 = vpop.f32.mrf.mxu0
        %v3325 = vpop.f32.mrf.mxu0
        %v3326 = vadd.f32 0.0, %v3325
        %v3327 = vpop.f32.mrf.mxu0
        %3328 = vmatprep.mubr.bf16.mxu0 0
        %3329 = vmatmul.mubr.bf16.gmra.mxu0 %v3211
        %v3330 = vpop.f32.mrf.mxu0
        %v3331 = vadd.f32 0.0, %v3330
        %v3332 = vpop.f32.mrf.mxu0
        %v3333 = vpop.f32.mrf.mxu0
        %v3334 = vadd.f32 0.0, %v3333
        %v3335 = vpop.f32.mrf.mxu0
        %3336 = vmatprep.mubr.bf16.mxu0 0
        %3337 = vmatmul.mubr.bf16.gmra.mxu0 %v3212
        %v3338 = vpop.f32.mrf.mxu0
        %v3339 = vadd.f32 0.0, %v3338
        %v3340 = vpop.f32.mrf.mxu0
        %v3341 = vpop.f32.mrf.mxu0
        %v3342 = vadd.f32 0.0, %v3341
        %v3343 = vpop.f32.mrf.mxu0
        %3344 = vmatprep.mubr.bf16.mxu0 0
        %3345 = vmatmul.mubr.bf16.gmra.mxu0 %v3213
        %v3346 = vpop.f32.mrf.mxu0
        %v3347 = vadd.f32 0.0, %v3346
        %v3348 = vpop.f32.mrf.mxu0
        %v3349 = vpop.f32.mrf.mxu0
        %v3350 = vadd.f32 0.0, %v3349
        %v3351 = vpop.f32.mrf.mxu0
        %3352 = vmatprep.mubr.bf16.mxu0 0
        %3353 = vmatmul.mubr.bf16.gmra.mxu0 %v3214
        %v3354 = vpop.f32.mrf.mxu0
        %v3355 = vadd.f32 0.0, %v3354
        %v3356 = vpop.f32.mrf.mxu0
        %v3357 = vpop.f32.mrf.mxu0
        %v3358 = vadd.f32 0.0, %v3357
        %v3359 = vpop.f32.mrf.mxu0
        %3360 = vmatprep.mubr.bf16.mxu0 0
        %3361 = vmatmul.mubr.bf16.gmra.mxu0 %v3215
        %v3362 = vpop.f32.mrf.mxu0
        %v3363 = vadd.f32 0.0, %v3362
        %v3364 = vpop.f32.mrf.mxu0
        %v3365 = vpop.f32.mrf.mxu0
        %v3366 = vadd.f32 0.0, %v3365
        %v3367 = vpop.f32.mrf.mxu0
        %3368 = vdwg.mxu0
        %v3369 = vld [vmem:[#allocation2] sm:$0xff]
        %v3370 = vld [vmem:[#allocation2 + $0x8] sm:$0xff]
        %v3371 = vld [vmem:[#allocation2 + $0x10] sm:$0xff]
        %v3372 = vld [vmem:[#allocation2 + $0x18] sm:$0xff]
        %v3373 = vld [vmem:[#allocation2 + $0x20] sm:$0xff]
        %v3374 = vld [vmem:[#allocation2 + $0x28] sm:$0xff]
        %v3375 = vld [vmem:[#allocation2 + $0x30] sm:$0xff]
        %v3376 = vld [vmem:[#allocation2 + $0x38] sm:$0xff]
        %v3377 = vld [vmem:[#allocation2 + $0x40] sm:$0xff]
        %v3378 = vld [vmem:[#allocation2 + $0x48] sm:$0xff]
        %v3379 = vld [vmem:[#allocation2 + $0x50] sm:$0xff]
        %v3380 = vld [vmem:[#allocation2 + $0x58] sm:$0xff]
        %v3381 = vld [vmem:[#allocation2 + $0x60] sm:$0xff]
        %v3382 = vld [vmem:[#allocation2 + $0x68] sm:$0xff]
        %v3383 = vld [vmem:[#allocation2 + $0x70] sm:$0xff]
        %v3384 = vld [vmem:[#allocation2 + $0x78] sm:$0xff]
        %v3385 = vadd.f32 %v3369, %v3307
        %v3386 = vadd.f32 %v3370, %v3310
        %v3387 = vadd.f32 %v3371, %v3315
        %v3388 = vadd.f32 %v3372, %v3318
        %v3389 = vadd.f32 %v3373, %v3323
        %v3390 = vadd.f32 %v3374, %v3326
        %v3391 = vadd.f32 %v3375, %v3331
        %v3392 = vadd.f32 %v3376, %v3334
        %v3393 = vadd.f32 %v3377, %v3339
        %v3394 = vadd.f32 %v3378, %v3342
        %v3395 = vadd.f32 %v3379, %v3347
        %v3396 = vadd.f32 %v3380, %v3350
        %v3397 = vadd.f32 %v3381, %v3355
        %v3398 = vadd.f32 %v3382, %v3358
        %v3399 = vadd.f32 %v3383, %v3363
        %v3400 = vadd.f32 %v3384, %v3366
        %3401 = vst [vmem:[#allocation2] sm:$0xff] %v3385
        %3402 = vst [vmem:[#allocation2 + $0x8] sm:$0xff] %v3386
        %3403 = vst [vmem:[#allocation2 + $0x10] sm:$0xff] %v3387
        %3404 = vst [vmem:[#allocation2 + $0x18] sm:$0xff] %v3388
        %3405 = vst [vmem:[#allocation2 + $0x20] sm:$0xff] %v3389
        %3406 = vst [vmem:[#allocation2 + $0x28] sm:$0xff] %v3390
        %3407 = vst [vmem:[#allocation2 + $0x30] sm:$0xff] %v3391
        %3408 = vst [vmem:[#allocation2 + $0x38] sm:$0xff] %v3392
        %3409 = vst [vmem:[#allocation2 + $0x40] sm:$0xff] %v3393
        %3410 = vst [vmem:[#allocation2 + $0x48] sm:$0xff] %v3394
        %3411 = vst [vmem:[#allocation2 + $0x50] sm:$0xff] %v3395
        %3412 = vst [vmem:[#allocation2 + $0x58] sm:$0xff] %v3396
        %3413 = vst [vmem:[#allocation2 + $0x60] sm:$0xff] %v3397
        %3414 = vst [vmem:[#allocation2 + $0x68] sm:$0xff] %v3398
        %3415 = vst [vmem:[#allocation2 + $0x70] sm:$0xff] %v3399
        %3416 = vst [vmem:[#allocation2 + $0x78] sm:$0xff] %v3400
        %v3417 = vld [vmem:[#allocation2] sm:$0xff]
        %v3418 = vld [vmem:[#allocation2 + $0x8] sm:$0xff]
        %v3419 = vld [vmem:[#allocation2 + $0x10] sm:$0xff]
        %v3420 = vld [vmem:[#allocation2 + $0x18] sm:$0xff]
        %v3421 = vld [vmem:[#allocation2 + $0x20] sm:$0xff]
        %v3422 = vld [vmem:[#allocation2 + $0x28] sm:$0xff]
        %v3423 = vld [vmem:[#allocation2 + $0x30] sm:$0xff]
        %v3424 = vld [vmem:[#allocation2 + $0x38] sm:$0xff]
        %v3425 = vld [vmem:[#allocation2 + $0x40] sm:$0xff]
        %v3426 = vld [vmem:[#allocation2 + $0x48] sm:$0xff]
        %v3427 = vld [vmem:[#allocation2 + $0x50] sm:$0xff]
        %v3428 = vld [vmem:[#allocation2 + $0x58] sm:$0xff]
        %v3429 = vld [vmem:[#allocation2 + $0x60] sm:$0xff]
        %v3430 = vld [vmem:[#allocation2 + $0x68] sm:$0xff]
        %v3431 = vld [vmem:[#allocation2 + $0x70] sm:$0xff]
        %v3432 = vld [vmem:[#allocation2 + $0x78] sm:$0xff]
        %v3433 = vpack.c.bf16 %v3418, %v3417
        %v3434 = vpack.c.bf16 %v3420, %v3419
        %v3435 = vpack.c.bf16 %v3422, %v3421
        %v3436 = vpack.c.bf16 %v3424, %v3423
        %v3437 = vpack.c.bf16 %v3426, %v3425
        %v3438 = vpack.c.bf16 %v3428, %v3427
        %v3439 = vpack.c.bf16 %v3430, %v3429
        %v3440 = vpack.c.bf16 %v3432, %v3431
        %v3449 = vunpack.c.l.b16 %v3433
        %v3450 = vunpack.c.h.b16 %v3433
        %v3451 = vunpack.c.l.b16 %v3434
        %v3452 = vunpack.c.h.b16 %v3434
        %v3453 = vunpack.c.l.b16 %v3435
        %v3454 = vunpack.c.h.b16 %v3435
        %v3455 = vunpack.c.l.b16 %v3436
        %v3456 = vunpack.c.h.b16 %v3436
        %v3457 = vunpack.c.l.b16 %v3437
        %v3458 = vunpack.c.h.b16 %v3437
        %v3459 = vunpack.c.l.b16 %v3438
        %v3460 = vunpack.c.h.b16 %v3438
        %v3461 = vunpack.c.l.b16 %v3439
        %v3462 = vunpack.c.h.b16 %v3439
        %v3463 = vunpack.c.l.b16 %v3440
        %v3464 = vunpack.c.h.b16 %v3440
        %v3465 = vpack.c.b16 %v3449, %v3449
        %v3466 = vpack.c.b16 %v3450, %v3450
        %v3467 = vpack.c.b16 %v3451, %v3451
        %v3468 = vpack.c.b16 %v3452, %v3452
        %v3469 = vpack.c.b16 %v3453, %v3453
        %v3470 = vpack.c.b16 %v3454, %v3454
        %v3471 = vpack.c.b16 %v3455, %v3455
        %v3472 = vpack.c.b16 %v3456, %v3456
        %v3473 = vpack.c.b16 %v3457, %v3457
        %v3474 = vpack.c.b16 %v3458, %v3458
        %v3475 = vpack.c.b16 %v3459, %v3459
        %v3476 = vpack.c.b16 %v3460, %v3460
        %v3477 = vpack.c.b16 %v3461, %v3461
        %v3478 = vpack.c.b16 %v3462, %v3462
        %v3479 = vpack.c.b16 %v3463, %v3463
        %v3480 = vpack.c.b16 %v3464, %v3464
        %3497 = vst [vmem:[%s190] sm:$0xf] %v3465
        %3498 = vst [vmem:[%s190 + $0x4] sm:$0xf] %v3466
        %3499 = vst [vmem:[%s190 + $0x8] sm:$0xf] %v3467
        %3500 = vst [vmem:[%s190 + $0xc] sm:$0xf] %v3468
        %3501 = vst [vmem:[%s190 + $0x10] sm:$0xf] %v3469
        %3502 = vst [vmem:[%s190 + $0x14] sm:$0xf] %v3470
        %3503 = vst [vmem:[%s190 + $0x18] sm:$0xf] %v3471
        %3504 = vst [vmem:[%s190 + $0x1c] sm:$0xf] %v3472
        %3505 = vst [vmem:[%s190 + $0x20] sm:$0xf] %v3473
        %3506 = vst [vmem:[%s190 + $0x24] sm:$0xf] %v3474
        %3507 = vst [vmem:[%s190 + $0x28] sm:$0xf] %v3475
        %3508 = vst [vmem:[%s190 + $0x2c] sm:$0xf] %v3476
        %3509 = vst [vmem:[%s190 + $0x30] sm:$0xf] %v3477
        %3510 = vst [vmem:[%s190 + $0x34] sm:$0xf] %v3478
        %3511 = vst [vmem:[%s190 + $0x38] sm:$0xf] %v3479
        %3512 = vst [vmem:[%s190 + $0x3c] sm:$0xf] %v3480
        %s3513 = sand.u32 %s93, 1
        %s3514 = scalar_lea.sflag [#allocation5], %s3513
        %s3515 = sand.u32 %s93, 1
        %s3516 = smul.addr %s3515, 64
        %s3517 = scalar_lea.vmem [#allocation6], %s3516
        // Predicated region
        $region33: #{tpu_custom_call.1} parent=27 // pred_check
          %p3518 = pneg %p103
        $region34: #{tpu_custom_call.1} parent=27 // pred_check_branch
          %3520 = sbr.rel (%p3518) target = $region36
        $region35: #{tpu_custom_call.1} parent=27 // pred_region
          %s3521 = smul.u32 16, %s24
          %s3523 = ssub.s32 1024, 1024
          %3524 = vsyncadd %s3514, %s3523
          %s3525 = smul.addr %s23, 32
          %s3526 = sadd.s32 %s3521, %s3525
          %s3527 = smul.addr %s3526, 64
          %s3528 = scalar_lea.hbm %s2, %s3527
          %s3529 = sshll.u32 %s3517, 4
          %s3530 = int_to_ptr.vmem [resolvable:$true] %s3529
          %3535 = dma.vmem_to_hbm [thread:$0]  %s3530, 1024, %s3528, %s3514, 64, 64, 4
        $region36: #{tpu_custom_call.1} parent=27 // pred_fallthru
          _
      $region28: #{tpu_custom_call.1} parent=5 // pred_fallthru
        _
      %p3536 = scmp.le.s32.totalorder 2, %s14
      // Predicated region
      $region37: #{tpu_custom_call.1} parent=5 // pred_check
        %p3537 = pneg %p3536
      $region38: #{tpu_custom_call.1} parent=5 // pred_check_branch
        %3539 = sbr.rel (%p3537) target = $region40
      $region39: #{tpu_custom_call.1} parent=5 // pred_region
        %s3540 = ssub.s32 %s14, 2
        // Predicated region
        $region41: #{tpu_custom_call.1} parent=39 // pred_check
          %p3541 = pneg %p109
        $region42: #{tpu_custom_call.1} parent=39 // pred_check_branch
          %3543 = sbr.rel (%p3541) target = $region44
        $region43: #{tpu_custom_call.1} parent=39 // pred_region
          %s3544 = sand.u32 %s94, 1
          %s3545 = scalar_lea.sflag [#allocation5], %s3544
          %s3546 = sand.u32 %s94, 1
          %s3547 = smul.addr %s3546, 64
          %s3548 = scalar_lea.vmem [#allocation6], %s3547
          %3549 = dma.done %s3545, 1024
        $region44: #{tpu_custom_call.1} parent=39 // pred_fallthru
          _
      $region40: #{tpu_custom_call.1} parent=5 // pred_fallthru
        _
    $region6: #{tpu_custom_call.1} parent=1 // loop_footer
      %s18 = sadd.s32 1, %s14
    $region7: #{tpu_custom_call.1} parent=1 // loop_footer_branch
      %13 = sbr.rel target = $region3
    $region8: #{tpu_custom_call.1} parent=1 // loop_exit
      _
    %3550 = vsyncpa [#allocation4], 1
    %s3551 = scalar_lea.sflag [#allocation4], 1
    %3552 = vsyncpa %s3551, 1
    %3553 = vsyncpa [#allocation5], 1
    %s3554 = scalar_lea.sflag [#allocation5], 1
    %3555 = vsyncpa %s3554, 1

</llo_original>
